<compile_context>
chip_gen: v6e
topology: v6e:2x2x1
jax: 0.10.0
libtpu: 0.0.40
codegen_flags: <defaults>
</compile_context>

<pallas_src>
import jax
import jax.numpy as jnp
from jax.experimental import pallas as pl
from jax.experimental.pallas import tpu as pltpu


LANE = 128
_NEG = -1e30
_PH_GCN1, _PH_GCN2, _PH_GAT = 0, 1, 2
_NUM_PHASES = 3


def _round_up(v, m):
    return ((v + m - 1) // m) * m


def _pad2(a, rows, cols, val=0.0):
    r, c = a.shape
    return jnp.pad(a, ((0, rows - r), (0, cols - c)), constant_values=val)


# ---------------------------------------------------------------------------
# Fused SRM forward kernel (factory closes over static dims / chip flags)
# ---------------------------------------------------------------------------

def _make_srm_kernel(np_, tile_n, f, use_bf16_exp):
    col_src, col_dst, col_one = f, f + 1, f + 2   # spare lane-padding columns in hg

    def kernel(adj_ref, x_ref, dinv_ref,
               w1_ref, b1_ref, w2_ref, b2_ref,
               wg_ref, bg_ref, wc_ref, bc_ref,
               o_ref,
               hs1_ref, x1_ref, hs2_ref, x2_ref, hgb_ref, asrc_ref, adst_ref):
        ph = pl.program_id(0)
        i = pl.program_id(1)
        off = pl.multiple_of(i * tile_n, tile_n)

        # ------------------------------ GCN layer -------------------------------
        def gcn_phase(xin_ref, w_ref, b_ref, hs_ref, out_ref):
            # hs = D^-1/2 * (X @ W): computed once per phase (tile 0), full-N, resident.
            @pl.when(i == 0)
            def _():
                h = jnp.dot(xin_ref[...], w_ref[...],
                            preferred_element_type=jnp.float32)
                hs_ref[...] = dinv_ref[...] * h

            adj_t = adj_ref[...]                                       # (tile_n, Np) bf16
            agg = jnp.dot(adj_t, hs_ref[...].astype(jnp.bfloat16),
                          preferred_element_type=jnp.float32)          # neighbours
            agg = agg + hs_ref[pl.ds(off, tile_n), :]                  # + self loop
            dinv_rows = dinv_ref[pl.ds(off, tile_n), :]
            out_ref[pl.ds(off, tile_n), :] = jnp.maximum(
                dinv_rows * agg + b_ref[...], 0.0)                     # D^-1/2 + ReLU

        @pl.when(ph == _PH_GCN1)
        def _():
            gcn_phase(x_ref, w1_ref, b1_ref, hs1_ref, x1_ref)

        @pl.when(ph == _PH_GCN2)
        def _():
            gcn_phase(x1_ref, w2_ref, b2_ref, hs2_ref, x2_ref)

        # --------------------- GAT + sigmoid + classifier -----------------------
        @pl.when(ph == _PH_GAT)
        def _():
            @pl.when(i == 0)
            def _():
                hg = jnp.dot(x2_ref[...], wg_ref[...],
                             preferred_element_type=jnp.float32)       # (Np, Fp)
                # attention projections were folded into wg's padded columns:
                asrc_ref[...] = hg[:, col_src:col_src + 1]             # a_src per node
                adst_ref[...] = hg[:, col_dst:col_dst + 1]             # a_dst per node
                # ones column -> p @ hg also yields the softmax denominator (f32 acc).
                col_ids = jax.lax.broadcasted_iota(jnp.int32, hg.shape, 1)
                hg = jnp.where(col_ids == col_one, 1.0, hg)
                hgb_ref[...] = hg.astype(jnp.bfloat16)

            adj_t = adj_ref[...]                                       # (tile_n, Np) bf16
            a_dst = adst_ref[pl.ds(off, tile_n), :]                    # (tile_n, 1)
            a_src = asrc_ref[...]                                      # (Np, 1)
            e = a_dst + a_src.T                                        # e[d, s]
            e = jnp.maximum(e, 0.2 * e)                                # LeakyReLU(0.2)
            is_edge = adj_t > 0
            em = jnp.where(is_edge, e, _NEG)                           # masked scores
            m = jnp.max(em, axis=1, keepdims=True)                     # per-dst max
            if use_bf16_exp:
                # v6e/v7x: bf16 EUP exp; 0/1 adjacency reused as multiplicative mask
                # (also zeroes rows with no edges, where em - m == 0 -> exp == 1).
                p_att = adj_t * jnp.exp((em - m).astype(jnp.bfloat16))
            else:
                # v5e: keep elementwise math in f32; select preserves the zeroing of
                # no-edge rows.
                p_att = jnp.where(is_edge, jnp.exp(em - m), 0.0).astype(jnp.bfloat16)

            out_g = jnp.dot(p_att, hgb_ref[...],
                            preferred_element_type=jnp.float32)        # (tile_n, Fp)
            denom = out_g[:, col_one:col_one + 1]                      # softmax denom
            # exact reciprocal: vector is only (tile_n, 1) so accuracy is free.
            # isolated / fully-masked dst rows: denom == 0 -> rden = 1, out rows = 0.
            rden = pl.reciprocal(jnp.where(denom > 0.0, denom, 1.0), approx=False)
            z = jnp.maximum(out_g * rden + bg_ref[...], 0.0)

            xr = jax.nn.sigmoid(z)
            logits = jnp.dot(xr, wc_ref[...],
                             preferred_element_type=jnp.float32) + bc_ref[...]
            mx = jnp.max(logits, axis=1, keepdims=True)
            sh = logits - mx
            lse = jnp.log(jnp.sum(jnp.exp(sh), axis=1, keepdims=True))
            o_ref[...] = sh - lse

    return kernel


# ---------------------------------------------------------------------------
# Parameter init (deterministic, xavier-uniform style, natural sizes)
# ---------------------------------------------------------------------------

def _xavier(key, fan_in, fan_out):
    lim = jnp.sqrt(6.0 / (fan_in + fan_out))
    return jax.random.uniform(key, (fan_in, fan_out), jnp.float32, -lim, lim)


def init_srm_params(key, num_features, num_classes, hidden=64):
    ks = jax.random.split(key, 8)
    return {
        # Encoder: GCNConv(F -> 2*hidden), GCNConv(2*hidden -> hidden)
        "gcn1_w": _xavier(ks[0], num_features, 2 * hidden),
        "gcn1_b": jnp.zeros((1, 2 * hidden), jnp.float32),
        "gcn2_w": _xavier(ks[1], 2 * hidden, hidden),
        "gcn2_b": jnp.zeros((1, hidden), jnp.float32),
        # Generation: GATConv(hidden -> F), 1 head, add_self_loops=False
        "gat_w": _xavier(ks[2], hidden, num_features),
        "gat_asrc": _xavier(ks[3], 1, num_features),
        "gat_adst": _xavier(ks[4], 1, num_features),
        "gat_b": jnp.zeros((1, num_features), jnp.float32),
        # Classifier: Linear(F -> C)
        "cls_w": _xavier(ks[5], num_features, num_classes),
        "cls_b": jnp.zeros((1, num_classes), jnp.float32),
    }


def _pad_params(params, f, h2, fp, h1p, h2p, cp):
    """Zero-pad feature dims to lane width; fold GAT attention vectors into wg padding."""
    wg = _pad2(params["gat_w"], h2p, fp)
    # hg[:, f] == a_src, hg[:, f+1] == a_dst -- zero extra MXU cost (padding columns).
    wsrc = params["gat_w"] @ params["gat_asrc"].T       # (h2, 1)
    wdst = params["gat_w"] @ params["gat_adst"].T       # (h2, 1)
    wg = wg.at[:h2, f].set(wsrc[:, 0])
    wg = wg.at[:h2, f + 1].set(wdst[:, 0])
    return dict(
        w1=_pad2(params["gcn1_w"], fp, h1p),
        b1=_pad2(params["gcn1_b"], 1, h1p),
        w2=_pad2(params["gcn2_w"], h1p, h2p),
        b2=_pad2(params["gcn2_b"], 1, h2p),
        wg=wg,
        bg=_pad2(params["gat_b"], 1, fp),
        wc=_pad2(params["cls_w"], fp, cp),
        bc=_pad2(params["cls_b"], 1, cp, val=_NEG),     # padded classes vanish in log_softmax
    )


# ---------------------------------------------------------------------------
# VMEM budget / chip-awareness helpers
# ---------------------------------------------------------------------------

def _tpu_vmem_capacity():
    try:
        return int(pltpu.get_tpu_info().vmem_capacity_bytes)
    except Exception:
        return 64 * 1024 * 1024      # conservative default (v7x per-core VMEM)


def _use_bf16_exp():
    try:
        kind = jax.devices()[0].device_kind.lower()
    except Exception:
        return False
    return ("v6" in kind) or ("v7" in kind)   # v5e: no bf16 VPU/EUP -> keep f32


def _pick_tile(np_):
    for t in (512, 256, 128):
        if np_ % t == 0:
            return min(t, np_)
    return LANE


def _vmem_bytes_estimate(np_, tile_n, fp, h1p, h2p, cp):
    est = 0
    est += 2 * tile_n * np_ * 2                                  # adj tile bf16, dbl-buf
    est += 2 * np_ * fp * 4                                      # x (resident input block)
    est += 2 * np_ * 4                                           # dinv
    est += 2 * 4 * (fp * h1p + h1p * h2p + h2p * fp + fp * cp
                    + h1p + h2p + fp + cp)                       # weights + biases
    est += 2 * tile_n * cp * 4                                   # output tile, dbl-buf
    est += np_ * (2 * h1p + 2 * h2p) * 4                         # hs1, x1, hs2, x2 scratch
    est += np_ * fp * 2                                          # hg scratch (bf16)
    est += np_ * 2 * 4                                           # a_src / a_dst scratch
    est += tile_n * np_ * 10                                     # attention temporaries
    return est


# ---------------------------------------------------------------------------
# SRM forward (drop_node_fea in wrapper; everything else in one fused kernel)
# ---------------------------------------------------------------------------

def srm_forward(params, x, edge_index, drop_key, mask_rate=0.15):
    n, f = x.shape
    np_ = _round_up(n, LANE)
    fp = _round_up(f, LANE)
    if fp < f + 3:                       # need 3 spare lane-padding columns in hg
        fp += LANE
    h1 = params["gcn1_w"].shape[1]
    h2 = params["gcn2_w"].shape[1]
    h1p = _round_up(h1, LANE)
    h2p = _round_up(h2, LANE)
    c = params["cls_w"].shape[1]
    cp = _round_up(c, LANE)

    # --- drop_node_fea: zero masked node features, drop edges whose src is masked ---
    perm = jax.random.permutation(drop_key, n)
    num_mask = int(mask_rate * n)
    keep_mask = jnp.ones((n,), jnp.float32).at[perm[:num_mask]].set(0.0)
    x_in = x * keep_mask[:, None]

    src, dst = edge_index[0], edge_index[1]

    # dense dst-major adjacency A[dst, src] (no self loops): built padded + bf16 in ONE
    # N^2 pass, with the drop-mask folded directly into the scatter values.
    adj_p = jnp.zeros((np_, np_), jnp.bfloat16).at[dst, src].set(
        keep_mask[src].astype(jnp.bfloat16))

    # degrees of A_hat = A + I straight from the edge list (O(E), no dense pass).
    # TODO(synk): assumes unique edges (duplicates would be double-counted here while the
    #             dense adjacency deduplicates them).
    deg = jnp.ones((np_,), jnp.float32).at[dst].add(keep_mask[src])
    dinv = jax.lax.rsqrt(deg)[:, None]                              # (Np, 1), finite

    x_p = _pad2(x_in, np_, fp)
    pp = _pad_params(params, f, h2, fp, h1p, h2p, cp)

    # --- tiling / VMEM budget (generation-aware) ---
    cap = _tpu_vmem_capacity()
    tile_n = _pick_tile(np_)
    while tile_n > LANE and _vmem_bytes_estimate(np_, tile_n, fp, h1p, h2p, cp) > 0.7 * cap:
        tile_n //= 2
    est = _vmem_bytes_estimate(np_, tile_n, fp, h1p, h2p, cp)
    if est > 0.9 * cap:
        raise ValueError(
            f"SRM kernel live set (~{est >> 20} MiB) exceeds VMEM capacity "
            f"({cap >> 20} MiB); graph too large for this tiling.")
    vmem_limit = int(min(0.9 * cap, max(32 * 1024 * 1024, 1.5 * est)))

    n_tiles = np_ // tile_n
    kernel = _make_srm_kernel(np_, tile_n, f, _use_bf16_exp())

    grid_spec = pltpu.PrefetchScalarGridSpec(
        num_scalar_prefetch=0,
        grid=(_NUM_PHASES, n_tiles),
        in_specs=[
            pl.BlockSpec((tile_n, np_), lambda p, i: (i, 0)),     # adj (streamed per tile)
            pl.BlockSpec((np_, fp), lambda p, i: (0, 0)),         # x (resident)
            pl.BlockSpec((np_, 1), lambda p, i: (0, 0)),          # dinv
            pl.BlockSpec((fp, h1p), lambda p, i: (0, 0)),         # w1
            pl.BlockSpec((1, h1p), lambda p, i: (0, 0)),          # b1
            pl.BlockSpec((h1p, h2p), lambda p, i: (0, 0)),        # w2
            pl.BlockSpec((1, h2p), lambda p, i: (0, 0)),          # b2
            pl.BlockSpec((h2p, fp), lambda p, i: (0, 0)),         # wg (+ folded a_src/a_dst)
            pl.BlockSpec((1, fp), lambda p, i: (0, 0)),           # bg
            pl.BlockSpec((fp, cp), lambda p, i: (0, 0)),          # wc
            pl.BlockSpec((1, cp), lambda p, i: (0, 0)),           # bc
        ],
        # Real output tiles are produced only in the GAT phase; earlier phases stay parked
        # on block 0 so every output block is written back exactly once (no revisits).
        out_specs=pl.BlockSpec(
            (tile_n, cp), lambda p, i: (jnp.where(p == _PH_GAT, i, 0), 0)),
        scratch_shapes=[
            pltpu.VMEM((np_, h1p), jnp.float32),   # hs1 = dinv * (x  @ w1)
            pltpu.VMEM((np_, h1p), jnp.float32),   # x1
            pltpu.VMEM((np_, h2p), jnp.float32),   # hs2 = dinv * (x1 @ w2)
            pltpu.VMEM((np_, h2p), jnp.float32),   # x2
            pltpu.VMEM((np_, fp), jnp.bfloat16),   # hg (bf16, with ones column)
            pltpu.VMEM((np_, 1), jnp.float32),     # a_src
            pltpu.VMEM((np_, 1), jnp.float32),     # a_dst
        ],
    )

    out = pl.pallas_call(
        kernel,
        out_shape=jax.ShapeDtypeStruct((np_, cp), jnp.float32),
        grid_spec=grid_spec,
        compiler_params=pltpu.CompilerParams(
            # cross-phase scratch dependencies -> both axes must run sequentially.
            dimension_semantics=("arbitrary", "arbitrary"),
            vmem_limit_bytes=vmem_limit),
    )(adj_p, x_p, dinv,
      pp["w1"], pp["b1"], pp["w2"], pp["b2"],
      pp["wg"], pp["bg"], pp["wc"], pp["bc"])

    return out[:n, :c]


# ---------------------------------------------------------------------------
# Demo
# ---------------------------------------------------------------------------

if __name__ == "__main__":
    num_nodes = 16
    num_features = 16
    num_classes = 4

    key = jax.random.PRNGKey(0)
    k_x, k_params, k_drop = jax.random.split(key, 3)

    x = jax.random.normal(k_x, (num_nodes, num_features), jnp.float32)

    # deterministic edge set (unique edges): two ring offsets -> 2N edges
    idx = jnp.arange(num_nodes)
    src = jnp.concatenate([idx, idx])
    dst = jnp.concatenate([jnp.roll(idx, 1), jnp.roll(idx, 3)])
    edge_index = jnp.stack([src, dst], axis=0).astype(jnp.int32)

    params = init_srm_params(k_params, num_features, num_classes, hidden=64)

    out = srm_forward(params, x, edge_index, k_drop)
    out = jax.block_until_ready(out)

    assert out.shape == (num_nodes, num_classes)
    assert bool(jnp.all(jnp.isfinite(out)))
    # rows of log_softmax should exp-sum to 1
    assert bool(jnp.allclose(jnp.sum(jnp.exp(out), axis=1), 1.0, atol=1e-4))

    print("KERNEL_OK")
</pallas_src>

<mosaic_0001>
module attributes {stable_mosaic.version = 11 : i64} {
  func.func @kernel(%arg0: i32, %arg1: i32, %arg2: memref<128x128xbf16, #tpu.memory_space<vmem>>, %arg3: memref<128x128xf32, #tpu.memory_space<vmem>>, %arg4: memref<128x1xf32, #tpu.memory_space<vmem>>, %arg5: memref<128x128xf32, #tpu.memory_space<vmem>>, %arg6: memref<1x128xf32, #tpu.memory_space<vmem>>, %arg7: memref<128x128xf32, #tpu.memory_space<vmem>>, %arg8: memref<1x128xf32, #tpu.memory_space<vmem>>, %arg9: memref<128x128xf32, #tpu.memory_space<vmem>>, %arg10: memref<1x128xf32, #tpu.memory_space<vmem>>, %arg11: memref<128x128xf32, #tpu.memory_space<vmem>>, %arg12: memref<1x128xf32, #tpu.memory_space<vmem>>, %arg13: memref<128x128xf32, #tpu.memory_space<vmem>>, %arg14: memref<128x128xf32, #tpu.memory_space<vmem>>, %arg15: memref<128x128xf32, #tpu.memory_space<vmem>>, %arg16: memref<128x128xf32, #tpu.memory_space<vmem>>, %arg17: memref<128x128xf32, #tpu.memory_space<vmem>>, %arg18: memref<128x128xbf16, #tpu.memory_space<vmem>>, %arg19: memref<128x1xf32, #tpu.memory_space<vmem>>, %arg20: memref<128x1xf32, #tpu.memory_space<vmem>>) attributes {dimension_semantics = [#tpu.dimension_semantics<arbitrary>, #tpu.dimension_semantics<arbitrary>], iteration_bounds = array<i64: 3, 1>, scalar_prefetch = 0 : i64, scratch_operands = 7 : i64, tpu.core_type = #tpu.core_type<tc>, window_params = [{transform_indices = @transform_0, window_bounds = array<i64: 128, 128>}, {pipeline_mode = #tpu.pipeline_mode<synchronous>, transform_indices = @transform_1, window_bounds = array<i64: 128, 128>}, {pipeline_mode = #tpu.pipeline_mode<synchronous>, transform_indices = @transform_2, window_bounds = array<i64: 128, 1>}, {pipeline_mode = #tpu.pipeline_mode<synchronous>, transform_indices = @transform_3, window_bounds = array<i64: 128, 128>}, {pipeline_mode = #tpu.pipeline_mode<synchronous>, transform_indices = @transform_4, window_bounds = array<i64: 1, 128>}, {pipeline_mode = #tpu.pipeline_mode<synchronous>, transform_indices = @transform_5, window_bounds = array<i64: 128, 128>}, {pipeline_mode = #tpu.pipeline_mode<synchronous>, transform_indices = @transform_6, window_bounds = array<i64: 1, 128>}, {pipeline_mode = #tpu.pipeline_mode<synchronous>, transform_indices = @transform_7, window_bounds = array<i64: 128, 128>}, {pipeline_mode = #tpu.pipeline_mode<synchronous>, transform_indices = @transform_8, window_bounds = array<i64: 1, 128>}, {pipeline_mode = #tpu.pipeline_mode<synchronous>, transform_indices = @transform_9, window_bounds = array<i64: 128, 128>}, {pipeline_mode = #tpu.pipeline_mode<synchronous>, transform_indices = @transform_10, window_bounds = array<i64: 1, 128>}, {transform_indices = @transform_11, window_bounds = array<i64: 128, 128>}]} {
    %c128_i32 = arith.constant 128 : i32
    %0 = arith.muli %arg1, %c128_i32 : i32
    %1 = tpu.assume_multiple %0, 128 : i32
    %c0_i32 = arith.constant 0 : i32
    %2 = arith.cmpi eq, %arg0, %c0_i32 : i32
    %3 = arith.extui %2 : i1 to i32
    %c0_i32_0 = arith.constant 0 : i32
    %4 = arith.cmpi ne, %3, %c0_i32_0 : i32
    scf.if %4 {
      %c0_i32_3 = arith.constant 0 : i32
      %11 = arith.cmpi eq, %arg1, %c0_i32_3 : i32
      %12 = arith.extui %11 : i1 to i32
      %c0_i32_4 = arith.constant 0 : i32
      %13 = arith.cmpi ne, %12, %c0_i32_4 : i32
      scf.if %13 {
        %c0_14 = arith.constant 0 : index
        %c0_15 = arith.constant 0 : index
        %32 = vector.load %arg3[%c0_14, %c0_15] : memref<128x128xf32, #tpu.memory_space<vmem>>, vector<128x128xf32>
        %c0_16 = arith.constant 0 : index
        %c0_17 = arith.constant 0 : index
        %33 = vector.load %arg5[%c0_16, %c0_17] : memref<128x128xf32, #tpu.memory_space<vmem>>, vector<128x128xf32>
        %cst_18 = arith.constant dense<0.000000e+00> : vector<128x128xf32>
        %34 = tpu.matmul %32, %33, %cst_18 {dimension_numbers = #tpu.dot_dimension_numbers<[1], [0], [0], [1], [0, 0, 1, 1], [], []>} : vector<128x128xf32>, vector<128x128xf32>, vector<128x128xf32> -> vector<128x128xf32>
        %c0_19 = arith.constant 0 : index
        %c0_20 = arith.constant 0 : index
        %35 = vector.load %arg4[%c0_19, %c0_20] : memref<128x1xf32, #tpu.memory_space<vmem>>, vector<128x1xf32>
        %36 = vector.broadcast %35 : vector<128x1xf32> to vector<128x128xf32>
        %37 = arith.mulf %36, %34 : vector<128x128xf32>
        %c0_21 = arith.constant 0 : index
        %c0_22 = arith.constant 0 : index
        %38 = vector.load %arg14[%c0_21, %c0_22] : memref<128x128xf32, #tpu.memory_space<vmem>>, vector<128x128xf32>
        tpu.vector_store %arg14[%c0_21, %c0_22], %37 {strides = array<i32>} : memref<128x128xf32, #tpu.memory_space<vmem>>, vector<128x128xf32>,
      } else {
      }
      %c0 = arith.constant 0 : index
      %c0_5 = arith.constant 0 : index
      %14 = vector.load %arg2[%c0, %c0_5] : memref<128x128xbf16, #tpu.memory_space<vmem>>, vector<128x128xbf16>
      %c0_6 = arith.constant 0 : index
      %c0_7 = arith.constant 0 : index
      %15 = vector.load %arg14[%c0_6, %c0_7] : memref<128x128xf32, #tpu.memory_space<vmem>>, vector<128x128xf32>
      %16 = arith.truncf %15 : vector<128x128xf32> to vector<128x128xbf16>
      %cst = arith.constant dense<0.000000e+00> : vector<128x128xf32>
      %17 = tpu.matmul %14, %16, %cst {dimension_numbers = #tpu.dot_dimension_numbers<[1], [0], [0], [1], [0, 0, 1, 1], [], []>} : vector<128x128xbf16>, vector<128x128xbf16>, vector<128x128xf32> -> vector<128x128xf32>
      %18 = arith.index_cast %1 : i32 to index
      %c0_8 = arith.constant 0 : index
      %19 = vector.load %arg14[%18, %c0_8] : memref<128x128xf32, #tpu.memory_space<vmem>>, vector<128x128xf32>
      %20 = arith.addf %17, %19 : vector<128x128xf32>
      %21 = arith.index_cast %1 : i32 to index
      %c0_9 = arith.constant 0 : index
      %22 = vector.load %arg4[%21, %c0_9] : memref<128x1xf32, #tpu.memory_space<vmem>>, vector<128x1xf32>
      %23 = vector.broadcast %22 : vector<128x1xf32> to vector<128x128xf32>
      %24 = arith.mulf %23, %20 : vector<128x128xf32>
      %c0_10 = arith.constant 0 : index
      %c0_11 = arith.constant 0 : index
      %25 = vector.load %arg6[%c0_10, %c0_11] : memref<1x128xf32, #tpu.memory_space<vmem>>, vector<1x128xf32>
      %26 = vector.broadcast %25 : vector<1x128xf32> to vector<128x128xf32>
      %27 = arith.addf %24, %26 : vector<128x128xf32>
      %cst_12 = arith.constant 0.000000e+00 : f32
      %28 = vector.broadcast %cst_12 : f32 to vector<128x128xf32>
      %29 = arith.maximumf %27, %28 : vector<128x128xf32>
      %30 = arith.index_cast %1 : i32 to index
      %c0_13 = arith.constant 0 : index
      %31 = vector.load %arg15[%30, %c0_13] : memref<128x128xf32, #tpu.memory_space<vmem>>, vector<128x128xf32>
      tpu.vector_store %arg15[%30, %c0_13], %29 {strides = array<i32>} : memref<128x128xf32, #tpu.memory_space<vmem>>, vector<128x128xf32>,
    } else {
    }
    %c1_i32 = arith.constant 1 : i32
    %5 = arith.cmpi eq, %arg0, %c1_i32 : i32
    %6 = arith.extui %5 : i1 to i32
    %c0_i32_1 = arith.constant 0 : i32
    %7 = arith.cmpi ne, %6, %c0_i32_1 : i32
    scf.if %7 {
      %c0_i32_3 = arith.constant 0 : i32
      %11 = arith.cmpi eq, %arg1, %c0_i32_3 : i32
      %12 = arith.extui %11 : i1 to i32
      %c0_i32_4 = arith.constant 0 : i32
      %13 = arith.cmpi ne, %12, %c0_i32_4 : i32
      scf.if %13 {
        %c0_14 = arith.constant 0 : index
        %c0_15 = arith.constant 0 : index
        %32 = vector.load %arg15[%c0_14, %c0_15] : memref<128x128xf32, #tpu.memory_space<vmem>>, vector<128x128xf32>
        %c0_16 = arith.constant 0 : index
        %c0_17 = arith.constant 0 : index
        %33 = vector.load %arg7[%c0_16, %c0_17] : memref<128x128xf32, #tpu.memory_space<vmem>>, vector<128x128xf32>
        %cst_18 = arith.constant dense<0.000000e+00> : vector<128x128xf32>
        %34 = tpu.matmul %32, %33, %cst_18 {dimension_numbers = #tpu.dot_dimension_numbers<[1], [0], [0], [1], [0, 0, 1, 1], [], []>} : vector<128x128xf32>, vector<128x128xf32>, vector<128x128xf32> -> vector<128x128xf32>
        %c0_19 = arith.constant 0 : index
        %c0_20 = arith.constant 0 : index
        %35 = vector.load %arg4[%c0_19, %c0_20] : memref<128x1xf32, #tpu.memory_space<vmem>>, vector<128x1xf32>
        %36 = vector.broadcast %35 : vector<128x1xf32> to vector<128x128xf32>
        %37 = arith.mulf %36, %34 : vector<128x128xf32>
        %c0_21 = arith.constant 0 : index
        %c0_22 = arith.constant 0 : index
        %38 = vector.load %arg16[%c0_21, %c0_22] : memref<128x128xf32, #tpu.memory_space<vmem>>, vector<128x128xf32>
        tpu.vector_store %arg16[%c0_21, %c0_22], %37 {strides = array<i32>} : memref<128x128xf32, #tpu.memory_space<vmem>>, vector<128x128xf32>,
      } else {
      }
      %c0 = arith.constant 0 : index
      %c0_5 = arith.constant 0 : index
      %14 = vector.load %arg2[%c0, %c0_5] : memref<128x128xbf16, #tpu.memory_space<vmem>>, vector<128x128xbf16>
      %c0_6 = arith.constant 0 : index
      %c0_7 = arith.constant 0 : index
      %15 = vector.load %arg16[%c0_6, %c0_7] : memref<128x128xf32, #tpu.memory_space<vmem>>, vector<128x128xf32>
      %16 = arith.truncf %15 : vector<128x128xf32> to vector<128x128xbf16>
      %cst = arith.constant dense<0.000000e+00> : vector<128x128xf32>
      %17 = tpu.matmul %14, %16, %cst {dimension_numbers = #tpu.dot_dimension_numbers<[1], [0], [0], [1], [0, 0, 1, 1], [], []>} : vector<128x128xbf16>, vector<128x128xbf16>, vector<128x128xf32> -> vector<128x128xf32>
      %18 = arith.index_cast %1 : i32 to index
      %c0_8 = arith.constant 0 : index
      %19 = vector.load %arg16[%18, %c0_8] : memref<128x128xf32, #tpu.memory_space<vmem>>, vector<128x128xf32>
      %20 = arith.addf %17, %19 : vector<128x128xf32>
      %21 = arith.index_cast %1 : i32 to index
      %c0_9 = arith.constant 0 : index
      %22 = vector.load %arg4[%21, %c0_9] : memref<128x1xf32, #tpu.memory_space<vmem>>, vector<128x1xf32>
      %23 = vector.broadcast %22 : vector<128x1xf32> to vector<128x128xf32>
      %24 = arith.mulf %23, %20 : vector<128x128xf32>
      %c0_10 = arith.constant 0 : index
      %c0_11 = arith.constant 0 : index
      %25 = vector.load %arg8[%c0_10, %c0_11] : memref<1x128xf32, #tpu.memory_space<vmem>>, vector<1x128xf32>
      %26 = vector.broadcast %25 : vector<1x128xf32> to vector<128x128xf32>
      %27 = arith.addf %24, %26 : vector<128x128xf32>
      %cst_12 = arith.constant 0.000000e+00 : f32
      %28 = vector.broadcast %cst_12 : f32 to vector<128x128xf32>
      %29 = arith.maximumf %27, %28 : vector<128x128xf32>
      %30 = arith.index_cast %1 : i32 to index
      %c0_13 = arith.constant 0 : index
      %31 = vector.load %arg17[%30, %c0_13] : memref<128x128xf32, #tpu.memory_space<vmem>>, vector<128x128xf32>
      tpu.vector_store %arg17[%30, %c0_13], %29 {strides = array<i32>} : memref<128x128xf32, #tpu.memory_space<vmem>>, vector<128x128xf32>,
    } else {
    }
    %c2_i32 = arith.constant 2 : i32
    %8 = arith.cmpi eq, %arg0, %c2_i32 : i32
    %9 = arith.extui %8 : i1 to i32
    %c0_i32_2 = arith.constant 0 : i32
    %10 = arith.cmpi ne, %9, %c0_i32_2 : i32
    scf.if %10 {
      %c0_i32_3 = arith.constant 0 : i32
      %11 = arith.cmpi eq, %arg1, %c0_i32_3 : i32
      %12 = arith.extui %11 : i1 to i32
      %c0_i32_4 = arith.constant 0 : i32
      %13 = arith.cmpi ne, %12, %c0_i32_4 : i32
      scf.if %13 {
        %c0_31 = arith.constant 0 : index
        %c0_32 = arith.constant 0 : index
        %73 = vector.load %arg17[%c0_31, %c0_32] : memref<128x128xf32, #tpu.memory_space<vmem>>, vector<128x128xf32>
        %c0_33 = arith.constant 0 : index
        %c0_34 = arith.constant 0 : index
        %74 = vector.load %arg9[%c0_33, %c0_34] : memref<128x128xf32, #tpu.memory_space<vmem>>, vector<128x128xf32>
        %cst_35 = arith.constant dense<0.000000e+00> : vector<128x128xf32>
        %75 = tpu.matmul %73, %74, %cst_35 {dimension_numbers = #tpu.dot_dimension_numbers<[1], [0], [0], [1], [0, 0, 1, 1], [], []>} : vector<128x128xf32>, vector<128x128xf32>, vector<128x128xf32> -> vector<128x128xf32>
        %76 = vector.extract_strided_slice %75 {offsets = [0, 16], sizes = [128, 1], strides = [1, 1]} : vector<128x128xf32> to vector<128x1xf32>
        %c0_36 = arith.constant 0 : index
        %c0_37 = arith.constant 0 : index
        %77 = vector.load %arg19[%c0_36, %c0_37] : memref<128x1xf32, #tpu.memory_space<vmem>>, vector<128x1xf32>
        tpu.vector_store %arg19[%c0_36, %c0_37], %76 {strides = array<i32>} : memref<128x1xf32, #tpu.memory_space<vmem>>, vector<128x1xf32>,
        %78 = vector.extract_strided_slice %75 {offsets = [0, 17], sizes = [128, 1], strides = [1, 1]} : vector<128x128xf32> to vector<128x1xf32>
        %c0_38 = arith.constant 0 : index
        %c0_39 = arith.constant 0 : index
        %79 = vector.load %arg20[%c0_38, %c0_39] : memref<128x1xf32, #tpu.memory_space<vmem>>, vector<128x1xf32>
        tpu.vector_store %arg20[%c0_38, %c0_39], %78 {strides = array<i32>} : memref<128x1xf32, #tpu.memory_space<vmem>>, vector<128x1xf32>,
        %80 = tpu.iota {dimensions = array<i32: 1>} : vector<128x128xi32>
        %c18_i32 = arith.constant 18 : i32
        %81 = vector.broadcast %c18_i32 : i32 to vector<128x128xi32>
        %82 = arith.cmpi eq, %80, %81 : vector<128x128xi32>
        %cst_40 = arith.constant 1.000000e+00 : f32
        %83 = vector.broadcast %cst_40 : f32 to vector<128x128xf32>
        %84 = arith.select %82, %83, %75 : vector<128x128xi1>, vector<128x128xf32>
        %85 = arith.truncf %84 : vector<128x128xf32> to vector<128x128xbf16>
        %c0_41 = arith.constant 0 : index
        %c0_42 = arith.constant 0 : index
        %86 = vector.load %arg18[%c0_41, %c0_42] : memref<128x128xbf16, #tpu.memory_space<vmem>>, vector<128x128xbf16>
        tpu.vector_store %arg18[%c0_41, %c0_42], %85 {strides = array<i32>} : memref<128x128xbf16, #tpu.memory_space<vmem>>, vector<128x128xbf16>,
      } else {
      }
      %c0 = arith.constant 0 : index
      %c0_5 = arith.constant 0 : index
      %14 = vector.load %arg2[%c0, %c0_5] : memref<128x128xbf16, #tpu.memory_space<vmem>>, vector<128x128xbf16>
      %15 = arith.index_cast %1 : i32 to index
      %c0_6 = arith.constant 0 : index
      %16 = vector.load %arg20[%15, %c0_6] : memref<128x1xf32, #tpu.memory_space<vmem>>, vector<128x1xf32>
      %c0_7 = arith.constant 0 : index
      %c0_8 = arith.constant 0 : index
      %17 = vector.load %arg19[%c0_7, %c0_8] : memref<128x1xf32, #tpu.memory_space<vmem>>, vector<128x1xf32>
      %18 = tpu.transpose %17, [1, 0] : vector<128x1xf32> -> vector<1x128xf32>
      %19 = vector.broadcast %16 : vector<128x1xf32> to vector<128x128xf32>
      %20 = vector.broadcast %18 : vector<1x128xf32> to vector<128x128xf32>
      %21 = arith.addf %19, %20 : vector<128x128xf32>
      %cst = arith.constant 2.000000e-01 : f32
      %22 = vector.broadcast %cst : f32 to vector<128x128xf32>
      %23 = arith.mulf %22, %21 : vector<128x128xf32>
      %24 = arith.maximumf %21, %23 : vector<128x128xf32>
      %cst_9 = arith.constant 0.000000e+00 : bf16
      %25 = vector.broadcast %cst_9 : bf16 to vector<128x128xbf16>
      %26 = arith.cmpf ogt, %14, %25 : vector<128x128xbf16>
      %cst_10 = arith.constant -1.000000e+30 : f32
      %27 = vector.broadcast %cst_10 : f32 to vector<128x128xf32>
      %28 = arith.select %26, %24, %27 : vector<128x128xi1>, vector<128x128xf32>
      %cst_11 = arith.constant dense<0xFF800000> : vector<128xf32>
      %29 = vector.multi_reduction <maximumf>, %28, %cst_11 [1] : vector<128x128xf32> to vector<128xf32>
      %30 = vector.shape_cast %29 : vector<128xf32> to vector<128x1xf32>
      %31 = vector.broadcast %30 : vector<128x1xf32> to vector<128x128xf32>
      %32 = arith.subf %28, %31 : vector<128x128xf32>
      %33 = math.exp %32 : vector<128x128xf32>
      %cst_12 = arith.constant 0.000000e+00 : f32
      %34 = vector.broadcast %cst_12 : f32 to vector<128x128xf32>
      %35 = arith.select %26, %33, %34 : vector<128x128xi1>, vector<128x128xf32>
      %36 = arith.truncf %35 : vector<128x128xf32> to vector<128x128xbf16>
      %c0_13 = arith.constant 0 : index
      %c0_14 = arith.constant 0 : index
      %37 = vector.load %arg18[%c0_13, %c0_14] : memref<128x128xbf16, #tpu.memory_space<vmem>>, vector<128x128xbf16>
      %cst_15 = arith.constant dense<0.000000e+00> : vector<128x128xf32>
      %38 = tpu.matmul %36, %37, %cst_15 {dimension_numbers = #tpu.dot_dimension_numbers<[1], [0], [0], [1], [0, 0, 1, 1], [], []>} : vector<128x128xbf16>, vector<128x128xbf16>, vector<128x128xf32> -> vector<128x128xf32>
      %39 = vector.extract_strided_slice %38 {offsets = [0, 18], sizes = [128, 1], strides = [1, 1]} : vector<128x128xf32> to vector<128x1xf32>
      %cst_16 = arith.constant 0.000000e+00 : f32
      %40 = vector.broadcast %cst_16 : f32 to vector<128x1xf32>
      %41 = arith.cmpf ogt, %39, %40 : vector<128x1xf32>
      %cst_17 = arith.constant 1.000000e+00 : f32
      %42 = vector.broadcast %cst_17 : f32 to vector<128x1xf32>
      %43 = arith.select %41, %39, %42 : vector<128x1xi1>, vector<128x1xf32>
      %44 = tpu.reciprocal %43 : vector<128x1xf32> -> vector<128x1xf32>
      %45 = vector.broadcast %44 : vector<128x1xf32> to vector<128x128xf32>
      %46 = arith.mulf %38, %45 : vector<128x128xf32>
      %c0_18 = arith.constant 0 : index
      %c0_19 = arith.constant 0 : index
      %47 = vector.load %arg10[%c0_18, %c0_19] : memref<1x128xf32, #tpu.memory_space<vmem>>, vector<1x128xf32>
      %48 = vector.broadcast %47 : vector<1x128xf32> to vector<128x128xf32>
      %49 = arith.addf %46, %48 : vector<128x128xf32>
      %cst_20 = arith.constant 0.000000e+00 : f32
      %50 = vector.broadcast %cst_20 : f32 to vector<128x128xf32>
      %51 = arith.maximumf %49, %50 : vector<128x128xf32>
      %52 = arith.negf %51 : vector<128x128xf32>
      %53 = math.exp %52 : vector<128x128xf32>
      %cst_21 = arith.constant 1.000000e+00 : f32
      %54 = vector.broadcast %cst_21 : f32 to vector<128x128xf32>
      %55 = arith.addf %54, %53 : vector<128x128xf32>
      %56 = arith.divf %54, %55 : vector<128x128xf32>
      %c0_22 = arith.constant 0 : index
      %c0_23 = arith.constant 0 : index
      %57 = vector.load %arg11[%c0_22, %c0_23] : memref<128x128xf32, #tpu.memory_space<vmem>>, vector<128x128xf32>
      %cst_24 = arith.constant dense<0.000000e+00> : vector<128x128xf32>
      %58 = tpu.matmul %56, %57, %cst_24 {dimension_numbers = #tpu.dot_dimension_numbers<[1], [0], [0], [1], [0, 0, 1, 1], [], []>} : vector<128x128xf32>, vector<128x128xf32>, vector<128x128xf32> -> vector<128x128xf32>
      %c0_25 = arith.constant 0 : index
      %c0_26 = arith.constant 0 : index
      %59 = vector.load %arg12[%c0_25, %c0_26] : memref<1x128xf32, #tpu.memory_space<vmem>>, vector<1x128xf32>
      %60 = vector.broadcast %59 : vector<1x128xf32> to vector<128x128xf32>
      %61 = arith.addf %58, %60 : vector<128x128xf32>
      %cst_27 = arith.constant dense<0xFF800000> : vector<128xf32>
      %62 = vector.multi_reduction <maximumf>, %61, %cst_27 [1] : vector<128x128xf32> to vector<128xf32>
      %63 = vector.shape_cast %62 : vector<128xf32> to vector<128x1xf32>
      %64 = vector.broadcast %63 : vector<128x1xf32> to vector<128x128xf32>
      %65 = arith.subf %61, %64 : vector<128x128xf32>
      %66 = math.exp %65 : vector<128x128xf32>
      %cst_28 = arith.constant dense<0.000000e+00> : vector<128xf32>
      %67 = vector.multi_reduction <add>, %66, %cst_28 [1] : vector<128x128xf32> to vector<128xf32>
      %68 = vector.shape_cast %67 : vector<128xf32> to vector<128x1xf32>
      %69 = math.log %68 : vector<128x1xf32>
      %70 = vector.broadcast %69 : vector<128x1xf32> to vector<128x128xf32>
      %71 = arith.subf %65, %70 : vector<128x128xf32>
      %c0_29 = arith.constant 0 : index
      %c0_30 = arith.constant 0 : index
      %72 = vector.load %arg13[%c0_29, %c0_30] : memref<128x128xf32, #tpu.memory_space<vmem>>, vector<128x128xf32>
      tpu.vector_store %arg13[%c0_29, %c0_30], %71 {strides = array<i32>} : memref<128x128xf32, #tpu.memory_space<vmem>>, vector<128x128xf32>,
    } else {
    }
    return
  }
  func.func @transform_0(%arg0: i32, %arg1: i32) -> (i32, i32) {
    %c0_i32 = arith.constant 0 : i32
    %c0_i32_0 = arith.constant 0 : i32
    return %arg1, %c0_i32 : i32, i32
  }
  func.func @transform_1(%arg0: i32, %arg1: i32) -> (i32, i32) {
    %c0_i32 = arith.constant 0 : i32
    %c0_i32_0 = arith.constant 0 : i32
    %c0_i32_1 = arith.constant 0 : i32
    return %c0_i32, %c0_i32_0 : i32, i32
  }
  func.func @transform_2(%arg0: i32, %arg1: i32) -> (i32, i32) {
    %c0_i32 = arith.constant 0 : i32
    %c0_i32_0 = arith.constant 0 : i32
    %c0_i32_1 = arith.constant 0 : i32
    return %c0_i32, %c0_i32_0 : i32, i32
  }
  func.func @transform_3(%arg0: i32, %arg1: i32) -> (i32, i32) {
    %c0_i32 = arith.constant 0 : i32
    %c0_i32_0 = arith.constant 0 : i32
    %c0_i32_1 = arith.constant 0 : i32
    return %c0_i32, %c0_i32_0 : i32, i32
  }
  func.func @transform_4(%arg0: i32, %arg1: i32) -> (i32, i32) {
    %c0_i32 = arith.constant 0 : i32
    %c0_i32_0 = arith.constant 0 : i32
    %c0_i32_1 = arith.constant 0 : i32
    return %c0_i32, %c0_i32_0 : i32, i32
  }
  func.func @transform_5(%arg0: i32, %arg1: i32) -> (i32, i32) {
    %c0_i32 = arith.constant 0 : i32
    %c0_i32_0 = arith.constant 0 : i32
    %c0_i32_1 = arith.constant 0 : i32
    return %c0_i32, %c0_i32_0 : i32, i32
  }
  func.func @transform_6(%arg0: i32, %arg1: i32) -> (i32, i32) {
    %c0_i32 = arith.constant 0 : i32
    %c0_i32_0 = arith.constant 0 : i32
    %c0_i32_1 = arith.constant 0 : i32
    return %c0_i32, %c0_i32_0 : i32, i32
  }
  func.func @transform_7(%arg0: i32, %arg1: i32) -> (i32, i32) {
    %c0_i32 = arith.constant 0 : i32
    %c0_i32_0 = arith.constant 0 : i32
    %c0_i32_1 = arith.constant 0 : i32
    return %c0_i32, %c0_i32_0 : i32, i32
  }
  func.func @transform_8(%arg0: i32, %arg1: i32) -> (i32, i32) {
    %c0_i32 = arith.constant 0 : i32
    %c0_i32_0 = arith.constant 0 : i32
    %c0_i32_1 = arith.constant 0 : i32
    return %c0_i32, %c0_i32_0 : i32, i32
  }
  func.func @transform_9(%arg0: i32, %arg1: i32) -> (i32, i32) {
    %c0_i32 = arith.constant 0 : i32
    %c0_i32_0 = arith.constant 0 : i32
    %c0_i32_1 = arith.constant 0 : i32
    return %c0_i32, %c0_i32_0 : i32, i32
  }
  func.func @transform_10(%arg0: i32, %arg1: i32) -> (i32, i32) {
    %c0_i32 = arith.constant 0 : i32
    %c0_i32_0 = arith.constant 0 : i32
    %c0_i32_1 = arith.constant 0 : i32
    return %c0_i32, %c0_i32_0 : i32, i32
  }
  func.func @transform_11(%arg0: i32, %arg1: i32) -> (i32, i32) {
    %c2_i32 = arith.constant 2 : i32
    %0 = arith.cmpi eq, %arg0, %c2_i32 : i32
    %c0_i32 = arith.constant 0 : i32
    %1 = arith.select %0, %arg1, %c0_i32 : i32
    %c0_i32_0 = arith.constant 0 : i32
    %c0_i32_1 = arith.constant 0 : i32
    return %1, %c0_i32_0 : i32, i32
  }
}

</mosaic_0001>

<llo_original>
// kernel: tpu_custom_call.1
$region0: #{tpu_custom_call.1}
  #allocation0 [shape = 'u32[]', space=smem, size = 0x4, offset = 0x4, fixed_abs, tag = 'smem constant byte address 0x4 - core index']
  #allocation1 [shape = 'u32[144,128]{1,0:T(1,128)}', space=vmem, size = 0x12000, scoped, tag = 'internal scratch']
  #allocation2 [shape = 'f32[128,128]{1,0:T(8,128)}', space=vmem, size = 0x10000, scoped, tag = 'scratch operand']
  #allocation3 [shape = 'f32[128,128]{1,0:T(8,128)}', space=vmem, size = 0x10000, scoped, tag = 'scratch operand']
  #allocation4 [shape = 'f32[128,128]{1,0:T(8,128)}', space=vmem, size = 0x10000, scoped, tag = 'scratch operand']
  #allocation5 [shape = 'f32[128,128]{1,0:T(8,128)}', space=vmem, size = 0x10000, scoped, tag = 'scratch operand']
  #allocation6 [shape = 'bf16[128,128]{1,0:T(8,128)(2,1)}', space=vmem, size = 0x8000, scoped, tag = 'scratch operand']
  #allocation7 [shape = 'f32[128,1]{1,0:T(8,128)}', space=vmem, size = 0x10000, scoped, tag = 'scratch operand']
  #allocation8 [shape = 'f32[128,1]{1,0:T(8,128)}', space=vmem, size = 0x10000, scoped, tag = 'scratch operand']
  %s0 = inlined_call_operand.hbm [shape: bf16[128,128], index: 0, kind: input, shape index: {}]
  %s1 = inlined_call_operand.vmem [shape: f32[128,128], index: 1, kind: input, shape index: {}]
  %s2 = inlined_call_operand.vmem [shape: f32[128,1], index: 2, kind: input, shape index: {}]
  %s3 = inlined_call_operand.hbm [shape: f32[128,128], index: 3, kind: input, shape index: {}]
  %s4 = inlined_call_operand.vmem [shape: f32[1,128], index: 4, kind: input, shape index: {}]
  %s5 = inlined_call_operand.hbm [shape: f32[128,128], index: 5, kind: input, shape index: {}]
  %s6 = inlined_call_operand.vmem [shape: f32[1,128], index: 6, kind: input, shape index: {}]
  %s7 = inlined_call_operand.hbm [shape: f32[128,128], index: 7, kind: input, shape index: {}]
  %s8 = inlined_call_operand.vmem [shape: f32[1,128], index: 8, kind: input, shape index: {}]
  %s9 = inlined_call_operand.hbm [shape: f32[128,128], index: 9, kind: input, shape index: {}]
  %s10 = inlined_call_operand.vmem [shape: f32[1,128], index: 10, kind: input, shape index: {}]
  %s11 = inlined_call_operand.hbm [shape: f32[128,128], index: 11, kind: output, shape index: {}]
  %s12 = sld [smem:[#allocation0]]
  $region121: #{tpu_custom_call.1} parent=0
    _
  %s14 = ssub.s32 1, %s12
  %s15 = scalar_select 0, %s14, %s12
  $region1: #{tpu_custom_call.1} parent=0
    #allocation9 [shape = 'u8[32768]{0}', space=vmem, size = 0x8000, scoped, tag = 'input window, operand 0, single buffered']
    #allocation10 [shape = 's32[2]{0}', space=sflag, size = 0x8, scoped, tag = 'scoped memory for tpu_custom_call.1']
    #allocation11 [shape = 's32[2]{0}', space=sflag, size = 0x8, scoped, tag = 'scoped memory for tpu_custom_call.1']
    #allocation12 [shape = 'u8[65536]{0}', space=vmem, size = 0x10000, scoped, tag = 'input window, operand 3, single buffered']
    #allocation13 [shape = 's32[1]{0}', space=sflag, size = 0x4, scoped, tag = 'scoped memory for tpu_custom_call.1']
    #allocation14 [shape = 'u8[65536]{0}', space=vmem, size = 0x10000, scoped, tag = 'input window, operand 5, single buffered']
    #allocation15 [shape = 'u8[65536]{0}', space=vmem, size = 0x10000, scoped, tag = 'input window, operand 7, single buffered']
    #allocation16 [shape = 's32[1]{0}', space=sflag, size = 0x4, scoped, tag = 'scoped memory for tpu_custom_call.1']
    #allocation17 [shape = 'u8[65536]{0}', space=vmem, size = 0x10000, scoped, tag = 'input window, operand 9, single buffered']
    #allocation18 [shape = 'u8[131072]{0}', space=vmem, size = 0x20000, scoped, tag = 'output window, operand 0']
    %16 = vsyncpa [#allocation10], 0
    %17 = vsyncpa [#allocation13], 0
    %18 = vsyncpa [#allocation16], 0
    %19 = vsyncpa [#allocation11], 0
    %s20 = scalar_lea.sflag [#allocation11], 1
    %21 = vsyncpa %s20, 0
    loop: start=0, step=1, limit=5
    $region2: #{tpu_custom_call.1} parent=1 // loop_pre_header
      _
    $region3: #{tpu_custom_call.1} parent=1 // loop_header
      %s23 = sphi 0, %s27
      %p24 = scmp.ge.s32.totalorder %s23, 5
      %s30 = sphi 0, %s42
      %s31 = sphi 0, %s38
      %s32 = sphi 0, %s30
      %s33 = sphi 0, %s31
      %s34 = sphi 0, %s32
      %s35 = sphi 0, %s33
      %s45 = sphi 0, %s47
      %s48 = sphi 0, %s45
      %s49 = sphi 0, %s48
      %s65 = sphi 0, %s49
      %s69 = sphi 0, %s69
      %s71 = sphi 0, %s69
      %s72 = sphi 0, %s71
      %s86 = sphi 0, %s72
      %s90 = sphi 0, %s90
      %s92 = sphi 0, %s90
      %s93 = sphi 0, %s92
      %s107 = sphi 0, %s93
      %s111 = sphi 0, %s111
      %s113 = sphi 0, %s111
      %s114 = sphi 0, %s113
      %s128 = sphi 0, %s114
      %s132 = sphi 0, %s132
      %s134 = sphi 0, %s132
      %s135 = sphi 0, %s134
      %s149 = sphi 0, %s135
      %s153 = sphi 0, %s153
      %s155 = sphi 0, %s153
      %s156 = sphi 0, %s155
      %s170 = sphi 0, %s156
      %s174 = sphi 0, %s174
      %s176 = sphi 0, %s174
      %s177 = sphi 0, %s176
      %s191 = sphi 0, %s177
      %s195 = sphi 0, %s195
      %s197 = sphi 0, %s195
      %s198 = sphi 0, %s197
      %s212 = sphi 0, %s198
      %s216 = sphi 0, %s216
      %s218 = sphi 0, %s216
      %s219 = sphi 0, %s218
      %s233 = sphi 0, %s219
      %s237 = sphi 0, %s237
      %s239 = sphi 0, %s237
      %s240 = sphi 0, %s239
      %s254 = sphi 0, %s240
      %s258 = sphi 0, %s258
      %s260 = sphi 0, %s258
      %s261 = sphi 0, %s260
      %s275 = sphi 0, %s261
      %s285 = sphi 0, %s287
      %s288 = sphi 0, %s285
      %s289 = sphi 0, %s288
      %s305 = sphi 0, %s289
    $region4: #{tpu_custom_call.1} parent=1 // loop_header_branch
      %26 = sbr.rel (%p24) target = $region8
    $region5: #{tpu_custom_call.1} parent=1 // loop_body
      %s28 = ssub.s32 %s23, 1
      %s29 = ssub.s32 %s23, 2
      %s36 = sadd.s32 1, %s31
      %p37 = scmp.ge.s32.totalorder %s36, 1
      %s38 = scalar_select %p37, 0, %s36
      %s39 = sadd.s32 1, %s30
      %s40 = scalar_select %p37, %s39, %s30
      %p41 = scmp.ge.s32.totalorder %s40, 3
      %s42 = scalar_select %p41, 0, %s40
      %s43 = ssub.s32 %s31, %s38
      %p44 = scmp.eq.s32.totalorder %s43, 0
      %s46 = sadd.s32 %s45, 1
      %s47 = scalar_select %p44, %s45, %s46
      %p50 = pneg %p44
      %p51 = scmp.eq.s32.totalorder %s23, 2
      %p52 = por %p50, %p51
      %p53 = scmp.ne.s32.totalorder %s45, %s48
      %p54 = scmp.eq.s32.totalorder %s23, 0
      %p55 = por %p53, %p54
      %p56 = scmp.ne.s32.totalorder %s45, %s48
      %p57 = scmp.eq.s32.totalorder %s28, 2
      %p58 = por %p56, %p57
      %p59 = scmp.ne.s32.totalorder %s48, %s49
      %p60 = scmp.eq.s32.totalorder %s28, 0
      %p61 = por %p59, %p60
      %p62 = scmp.ne.s32.totalorder %s48, %s49
      %p63 = scmp.eq.s32.totalorder %s29, 2
      %p64 = por %p62, %p63
      %p66 = scmp.ne.s32.totalorder %s49, %s65
      %p67 = scmp.eq.s32.totalorder %s29, 0
      %p68 = por %p66, %p67
      %s70 = sadd.s32 %s69, 1
      %p73 = scmp.eq.s32.totalorder %s23, 2
      %p74 = scmp.ne.s32.totalorder %s69, %s71
      %p75 = scmp.eq.s32.totalorder %s23, 0
      %p76 = por %p74, %p75
      %p77 = scmp.ne.s32.totalorder %s69, %s71
      %p78 = scmp.eq.s32.totalorder %s28, 2
      %p79 = por %p77, %p78
      %p80 = scmp.ne.s32.totalorder %s71, %s72
      %p81 = scmp.eq.s32.totalorder %s28, 0
      %p82 = por %p80, %p81
      %p83 = scmp.ne.s32.totalorder %s71, %s72
      %p84 = scmp.eq.s32.totalorder %s29, 2
      %p85 = por %p83, %p84
      %p87 = scmp.ne.s32.totalorder %s72, %s86
      %p88 = scmp.eq.s32.totalorder %s29, 0
      %p89 = por %p87, %p88
      %s91 = sadd.s32 %s90, 1
      %p94 = scmp.eq.s32.totalorder %s23, 2
      %p95 = scmp.ne.s32.totalorder %s90, %s92
      %p96 = scmp.eq.s32.totalorder %s23, 0
      %p97 = por %p95, %p96
      %p98 = scmp.ne.s32.totalorder %s90, %s92
      %p99 = scmp.eq.s32.totalorder %s28, 2
      %p100 = por %p98, %p99
      %p101 = scmp.ne.s32.totalorder %s92, %s93
      %p102 = scmp.eq.s32.totalorder %s28, 0
      %p103 = por %p101, %p102
      %p104 = scmp.ne.s32.totalorder %s92, %s93
      %p105 = scmp.eq.s32.totalorder %s29, 2
      %p106 = por %p104, %p105
      %p108 = scmp.ne.s32.totalorder %s93, %s107
      %p109 = scmp.eq.s32.totalorder %s29, 0
      %p110 = por %p108, %p109
      %s112 = sadd.s32 %s111, 1
      %p115 = scmp.eq.s32.totalorder %s23, 2
      %p116 = scmp.ne.s32.totalorder %s111, %s113
      %p117 = scmp.eq.s32.totalorder %s23, 0
      %p118 = por %p116, %p117
      %p119 = scmp.ne.s32.totalorder %s111, %s113
      %p120 = scmp.eq.s32.totalorder %s28, 2
      %p121 = por %p119, %p120
      %p122 = scmp.ne.s32.totalorder %s113, %s114
      %p123 = scmp.eq.s32.totalorder %s28, 0
      %p124 = por %p122, %p123
      %p125 = scmp.ne.s32.totalorder %s113, %s114
      %p126 = scmp.eq.s32.totalorder %s29, 2
      %p127 = por %p125, %p126
      %p129 = scmp.ne.s32.totalorder %s114, %s128
      %p130 = scmp.eq.s32.totalorder %s29, 0
      %p131 = por %p129, %p130
      %s133 = sadd.s32 %s132, 1
      %p136 = scmp.eq.s32.totalorder %s23, 2
      %p137 = scmp.ne.s32.totalorder %s132, %s134
      %p138 = scmp.eq.s32.totalorder %s23, 0
      %p139 = por %p137, %p138
      %p140 = scmp.ne.s32.totalorder %s132, %s134
      %p141 = scmp.eq.s32.totalorder %s28, 2
      %p142 = por %p140, %p141
      %p143 = scmp.ne.s32.totalorder %s134, %s135
      %p144 = scmp.eq.s32.totalorder %s28, 0
      %p145 = por %p143, %p144
      %p146 = scmp.ne.s32.totalorder %s134, %s135
      %p147 = scmp.eq.s32.totalorder %s29, 2
      %p148 = por %p146, %p147
      %p150 = scmp.ne.s32.totalorder %s135, %s149
      %p151 = scmp.eq.s32.totalorder %s29, 0
      %p152 = por %p150, %p151
      %s154 = sadd.s32 %s153, 1
      %p157 = scmp.eq.s32.totalorder %s23, 2
      %p158 = scmp.ne.s32.totalorder %s153, %s155
      %p159 = scmp.eq.s32.totalorder %s23, 0
      %p160 = por %p158, %p159
      %p161 = scmp.ne.s32.totalorder %s153, %s155
      %p162 = scmp.eq.s32.totalorder %s28, 2
      %p163 = por %p161, %p162
      %p164 = scmp.ne.s32.totalorder %s155, %s156
      %p165 = scmp.eq.s32.totalorder %s28, 0
      %p166 = por %p164, %p165
      %p167 = scmp.ne.s32.totalorder %s155, %s156
      %p168 = scmp.eq.s32.totalorder %s29, 2
      %p169 = por %p167, %p168
      %p171 = scmp.ne.s32.totalorder %s156, %s170
      %p172 = scmp.eq.s32.totalorder %s29, 0
      %p173 = por %p171, %p172
      %s175 = sadd.s32 %s174, 1
      %p178 = scmp.eq.s32.totalorder %s23, 2
      %p179 = scmp.ne.s32.totalorder %s174, %s176
      %p180 = scmp.eq.s32.totalorder %s23, 0
      %p181 = por %p179, %p180
      %p182 = scmp.ne.s32.totalorder %s174, %s176
      %p183 = scmp.eq.s32.totalorder %s28, 2
      %p184 = por %p182, %p183
      %p185 = scmp.ne.s32.totalorder %s176, %s177
      %p186 = scmp.eq.s32.totalorder %s28, 0
      %p187 = por %p185, %p186
      %p188 = scmp.ne.s32.totalorder %s176, %s177
      %p189 = scmp.eq.s32.totalorder %s29, 2
      %p190 = por %p188, %p189
      %p192 = scmp.ne.s32.totalorder %s177, %s191
      %p193 = scmp.eq.s32.totalorder %s29, 0
      %p194 = por %p192, %p193
      %s196 = sadd.s32 %s195, 1
      %p199 = scmp.eq.s32.totalorder %s23, 2
      %p200 = scmp.ne.s32.totalorder %s195, %s197
      %p201 = scmp.eq.s32.totalorder %s23, 0
      %p202 = por %p200, %p201
      %p203 = scmp.ne.s32.totalorder %s195, %s197
      %p204 = scmp.eq.s32.totalorder %s28, 2
      %p205 = por %p203, %p204
      %p206 = scmp.ne.s32.totalorder %s197, %s198
      %p207 = scmp.eq.s32.totalorder %s28, 0
      %p208 = por %p206, %p207
      %p209 = scmp.ne.s32.totalorder %s197, %s198
      %p210 = scmp.eq.s32.totalorder %s29, 2
      %p211 = por %p209, %p210
      %p213 = scmp.ne.s32.totalorder %s198, %s212
      %p214 = scmp.eq.s32.totalorder %s29, 0
      %p215 = por %p213, %p214
      %s217 = sadd.s32 %s216, 1
      %p220 = scmp.eq.s32.totalorder %s23, 2
      %p221 = scmp.ne.s32.totalorder %s216, %s218
      %p222 = scmp.eq.s32.totalorder %s23, 0
      %p223 = por %p221, %p222
      %p224 = scmp.ne.s32.totalorder %s216, %s218
      %p225 = scmp.eq.s32.totalorder %s28, 2
      %p226 = por %p224, %p225
      %p227 = scmp.ne.s32.totalorder %s218, %s219
      %p228 = scmp.eq.s32.totalorder %s28, 0
      %p229 = por %p227, %p228
      %p230 = scmp.ne.s32.totalorder %s218, %s219
      %p231 = scmp.eq.s32.totalorder %s29, 2
      %p232 = por %p230, %p231
      %p234 = scmp.ne.s32.totalorder %s219, %s233
      %p235 = scmp.eq.s32.totalorder %s29, 0
      %p236 = por %p234, %p235
      %s238 = sadd.s32 %s237, 1
      %p241 = scmp.eq.s32.totalorder %s23, 2
      %p242 = scmp.ne.s32.totalorder %s237, %s239
      %p243 = scmp.eq.s32.totalorder %s23, 0
      %p244 = por %p242, %p243
      %p245 = scmp.ne.s32.totalorder %s237, %s239
      %p246 = scmp.eq.s32.totalorder %s28, 2
      %p247 = por %p245, %p246
      %p248 = scmp.ne.s32.totalorder %s239, %s240
      %p249 = scmp.eq.s32.totalorder %s28, 0
      %p250 = por %p248, %p249
      %p251 = scmp.ne.s32.totalorder %s239, %s240
      %p252 = scmp.eq.s32.totalorder %s29, 2
      %p253 = por %p251, %p252
      %p255 = scmp.ne.s32.totalorder %s240, %s254
      %p256 = scmp.eq.s32.totalorder %s29, 0
      %p257 = por %p255, %p256
      %s259 = sadd.s32 %s258, 1
      %p262 = scmp.eq.s32.totalorder %s23, 2
      %p263 = scmp.ne.s32.totalorder %s258, %s260
      %p264 = scmp.eq.s32.totalorder %s23, 0
      %p265 = por %p263, %p264
      %p266 = scmp.ne.s32.totalorder %s258, %s260
      %p267 = scmp.eq.s32.totalorder %s28, 2
      %p268 = por %p266, %p267
      %p269 = scmp.ne.s32.totalorder %s260, %s261
      %p270 = scmp.eq.s32.totalorder %s28, 0
      %p271 = por %p269, %p270
      %p272 = scmp.ne.s32.totalorder %s260, %s261
      %p273 = scmp.eq.s32.totalorder %s29, 2
      %p274 = por %p272, %p273
      %p276 = scmp.ne.s32.totalorder %s261, %s275
      %p277 = scmp.eq.s32.totalorder %s29, 0
      %p278 = por %p276, %p277
      %p279 = scmp.eq.s32.totalorder %s30, 2
      %s280 = scalar_select %p279, %s31, 0
      %p281 = scmp.eq.s32.totalorder %s42, 2
      %s282 = scalar_select %p281, %s38, 0
      %s283 = ssub.s32 %s280, %s282
      %p284 = scmp.eq.s32.totalorder %s283, 0
      %s286 = sadd.s32 %s285, 1
      %s287 = scalar_select %p284, %s285, %s286
      %p290 = pneg %p284
      %p291 = scmp.eq.s32.totalorder %s23, 2
      %p292 = por %p290, %p291
      %p293 = scmp.ne.s32.totalorder %s285, %s288
      %p294 = scmp.eq.s32.totalorder %s23, 0
      %p295 = por %p293, %p294
      %p296 = scmp.ne.s32.totalorder %s285, %s288
      %p297 = scmp.eq.s32.totalorder %s28, 2
      %p298 = por %p296, %p297
      %p299 = scmp.ne.s32.totalorder %s288, %s289
      %p300 = scmp.eq.s32.totalorder %s28, 0
      %p301 = por %p299, %p300
      %p302 = scmp.ne.s32.totalorder %s288, %s289
      %p303 = scmp.eq.s32.totalorder %s29, 2
      %p304 = por %p302, %p303
      %p306 = scmp.ne.s32.totalorder %s289, %s305
      %p307 = scmp.eq.s32.totalorder %s29, 0
      %p308 = por %p306, %p307
      %p309 = scmp.le.s32.totalorder 1, %s23
      %p310 = scmp.lt.s32.totalorder %s23, 4
      %p311 = pnand %p309, %p310
      %p312 = pneg %p311
      // Predicated region
      $region9: #{tpu_custom_call.1} parent=5 // pred_check
        _
      $region10: #{tpu_custom_call.1} parent=5 // pred_check_branch
        %314 = sbr.rel (%p311) target = $region12
      $region11: #{tpu_custom_call.1} parent=5 // pred_region
        %s315 = ssub.s32 %s23, 1
        // Predicated region
        $region13: #{tpu_custom_call.1} parent=11 // pred_check
          %p316 = pneg %p61
        $region14: #{tpu_custom_call.1} parent=11 // pred_check_branch
          %318 = sbr.rel (%p316) target = $region16
        $region15: #{tpu_custom_call.1} parent=11 // pred_region
          %s319 = smul.u32 16, %s33
          %s321 = ssub.s32 1024, 1024
          %322 = vsyncadd [#allocation10], %s321
          %s323 = smul.addr %s319, 64
          %s324 = scalar_lea.hbm %s0, %s323
          %s325 = sshll.u32 [#allocation9], 4
          %s326 = int_to_ptr.vmem [resolvable:$true] %s325
          %331 = dma.hbm_to_vmem [thread:$0]  %s324, 1024, %s326, [#allocation10], 64, 64, 4
        $region16: #{tpu_custom_call.1} parent=11 // pred_fallthru
          _
        // Predicated region
        $region17: #{tpu_custom_call.1} parent=11 // pred_check
          %p332 = pneg %p82
        $region18: #{tpu_custom_call.1} parent=11 // pred_check_branch
          %334 = sbr.rel (%p332) target = $region20
        $region19: #{tpu_custom_call.1} parent=11 // pred_region
          _
        $region20: #{tpu_custom_call.1} parent=11 // pred_fallthru
          _
        // Predicated region
        $region21: #{tpu_custom_call.1} parent=11 // pred_check
          %p335 = pneg %p103
        $region22: #{tpu_custom_call.1} parent=11 // pred_check_branch
          %337 = sbr.rel (%p335) target = $region24
        $region23: #{tpu_custom_call.1} parent=11 // pred_region
          _
        $region24: #{tpu_custom_call.1} parent=11 // pred_fallthru
          _
        // Predicated region
        $region25: #{tpu_custom_call.1} parent=11 // pred_check
          %p338 = pneg %p124
        $region26: #{tpu_custom_call.1} parent=11 // pred_check_branch
          %340 = sbr.rel (%p338) target = $region28
        $region27: #{tpu_custom_call.1} parent=11 // pred_region
          %s342 = ssub.s32 2048, 2048
          %343 = vsyncadd [#allocation13], %s342
          %s344 = sshll.u32 [#allocation12], 4
          %s345 = int_to_ptr.vmem [resolvable:$true] %s344
          %350 = dma.hbm_to_vmem [thread:$0]  %s3, 2048, %s345, [#allocation13], 128, 128, 8
        $region28: #{tpu_custom_call.1} parent=11 // pred_fallthru
          _
        // Predicated region
        $region29: #{tpu_custom_call.1} parent=11 // pred_check
          %p351 = pneg %p145
        $region30: #{tpu_custom_call.1} parent=11 // pred_check_branch
          %353 = sbr.rel (%p351) target = $region32
        $region31: #{tpu_custom_call.1} parent=11 // pred_region
          _
        $region32: #{tpu_custom_call.1} parent=11 // pred_fallthru
          _
        // Predicated region
        $region33: #{tpu_custom_call.1} parent=11 // pred_check
          %p354 = pneg %p166
        $region34: #{tpu_custom_call.1} parent=11 // pred_check_branch
          %356 = sbr.rel (%p354) target = $region36
        $region35: #{tpu_custom_call.1} parent=11 // pred_region
          %s358 = ssub.s32 2048, 2048
          %359 = vsyncadd [#allocation13], %s358
          %s360 = sshll.u32 [#allocation14], 4
          %s361 = int_to_ptr.vmem [resolvable:$true] %s360
          %366 = dma.hbm_to_vmem [thread:$0]  %s5, 2048, %s361, [#allocation13], 128, 128, 8
        $region36: #{tpu_custom_call.1} parent=11 // pred_fallthru
          _
        // Predicated region
        $region37: #{tpu_custom_call.1} parent=11 // pred_check
          %p367 = pneg %p187
        $region38: #{tpu_custom_call.1} parent=11 // pred_check_branch
          %369 = sbr.rel (%p367) target = $region40
        $region39: #{tpu_custom_call.1} parent=11 // pred_region
          _
        $region40: #{tpu_custom_call.1} parent=11 // pred_fallthru
          _
        // Predicated region
        $region41: #{tpu_custom_call.1} parent=11 // pred_check
          %p370 = pneg %p208
        $region42: #{tpu_custom_call.1} parent=11 // pred_check_branch
          %372 = sbr.rel (%p370) target = $region44
        $region43: #{tpu_custom_call.1} parent=11 // pred_region
          %s374 = ssub.s32 2048, 2048
          %375 = vsyncadd [#allocation16], %s374
          %s376 = sshll.u32 [#allocation15], 4
          %s377 = int_to_ptr.vmem [resolvable:$true] %s376
          %382 = dma.hbm_to_vmem [thread:$0]  %s7, 2048, %s377, [#allocation16], 128, 128, 8
        $region44: #{tpu_custom_call.1} parent=11 // pred_fallthru
          _
        // Predicated region
        $region45: #{tpu_custom_call.1} parent=11 // pred_check
          %p383 = pneg %p229
        $region46: #{tpu_custom_call.1} parent=11 // pred_check_branch
          %385 = sbr.rel (%p383) target = $region48
        $region47: #{tpu_custom_call.1} parent=11 // pred_region
          _
        $region48: #{tpu_custom_call.1} parent=11 // pred_fallthru
          _
        // Predicated region
        $region49: #{tpu_custom_call.1} parent=11 // pred_check
          %p386 = pneg %p250
        $region50: #{tpu_custom_call.1} parent=11 // pred_check_branch
          %388 = sbr.rel (%p386) target = $region52
        $region51: #{tpu_custom_call.1} parent=11 // pred_region
          %s390 = ssub.s32 2048, 2048
          %391 = vsyncadd [#allocation16], %s390
          %s392 = sshll.u32 [#allocation17], 4
          %s393 = int_to_ptr.vmem [resolvable:$true] %s392
          %398 = dma.hbm_to_vmem [thread:$0]  %s9, 2048, %s393, [#allocation16], 128, 128, 8
        $region52: #{tpu_custom_call.1} parent=11 // pred_fallthru
          _
        // Predicated region
        $region53: #{tpu_custom_call.1} parent=11 // pred_check
          %p399 = pneg %p271
        $region54: #{tpu_custom_call.1} parent=11 // pred_check_branch
          %401 = sbr.rel (%p399) target = $region56
        $region55: #{tpu_custom_call.1} parent=11 // pred_region
          _
        $region56: #{tpu_custom_call.1} parent=11 // pred_fallthru
          _
      $region12: #{tpu_custom_call.1} parent=5 // pred_fallthru
        _
      %p402 = scmp.lt.s32.totalorder %s23, 3
      // Predicated region
      $region57: #{tpu_custom_call.1} parent=5 // pred_check
        %p403 = pneg %p402
      $region58: #{tpu_custom_call.1} parent=5 // pred_check_branch
        %405 = sbr.rel (%p403) target = $region60
      $region59: #{tpu_custom_call.1} parent=5 // pred_region
        _
      $region60: #{tpu_custom_call.1} parent=5 // pred_fallthru
        _
      %p406 = scmp.le.s32.totalorder 1, %s23
      %p407 = scmp.lt.s32.totalorder %s23, 4
      %p408 = pnand %p406, %p407
      %p409 = pneg %p408
      // Predicated region
      $region61: #{tpu_custom_call.1} parent=5 // pred_check
        _
      $region62: #{tpu_custom_call.1} parent=5 // pred_check_branch
        %411 = sbr.rel (%p408) target = $region64
      $region63: #{tpu_custom_call.1} parent=5 // pred_region
        %s412 = ssub.s32 %s23, 1
        // Predicated region
        $region65: #{tpu_custom_call.1} parent=63 // pred_check
          %p413 = pneg %p61
        $region66: #{tpu_custom_call.1} parent=63 // pred_check_branch
          %415 = sbr.rel (%p413) target = $region68
        $region67: #{tpu_custom_call.1} parent=63 // pred_region
          %416 = dma.done [#allocation10], 1024
        $region68: #{tpu_custom_call.1} parent=63 // pred_fallthru
          _
        // Predicated region
        $region69: #{tpu_custom_call.1} parent=63 // pred_check
          %p417 = pneg %p124
        $region70: #{tpu_custom_call.1} parent=63 // pred_check_branch
          %419 = sbr.rel (%p417) target = $region72
        $region71: #{tpu_custom_call.1} parent=63 // pred_region
          %420 = dma.done [#allocation13], 2048
        $region72: #{tpu_custom_call.1} parent=63 // pred_fallthru
          _
        // Predicated region
        $region73: #{tpu_custom_call.1} parent=63 // pred_check
          %p421 = pneg %p166
        $region74: #{tpu_custom_call.1} parent=63 // pred_check_branch
          %423 = sbr.rel (%p421) target = $region76
        $region75: #{tpu_custom_call.1} parent=63 // pred_region
          %424 = dma.done [#allocation13], 2048
        $region76: #{tpu_custom_call.1} parent=63 // pred_fallthru
          _
        // Predicated region
        $region77: #{tpu_custom_call.1} parent=63 // pred_check
          %p425 = pneg %p208
        $region78: #{tpu_custom_call.1} parent=63 // pred_check_branch
          %427 = sbr.rel (%p425) target = $region80
        $region79: #{tpu_custom_call.1} parent=63 // pred_region
          %428 = dma.done [#allocation16], 2048
        $region80: #{tpu_custom_call.1} parent=63 // pred_fallthru
          _
        // Predicated region
        $region81: #{tpu_custom_call.1} parent=63 // pred_check
          %p429 = pneg %p250
        $region82: #{tpu_custom_call.1} parent=63 // pred_check_branch
          %431 = sbr.rel (%p429) target = $region84
        $region83: #{tpu_custom_call.1} parent=63 // pred_region
          %432 = dma.done [#allocation16], 2048
        $region84: #{tpu_custom_call.1} parent=63 // pred_fallthru
          _
        %p433 = pneg %p61
        %p434 = pneg %p58
        %p435 = pneg %p82
        %p436 = pneg %p79
        %p437 = pneg %p103
        %p438 = pneg %p100
        %p439 = pneg %p124
        %p440 = pneg %p121
        %p441 = pneg %p145
        %p442 = pneg %p142
        %p443 = pneg %p166
        %p444 = pneg %p163
        %p445 = pneg %p187
        %p446 = pneg %p184
        %p447 = pneg %p208
        %p448 = pneg %p205
        %p449 = pneg %p229
        %p450 = pneg %p226
        %p451 = pneg %p250
        %p452 = pneg %p247
        %p453 = pneg %p271
        %p454 = pneg %p268
        %p455 = pneg %p301
        %p456 = pneg %p298
        %s457 = sand.u32 %s288, 1
        %s458 = scalar_lea.sflag [#allocation11], %s457
        %s459 = sand.u32 %s288, 1
        %s460 = smul.addr %s459, 128
        %s461 = scalar_lea.vmem [#allocation18], %s460
        %s462 = smul.u32 16, %s33
        %p463 = scmp.eq.s32.totalorder %s32, 2
        %s464 = scalar_select %p463, %s33, 0
        %s465 = smul.u32 16, %s464
        %s469 = smul.u32 %s33, 128
        %p470 = scmp.eq.s32.totalorder %s32, 0
        // Predicated region
        $region85: #{tpu_custom_call.1} parent=63 // pred_check
          %p471 = pneg %p470
        $region86: #{tpu_custom_call.1} parent=63 // pred_check_branch
          %473 = sbr.rel (%p471) target = $region88
        $region87: #{tpu_custom_call.1} parent=63 // pred_region
          %p474 = scmp.eq.s32.totalorder %s33, 0
          // Predicated region
          $region89: #{tpu_custom_call.1} parent=87 // pred_check
            %p475 = pneg %p474
          $region90: #{tpu_custom_call.1} parent=87 // pred_check_branch
            %477 = sbr.rel (%p475) target = $region92
          $region91: #{tpu_custom_call.1} parent=87 // pred_region
            %v478 = vld [vmem:[%s1] sm:$0xff]
            %v479 = vld [vmem:[%s1 + $0x8] sm:$0xff]
            %v480 = vld [vmem:[%s1 + $0x10] sm:$0xff]
            %v481 = vld [vmem:[%s1 + $0x18] sm:$0xff]
            %v482 = vld [vmem:[%s1 + $0x20] sm:$0xff]
            %v483 = vld [vmem:[%s1 + $0x28] sm:$0xff]
            %v484 = vld [vmem:[%s1 + $0x30] sm:$0xff]
            %v485 = vld [vmem:[%s1 + $0x38] sm:$0xff]
            %v486 = vld [vmem:[%s1 + $0x40] sm:$0xff]
            %v487 = vld [vmem:[%s1 + $0x48] sm:$0xff]
            %v488 = vld [vmem:[%s1 + $0x50] sm:$0xff]
            %v489 = vld [vmem:[%s1 + $0x58] sm:$0xff]
            %v490 = vld [vmem:[%s1 + $0x60] sm:$0xff]
            %v491 = vld [vmem:[%s1 + $0x68] sm:$0xff]
            %v492 = vld [vmem:[%s1 + $0x70] sm:$0xff]
            %v493 = vld [vmem:[%s1 + $0x78] sm:$0xff]
            %v494 = vld [vmem:[#allocation12] sm:$0xff]
            %v495 = vld [vmem:[#allocation12 + $0x8] sm:$0xff]
            %v496 = vld [vmem:[#allocation12 + $0x10] sm:$0xff]
            %v497 = vld [vmem:[#allocation12 + $0x18] sm:$0xff]
            %v498 = vld [vmem:[#allocation12 + $0x20] sm:$0xff]
            %v499 = vld [vmem:[#allocation12 + $0x28] sm:$0xff]
            %v500 = vld [vmem:[#allocation12 + $0x30] sm:$0xff]
            %v501 = vld [vmem:[#allocation12 + $0x38] sm:$0xff]
            %v502 = vld [vmem:[#allocation12 + $0x40] sm:$0xff]
            %v503 = vld [vmem:[#allocation12 + $0x48] sm:$0xff]
            %v504 = vld [vmem:[#allocation12 + $0x50] sm:$0xff]
            %v505 = vld [vmem:[#allocation12 + $0x58] sm:$0xff]
            %v506 = vld [vmem:[#allocation12 + $0x60] sm:$0xff]
            %v507 = vld [vmem:[#allocation12 + $0x68] sm:$0xff]
            %v508 = vld [vmem:[#allocation12 + $0x70] sm:$0xff]
            %v509 = vld [vmem:[#allocation12 + $0x78] sm:$0xff]
            %510 = vmatprep.subr.mxu0 0.0
            %511 = vmatpush1.msra.mxu0 %v509
            %512 = vmatprep.subr.mxu0 0.0
            %513 = vmatpush1.msra.mxu0 %v508
            %514 = vmatprep.subr.mxu0 0.0
            %515 = vmatpush1.msra.mxu0 %v507
            %516 = vmatprep.subr.mxu0 0.0
            %517 = vmatpush1.msra.mxu0 %v506
            %518 = vmatprep.subr.mxu0 0.0
            %519 = vmatpush1.msra.mxu0 %v505
            %520 = vmatprep.subr.mxu0 0.0
            %521 = vmatpush1.msra.mxu0 %v504
            %522 = vmatprep.subr.mxu0 0.0
            %523 = vmatpush1.msra.mxu0 %v503
            %524 = vmatprep.subr.mxu0 0.0
            %525 = vmatpush1.msra.mxu0 %v502
            %526 = vmatprep.subr.mxu0 0.0
            %527 = vmatpush1.msra.mxu0 %v501
            %528 = vmatprep.subr.mxu0 0.0
            %529 = vmatpush1.msra.mxu0 %v500
            %530 = vmatprep.subr.mxu0 0.0
            %531 = vmatpush1.msra.mxu0 %v499
            %532 = vmatprep.subr.mxu0 0.0
            %533 = vmatpush1.msra.mxu0 %v498
            %534 = vmatprep.subr.mxu0 0.0
            %535 = vmatpush1.msra.mxu0 %v497
            %536 = vmatprep.subr.mxu0 0.0
            %537 = vmatpush1.msra.mxu0 %v496
            %538 = vmatprep.subr.mxu0 0.0
            %539 = vmatpush1.msra.mxu0 %v495
            %540 = vmatprep.subr.mxu0 0.0
            %541 = vmatpush1.msra.mxu0 %v494
            %542 = vmatprep.subr.mxu0 0.0
            %543 = vmatpush2.msra.mxu0 0.0
            %544 = vmatprep.subr.mxu0 0.0
            %545 = vmatpush2.msra.mxu0 0.0
            %546 = vmatprep.subr.mxu0 0.0
            %547 = vmatpush2.msra.mxu0 0.0
            %548 = vmatprep.subr.mxu0 0.0
            %549 = vmatpush2.msra.mxu0 0.0
            %550 = vmatprep.subr.mxu0 0.0
            %551 = vmatpush2.msra.mxu0 0.0
            %552 = vmatprep.subr.mxu0 0.0
            %553 = vmatpush2.msra.mxu0 0.0
            %554 = vmatprep.subr.mxu0 0.0
            %555 = vmatpush2.msra.mxu0 0.0
            %556 = vmatprep.subr.mxu0 0.0
            %557 = vmatpush2.msra.mxu0 0.0
            %558 = vmatprep.subr.mxu0 0.0
            %559 = vmatpush2.msra.mxu0 0.0
            %560 = vmatprep.subr.mxu0 0.0
            %561 = vmatpush2.msra.mxu0 0.0
            %562 = vmatprep.subr.mxu0 0.0
            %563 = vmatpush2.msra.mxu0 0.0
            %564 = vmatprep.subr.mxu0 0.0
            %565 = vmatpush2.msra.mxu0 0.0
            %566 = vmatprep.subr.mxu0 0.0
            %567 = vmatpush2.msra.mxu0 0.0
            %568 = vmatprep.subr.mxu0 0.0
            %569 = vmatpush2.msra.mxu0 0.0
            %570 = vmatprep.subr.mxu0 0.0
            %571 = vmatpush2.msra.mxu0 0.0
            %572 = vmatprep.subr.mxu0 0.0
            %573 = vmatpush2.msra.mxu0 0.0
            %574 = vmatprep.mubr.f32.mxu0 0.0
            %575 = vmatmul.mubr.f32.gmra.mxu0 %v478
            %v576 = vpop.f32.mrf.mxu0
            %v577 = vadd.f32 0.0, %v576
            %v578 = vpop.f32.mrf.mxu0
            %579 = vmatprep.mubr.f32.mxu0 0.0
            %580 = vmatmul.mubr.f32.gmra.mxu0 %v479
            %v581 = vpop.f32.mrf.mxu0
            %v582 = vadd.f32 0.0, %v581
            %v583 = vpop.f32.mrf.mxu0
            %584 = vmatprep.mubr.f32.mxu0 0.0
            %585 = vmatmul.mubr.f32.gmra.mxu0 %v480
            %v586 = vpop.f32.mrf.mxu0
            %v587 = vadd.f32 0.0, %v586
            %v588 = vpop.f32.mrf.mxu0
            %589 = vmatprep.mubr.f32.mxu0 0.0
            %590 = vmatmul.mubr.f32.gmra.mxu0 %v481
            %v591 = vpop.f32.mrf.mxu0
            %v592 = vadd.f32 0.0, %v591
            %v593 = vpop.f32.mrf.mxu0
            %594 = vmatprep.mubr.f32.mxu0 0.0
            %595 = vmatmul.mubr.f32.gmra.mxu0 %v482
            %v596 = vpop.f32.mrf.mxu0
            %v597 = vadd.f32 0.0, %v596
            %v598 = vpop.f32.mrf.mxu0
            %599 = vmatprep.mubr.f32.mxu0 0.0
            %600 = vmatmul.mubr.f32.gmra.mxu0 %v483
            %v601 = vpop.f32.mrf.mxu0
            %v602 = vadd.f32 0.0, %v601
            %v603 = vpop.f32.mrf.mxu0
            %604 = vmatprep.mubr.f32.mxu0 0.0
            %605 = vmatmul.mubr.f32.gmra.mxu0 %v484
            %v606 = vpop.f32.mrf.mxu0
            %v607 = vadd.f32 0.0, %v606
            %v608 = vpop.f32.mrf.mxu0
            %609 = vmatprep.mubr.f32.mxu0 0.0
            %610 = vmatmul.mubr.f32.gmra.mxu0 %v485
            %v611 = vpop.f32.mrf.mxu0
            %v612 = vadd.f32 0.0, %v611
            %v613 = vpop.f32.mrf.mxu0
            %614 = vmatprep.mubr.f32.mxu0 0.0
            %615 = vmatmul.mubr.f32.gmra.mxu0 %v486
            %v616 = vpop.f32.mrf.mxu0
            %v617 = vadd.f32 0.0, %v616
            %v618 = vpop.f32.mrf.mxu0
            %619 = vmatprep.mubr.f32.mxu0 0.0
            %620 = vmatmul.mubr.f32.gmra.mxu0 %v487
            %v621 = vpop.f32.mrf.mxu0
            %v622 = vadd.f32 0.0, %v621
            %v623 = vpop.f32.mrf.mxu0
            %624 = vmatprep.mubr.f32.mxu0 0.0
            %625 = vmatmul.mubr.f32.gmra.mxu0 %v488
            %v626 = vpop.f32.mrf.mxu0
            %v627 = vadd.f32 0.0, %v626
            %v628 = vpop.f32.mrf.mxu0
            %629 = vmatprep.mubr.f32.mxu0 0.0
            %630 = vmatmul.mubr.f32.gmra.mxu0 %v489
            %v631 = vpop.f32.mrf.mxu0
            %v632 = vadd.f32 0.0, %v631
            %v633 = vpop.f32.mrf.mxu0
            %634 = vmatprep.mubr.f32.mxu0 0.0
            %635 = vmatmul.mubr.f32.gmra.mxu0 %v490
            %v636 = vpop.f32.mrf.mxu0
            %v637 = vadd.f32 0.0, %v636
            %v638 = vpop.f32.mrf.mxu0
            %639 = vmatprep.mubr.f32.mxu0 0.0
            %640 = vmatmul.mubr.f32.gmra.mxu0 %v491
            %v641 = vpop.f32.mrf.mxu0
            %v642 = vadd.f32 0.0, %v641
            %v643 = vpop.f32.mrf.mxu0
            %644 = vmatprep.mubr.f32.mxu0 0.0
            %645 = vmatmul.mubr.f32.gmra.mxu0 %v492
            %v646 = vpop.f32.mrf.mxu0
            %v647 = vadd.f32 0.0, %v646
            %v648 = vpop.f32.mrf.mxu0
            %649 = vmatprep.mubr.f32.mxu0 0.0
            %650 = vmatmul.mubr.f32.gmra.mxu0 %v493
            %v651 = vpop.f32.mrf.mxu0
            %v652 = vadd.f32 0.0, %v651
            %v653 = vpop.f32.mrf.mxu0
            %654 = vdwg.mxu0
            %v655 = vld [vmem:[%s2] sm:$0xff]
            %v656 = vld [vmem:[%s2 + $0x8] sm:$0xff]
            %v657 = vld [vmem:[%s2 + $0x10] sm:$0xff]
            %v658 = vld [vmem:[%s2 + $0x18] sm:$0xff]
            %v659 = vld [vmem:[%s2 + $0x20] sm:$0xff]
            %v660 = vld [vmem:[%s2 + $0x28] sm:$0xff]
            %v661 = vld [vmem:[%s2 + $0x30] sm:$0xff]
            %v662 = vld [vmem:[%s2 + $0x38] sm:$0xff]
            %v663 = vld [vmem:[%s2 + $0x40] sm:$0xff]
            %v664 = vld [vmem:[%s2 + $0x48] sm:$0xff]
            %v665 = vld [vmem:[%s2 + $0x50] sm:$0xff]
            %v666 = vld [vmem:[%s2 + $0x58] sm:$0xff]
            %v667 = vld [vmem:[%s2 + $0x60] sm:$0xff]
            %v668 = vld [vmem:[%s2 + $0x68] sm:$0xff]
            %v669 = vld [vmem:[%s2 + $0x70] sm:$0xff]
            %v670 = vld [vmem:[%s2 + $0x78] sm:$0xff]
            %672 = vset.pattern.permute.xlu0 0
            %673 = vperm.xlu0 %672, %v655
            %v674 = vpop.permute.xlu0 %673
            %677 = vset.pattern.permute.xlu0 0
            %678 = vperm.xlu0 %677, %v656
            %v679 = vpop.permute.xlu0 %678
            %682 = vset.pattern.permute.xlu0 0
            %683 = vperm.xlu0 %682, %v657
            %v684 = vpop.permute.xlu0 %683
            %687 = vset.pattern.permute.xlu0 0
            %688 = vperm.xlu0 %687, %v658
            %v689 = vpop.permute.xlu0 %688
            %692 = vset.pattern.permute.xlu0 0
            %693 = vperm.xlu0 %692, %v659
            %v694 = vpop.permute.xlu0 %693
            %697 = vset.pattern.permute.xlu0 0
            %698 = vperm.xlu0 %697, %v660
            %v699 = vpop.permute.xlu0 %698
            %702 = vset.pattern.permute.xlu0 0
            %703 = vperm.xlu0 %702, %v661
            %v704 = vpop.permute.xlu0 %703
            %707 = vset.pattern.permute.xlu0 0
            %708 = vperm.xlu0 %707, %v662
            %v709 = vpop.permute.xlu0 %708
            %712 = vset.pattern.permute.xlu0 0
            %713 = vperm.xlu0 %712, %v663
            %v714 = vpop.permute.xlu0 %713
            %717 = vset.pattern.permute.xlu0 0
            %718 = vperm.xlu0 %717, %v664
            %v719 = vpop.permute.xlu0 %718
            %722 = vset.pattern.permute.xlu0 0
            %723 = vperm.xlu0 %722, %v665
            %v724 = vpop.permute.xlu0 %723
            %727 = vset.pattern.permute.xlu0 0
            %728 = vperm.xlu0 %727, %v666
            %v729 = vpop.permute.xlu0 %728
            %732 = vset.pattern.permute.xlu0 0
            %733 = vperm.xlu0 %732, %v667
            %v734 = vpop.permute.xlu0 %733
            %737 = vset.pattern.permute.xlu0 0
            %738 = vperm.xlu0 %737, %v668
            %v739 = vpop.permute.xlu0 %738
            %742 = vset.pattern.permute.xlu0 0
            %743 = vperm.xlu0 %742, %v669
            %v744 = vpop.permute.xlu0 %743
            %747 = vset.pattern.permute.xlu0 0
            %748 = vperm.xlu0 %747, %v670
            %v749 = vpop.permute.xlu0 %748
            %v751 = vmul.f32 %v674, %v577
            %v752 = vmul.f32 %v679, %v582
            %v753 = vmul.f32 %v684, %v587
            %v754 = vmul.f32 %v689, %v592
            %v755 = vmul.f32 %v694, %v597
            %v756 = vmul.f32 %v699, %v602
            %v757 = vmul.f32 %v704, %v607
            %v758 = vmul.f32 %v709, %v612
            %v759 = vmul.f32 %v714, %v617
            %v760 = vmul.f32 %v719, %v622
            %v761 = vmul.f32 %v724, %v627
            %v762 = vmul.f32 %v729, %v632
            %v763 = vmul.f32 %v734, %v637
            %v764 = vmul.f32 %v739, %v642
            %v765 = vmul.f32 %v744, %v647
            %v766 = vmul.f32 %v749, %v652
            %767 = vst [vmem:[#allocation2] sm:$0xff] %v751
            %768 = vst [vmem:[#allocation2 + $0x8] sm:$0xff] %v752
            %769 = vst [vmem:[#allocation2 + $0x10] sm:$0xff] %v753
            %770 = vst [vmem:[#allocation2 + $0x18] sm:$0xff] %v754
            %771 = vst [vmem:[#allocation2 + $0x20] sm:$0xff] %v755
            %772 = vst [vmem:[#allocation2 + $0x28] sm:$0xff] %v756
            %773 = vst [vmem:[#allocation2 + $0x30] sm:$0xff] %v757
            %774 = vst [vmem:[#allocation2 + $0x38] sm:$0xff] %v758
            %775 = vst [vmem:[#allocation2 + $0x40] sm:$0xff] %v759
            %776 = vst [vmem:[#allocation2 + $0x48] sm:$0xff] %v760
            %777 = vst [vmem:[#allocation2 + $0x50] sm:$0xff] %v761
            %778 = vst [vmem:[#allocation2 + $0x58] sm:$0xff] %v762
            %779 = vst [vmem:[#allocation2 + $0x60] sm:$0xff] %v763
            %780 = vst [vmem:[#allocation2 + $0x68] sm:$0xff] %v764
            %781 = vst [vmem:[#allocation2 + $0x70] sm:$0xff] %v765
            %782 = vst [vmem:[#allocation2 + $0x78] sm:$0xff] %v766
          $region92: #{tpu_custom_call.1} parent=87 // pred_fallthru
            _
          %v783 = vld [vmem:[#allocation9] sm:$0xf]
          %v784 = vld [vmem:[#allocation9 + $0x4] sm:$0xf]
          %v785 = vld [vmem:[#allocation9 + $0x8] sm:$0xf]
          %v786 = vld [vmem:[#allocation9 + $0xc] sm:$0xf]
          %v787 = vld [vmem:[#allocation9 + $0x10] sm:$0xf]
          %v788 = vld [vmem:[#allocation9 + $0x14] sm:$0xf]
          %v789 = vld [vmem:[#allocation9 + $0x18] sm:$0xf]
          %v790 = vld [vmem:[#allocation9 + $0x1c] sm:$0xf]
          %v791 = vld [vmem:[#allocation9 + $0x20] sm:$0xf]
          %v792 = vld [vmem:[#allocation9 + $0x24] sm:$0xf]
          %v793 = vld [vmem:[#allocation9 + $0x28] sm:$0xf]
          %v794 = vld [vmem:[#allocation9 + $0x2c] sm:$0xf]
          %v795 = vld [vmem:[#allocation9 + $0x30] sm:$0xf]
          %v796 = vld [vmem:[#allocation9 + $0x34] sm:$0xf]
          %v797 = vld [vmem:[#allocation9 + $0x38] sm:$0xf]
          %v798 = vld [vmem:[#allocation9 + $0x3c] sm:$0xf]
          %v799 = vld [vmem:[#allocation2] sm:$0xff]
          %v800 = vld [vmem:[#allocation2 + $0x8] sm:$0xff]
          %v801 = vld [vmem:[#allocation2 + $0x10] sm:$0xff]
          %v802 = vld [vmem:[#allocation2 + $0x18] sm:$0xff]
          %v803 = vld [vmem:[#allocation2 + $0x20] sm:$0xff]
          %v804 = vld [vmem:[#allocation2 + $0x28] sm:$0xff]
          %v805 = vld [vmem:[#allocation2 + $0x30] sm:$0xff]
          %v806 = vld [vmem:[#allocation2 + $0x38] sm:$0xff]
          %v807 = vld [vmem:[#allocation2 + $0x40] sm:$0xff]
          %v808 = vld [vmem:[#allocation2 + $0x48] sm:$0xff]
          %v809 = vld [vmem:[#allocation2 + $0x50] sm:$0xff]
          %v810 = vld [vmem:[#allocation2 + $0x58] sm:$0xff]
          %v811 = vld [vmem:[#allocation2 + $0x60] sm:$0xff]
          %v812 = vld [vmem:[#allocation2 + $0x68] sm:$0xff]
          %v813 = vld [vmem:[#allocation2 + $0x70] sm:$0xff]
          %v814 = vld [vmem:[#allocation2 + $0x78] sm:$0xff]
          %v815 = vpack.c.bf16 %v800, %v799
          %v816 = vpack.c.bf16 %v802, %v801
          %v817 = vpack.c.bf16 %v804, %v803
          %v818 = vpack.c.bf16 %v806, %v805
          %v819 = vpack.c.bf16 %v808, %v807
          %v820 = vpack.c.bf16 %v810, %v809
          %v821 = vpack.c.bf16 %v812, %v811
          %v822 = vpack.c.bf16 %v814, %v813
          %s823 = scalar_lea.vmem [#allocation2], %s469
          %v824 = vld [vmem:[%s823] sm:$0xff]
          %v825 = vld [vmem:[%s823 + $0x8] sm:$0xff]
          %v826 = vld [vmem:[%s823 + $0x10] sm:$0xff]
          %v827 = vld [vmem:[%s823 + $0x18] sm:$0xff]
          %v828 = vld [vmem:[%s823 + $0x20] sm:$0xff]
          %v829 = vld [vmem:[%s823 + $0x28] sm:$0xff]
          %v830 = vld [vmem:[%s823 + $0x30] sm:$0xff]
          %v831 = vld [vmem:[%s823 + $0x38] sm:$0xff]
          %v832 = vld [vmem:[%s823 + $0x40] sm:$0xff]
          %v833 = vld [vmem:[%s823 + $0x48] sm:$0xff]
          %v834 = vld [vmem:[%s823 + $0x50] sm:$0xff]
          %v835 = vld [vmem:[%s823 + $0x58] sm:$0xff]
          %v836 = vld [vmem:[%s823 + $0x60] sm:$0xff]
          %v837 = vld [vmem:[%s823 + $0x68] sm:$0xff]
          %v838 = vld [vmem:[%s823 + $0x70] sm:$0xff]
          %v839 = vld [vmem:[%s823 + $0x78] sm:$0xff]
          %v856 = vunpack.c.l.b16 %v783
          %v857 = vunpack.c.l.b16 %v784
          %v858 = vunpack.c.l.b16 %v785
          %v859 = vunpack.c.l.b16 %v786
          %v860 = vunpack.c.l.b16 %v787
          %v861 = vunpack.c.l.b16 %v788
          %v862 = vunpack.c.l.b16 %v789
          %v863 = vunpack.c.l.b16 %v790
          %v864 = vunpack.c.l.b16 %v791
          %v865 = vunpack.c.l.b16 %v792
          %v866 = vunpack.c.l.b16 %v793
          %v867 = vunpack.c.l.b16 %v794
          %v868 = vunpack.c.l.b16 %v795
          %v869 = vunpack.c.l.b16 %v796
          %v870 = vunpack.c.l.b16 %v797
          %v871 = vunpack.c.l.b16 %v798
          %v872 = vpack.c.b16 %v857, %v856
          %v873 = vpack.c.b16 %v859, %v858
          %v874 = vpack.c.b16 %v861, %v860
          %v875 = vpack.c.b16 %v863, %v862
          %v876 = vpack.c.b16 %v865, %v864
          %v877 = vpack.c.b16 %v867, %v866
          %v878 = vpack.c.b16 %v869, %v868
          %v879 = vpack.c.b16 %v871, %v870
          %888 = vmatprep.subr.bf16.mxu0 0
          %889 = vmatpush1.bf16.msra.mxu0 %v822
          %890 = vmatprep.subr.bf16.mxu0 0
          %891 = vmatpush1.bf16.msra.mxu0 %v821
          %892 = vmatprep.subr.bf16.mxu0 0
          %893 = vmatpush1.bf16.msra.mxu0 %v820
          %894 = vmatprep.subr.bf16.mxu0 0
          %895 = vmatpush1.bf16.msra.mxu0 %v819
          %896 = vmatprep.subr.bf16.mxu0 0
          %897 = vmatpush1.bf16.msra.mxu0 %v818
          %898 = vmatprep.subr.bf16.mxu0 0
          %899 = vmatpush1.bf16.msra.mxu0 %v817
          %900 = vmatprep.subr.bf16.mxu0 0
          %901 = vmatpush1.bf16.msra.mxu0 %v816
          %902 = vmatprep.subr.bf16.mxu0 0
          %903 = vmatpush1.bf16.msra.mxu0 %v815
          %904 = vmatprep.subr.bf16.mxu0 0
          %905 = vmatpush2.bf16.msra.mxu0 0
          %906 = vmatprep.subr.bf16.mxu0 0
          %907 = vmatpush2.bf16.msra.mxu0 0
          %908 = vmatprep.subr.bf16.mxu0 0
          %909 = vmatpush2.bf16.msra.mxu0 0
          %910 = vmatprep.subr.bf16.mxu0 0
          %911 = vmatpush2.bf16.msra.mxu0 0
          %912 = vmatprep.subr.bf16.mxu0 0
          %913 = vmatpush2.bf16.msra.mxu0 0
          %914 = vmatprep.subr.bf16.mxu0 0
          %915 = vmatpush2.bf16.msra.mxu0 0
          %916 = vmatprep.subr.bf16.mxu0 0
          %917 = vmatpush2.bf16.msra.mxu0 0
          %918 = vmatprep.subr.bf16.mxu0 0
          %919 = vmatpush2.bf16.msra.mxu0 0
          %920 = vmatprep.mubr.bf16.mxu0 0
          %921 = vmatmul.mubr.bf16.gmra.mxu0 %v872
          %v922 = vpop.f32.mrf.mxu0
          %v923 = vadd.f32 %v824, %v922
          %v924 = vpop.f32.mrf.mxu0
          %v925 = vpop.f32.mrf.mxu0
          %v926 = vadd.f32 %v825, %v925
          %v927 = vpop.f32.mrf.mxu0
          %928 = vmatprep.mubr.bf16.mxu0 0
          %929 = vmatmul.mubr.bf16.gmra.mxu0 %v873
          %v930 = vpop.f32.mrf.mxu0
          %v931 = vadd.f32 %v826, %v930
          %v932 = vpop.f32.mrf.mxu0
          %v933 = vpop.f32.mrf.mxu0
          %v934 = vadd.f32 %v827, %v933
          %v935 = vpop.f32.mrf.mxu0
          %936 = vmatprep.mubr.bf16.mxu0 0
          %937 = vmatmul.mubr.bf16.gmra.mxu0 %v874
          %v938 = vpop.f32.mrf.mxu0
          %v939 = vadd.f32 %v828, %v938
          %v940 = vpop.f32.mrf.mxu0
          %v941 = vpop.f32.mrf.mxu0
          %v942 = vadd.f32 %v829, %v941
          %v943 = vpop.f32.mrf.mxu0
          %944 = vmatprep.mubr.bf16.mxu0 0
          %945 = vmatmul.mubr.bf16.gmra.mxu0 %v875
          %v946 = vpop.f32.mrf.mxu0
          %v947 = vadd.f32 %v830, %v946
          %v948 = vpop.f32.mrf.mxu0
          %v949 = vpop.f32.mrf.mxu0
          %v950 = vadd.f32 %v831, %v949
          %v951 = vpop.f32.mrf.mxu0
          %952 = vmatprep.mubr.bf16.mxu0 0
          %953 = vmatmul.mubr.bf16.gmra.mxu0 %v876
          %v954 = vpop.f32.mrf.mxu0
          %v955 = vadd.f32 %v832, %v954
          %v956 = vpop.f32.mrf.mxu0
          %v957 = vpop.f32.mrf.mxu0
          %v958 = vadd.f32 %v833, %v957
          %v959 = vpop.f32.mrf.mxu0
          %960 = vmatprep.mubr.bf16.mxu0 0
          %961 = vmatmul.mubr.bf16.gmra.mxu0 %v877
          %v962 = vpop.f32.mrf.mxu0
          %v963 = vadd.f32 %v834, %v962
          %v964 = vpop.f32.mrf.mxu0
          %v965 = vpop.f32.mrf.mxu0
          %v966 = vadd.f32 %v835, %v965
          %v967 = vpop.f32.mrf.mxu0
          %968 = vmatprep.mubr.bf16.mxu0 0
          %969 = vmatmul.mubr.bf16.gmra.mxu0 %v878
          %v970 = vpop.f32.mrf.mxu0
          %v971 = vadd.f32 %v836, %v970
          %v972 = vpop.f32.mrf.mxu0
          %v973 = vpop.f32.mrf.mxu0
          %v974 = vadd.f32 %v837, %v973
          %v975 = vpop.f32.mrf.mxu0
          %976 = vmatprep.mubr.bf16.mxu0 0
          %977 = vmatmul.mubr.bf16.gmra.mxu0 %v879
          %v978 = vpop.f32.mrf.mxu0
          %v979 = vadd.f32 %v838, %v978
          %v980 = vpop.f32.mrf.mxu0
          %v981 = vpop.f32.mrf.mxu0
          %v982 = vadd.f32 %v839, %v981
          %v983 = vpop.f32.mrf.mxu0
          %984 = vdwg.mxu0
          %s985 = scalar_lea.vmem %s2, %s469
          %v986 = vld [vmem:[%s985] sm:$0xff]
          %v987 = vld [vmem:[%s985 + $0x8] sm:$0xff]
          %v988 = vld [vmem:[%s985 + $0x10] sm:$0xff]
          %v989 = vld [vmem:[%s985 + $0x18] sm:$0xff]
          %v990 = vld [vmem:[%s985 + $0x20] sm:$0xff]
          %v991 = vld [vmem:[%s985 + $0x28] sm:$0xff]
          %v992 = vld [vmem:[%s985 + $0x30] sm:$0xff]
          %v993 = vld [vmem:[%s985 + $0x38] sm:$0xff]
          %v994 = vld [vmem:[%s985 + $0x40] sm:$0xff]
          %v995 = vld [vmem:[%s985 + $0x48] sm:$0xff]
          %v996 = vld [vmem:[%s985 + $0x50] sm:$0xff]
          %v997 = vld [vmem:[%s985 + $0x58] sm:$0xff]
          %v998 = vld [vmem:[%s985 + $0x60] sm:$0xff]
          %v999 = vld [vmem:[%s985 + $0x68] sm:$0xff]
          %v1000 = vld [vmem:[%s985 + $0x70] sm:$0xff]
          %v1001 = vld [vmem:[%s985 + $0x78] sm:$0xff]
          %1003 = vset.pattern.permute.xlu0 0
          %1004 = vperm.xlu0 %1003, %v986
          %v1005 = vpop.permute.xlu0 %1004
          %1008 = vset.pattern.permute.xlu0 0
          %1009 = vperm.xlu0 %1008, %v987
          %v1010 = vpop.permute.xlu0 %1009
          %1013 = vset.pattern.permute.xlu0 0
          %1014 = vperm.xlu0 %1013, %v988
          %v1015 = vpop.permute.xlu0 %1014
          %1018 = vset.pattern.permute.xlu0 0
          %1019 = vperm.xlu0 %1018, %v989
          %v1020 = vpop.permute.xlu0 %1019
          %1023 = vset.pattern.permute.xlu0 0
          %1024 = vperm.xlu0 %1023, %v990
          %v1025 = vpop.permute.xlu0 %1024
          %1028 = vset.pattern.permute.xlu0 0
          %1029 = vperm.xlu0 %1028, %v991
          %v1030 = vpop.permute.xlu0 %1029
          %1033 = vset.pattern.permute.xlu0 0
          %1034 = vperm.xlu0 %1033, %v992
          %v1035 = vpop.permute.xlu0 %1034
          %1038 = vset.pattern.permute.xlu0 0
          %1039 = vperm.xlu0 %1038, %v993
          %v1040 = vpop.permute.xlu0 %1039
          %1043 = vset.pattern.permute.xlu0 0
          %1044 = vperm.xlu0 %1043, %v994
          %v1045 = vpop.permute.xlu0 %1044
          %1048 = vset.pattern.permute.xlu0 0
          %1049 = vperm.xlu0 %1048, %v995
          %v1050 = vpop.permute.xlu0 %1049
          %1053 = vset.pattern.permute.xlu0 0
          %1054 = vperm.xlu0 %1053, %v996
          %v1055 = vpop.permute.xlu0 %1054
          %1058 = vset.pattern.permute.xlu0 0
          %1059 = vperm.xlu0 %1058, %v997
          %v1060 = vpop.permute.xlu0 %1059
          %1063 = vset.pattern.permute.xlu0 0
          %1064 = vperm.xlu0 %1063, %v998
          %v1065 = vpop.permute.xlu0 %1064
          %1068 = vset.pattern.permute.xlu0 0
          %1069 = vperm.xlu0 %1068, %v999
          %v1070 = vpop.permute.xlu0 %1069
          %1073 = vset.pattern.permute.xlu0 0
          %1074 = vperm.xlu0 %1073, %v1000
          %v1075 = vpop.permute.xlu0 %1074
          %1078 = vset.pattern.permute.xlu0 0
          %1079 = vperm.xlu0 %1078, %v1001
          %v1080 = vpop.permute.xlu0 %1079
          %v1082 = vmul.f32 %v1005, %v923
          %v1083 = vmul.f32 %v1010, %v926
          %v1084 = vmul.f32 %v1015, %v931
          %v1085 = vmul.f32 %v1020, %v934
          %v1086 = vmul.f32 %v1025, %v939
          %v1087 = vmul.f32 %v1030, %v942
          %v1088 = vmul.f32 %v1035, %v947
          %v1089 = vmul.f32 %v1040, %v950
          %v1090 = vmul.f32 %v1045, %v955
          %v1091 = vmul.f32 %v1050, %v958
          %v1092 = vmul.f32 %v1055, %v963
          %v1093 = vmul.f32 %v1060, %v966
          %v1094 = vmul.f32 %v1065, %v971
          %v1095 = vmul.f32 %v1070, %v974
          %v1096 = vmul.f32 %v1075, %v979
          %v1097 = vmul.f32 %v1080, %v982
          %v1098 = vld [vmem:[%s4] sm:$0x1]
          %v1100 = vlaneseq
          %v1101 = vshrl.u32 %v1100, 7
          %v1102 = vsub.s32 0, %v1101
          %v1103 = vrot.slane %v1098, %v1102
          %v1105 = vadd.f32 %v1082, %v1103
          %v1106 = vadd.f32 %v1083, %v1103
          %v1107 = vadd.f32 %v1084, %v1103
          %v1108 = vadd.f32 %v1085, %v1103
          %v1109 = vadd.f32 %v1086, %v1103
          %v1110 = vadd.f32 %v1087, %v1103
          %v1111 = vadd.f32 %v1088, %v1103
          %v1112 = vadd.f32 %v1089, %v1103
          %v1113 = vadd.f32 %v1090, %v1103
          %v1114 = vadd.f32 %v1091, %v1103
          %v1115 = vadd.f32 %v1092, %v1103
          %v1116 = vadd.f32 %v1093, %v1103
          %v1117 = vadd.f32 %v1094, %v1103
          %v1118 = vadd.f32 %v1095, %v1103
          %v1119 = vadd.f32 %v1096, %v1103
          %v1120 = vadd.f32 %v1097, %v1103
          %v1121 = vmax.f32 %v1105, 0.0
          %v1122 = vmax.f32 %v1106, 0.0
          %v1123 = vmax.f32 %v1107, 0.0
          %v1124 = vmax.f32 %v1108, 0.0
          %v1125 = vmax.f32 %v1109, 0.0
          %v1126 = vmax.f32 %v1110, 0.0
          %v1127 = vmax.f32 %v1111, 0.0
          %v1128 = vmax.f32 %v1112, 0.0
          %v1129 = vmax.f32 %v1113, 0.0
          %v1130 = vmax.f32 %v1114, 0.0
          %v1131 = vmax.f32 %v1115, 0.0
          %v1132 = vmax.f32 %v1116, 0.0
          %v1133 = vmax.f32 %v1117, 0.0
          %v1134 = vmax.f32 %v1118, 0.0
          %v1135 = vmax.f32 %v1119, 0.0
          %v1136 = vmax.f32 %v1120, 0.0
          %s1137 = scalar_lea.vmem [#allocation3], %s469
          %1138 = vst [vmem:[%s1137] sm:$0xff] %v1121
          %1139 = vst [vmem:[%s1137 + $0x8] sm:$0xff] %v1122
          %1140 = vst [vmem:[%s1137 + $0x10] sm:$0xff] %v1123
          %1141 = vst [vmem:[%s1137 + $0x18] sm:$0xff] %v1124
          %1142 = vst [vmem:[%s1137 + $0x20] sm:$0xff] %v1125
          %1143 = vst [vmem:[%s1137 + $0x28] sm:$0xff] %v1126
          %1144 = vst [vmem:[%s1137 + $0x30] sm:$0xff] %v1127
          %1145 = vst [vmem:[%s1137 + $0x38] sm:$0xff] %v1128
          %1146 = vst [vmem:[%s1137 + $0x40] sm:$0xff] %v1129
          %1147 = vst [vmem:[%s1137 + $0x48] sm:$0xff] %v1130
          %1148 = vst [vmem:[%s1137 + $0x50] sm:$0xff] %v1131
          %1149 = vst [vmem:[%s1137 + $0x58] sm:$0xff] %v1132
          %1150 = vst [vmem:[%s1137 + $0x60] sm:$0xff] %v1133
          %1151 = vst [vmem:[%s1137 + $0x68] sm:$0xff] %v1134
          %1152 = vst [vmem:[%s1137 + $0x70] sm:$0xff] %v1135
          %1153 = vst [vmem:[%s1137 + $0x78] sm:$0xff] %v1136
        $region88: #{tpu_custom_call.1} parent=63 // pred_fallthru
          _
        %p1154 = scmp.eq.s32.totalorder %s32, 1
        // Predicated region
        $region93: #{tpu_custom_call.1} parent=63 // pred_check
          %p1155 = pneg %p1154
        $region94: #{tpu_custom_call.1} parent=63 // pred_check_branch
          %1157 = sbr.rel (%p1155) target = $region96
        $region95: #{tpu_custom_call.1} parent=63 // pred_region
          %p1158 = scmp.eq.s32.totalorder %s33, 0
          // Predicated region
          $region97: #{tpu_custom_call.1} parent=95 // pred_check
            %p1159 = pneg %p1158
          $region98: #{tpu_custom_call.1} parent=95 // pred_check_branch
            %1161 = sbr.rel (%p1159) target = $region100
          $region99: #{tpu_custom_call.1} parent=95 // pred_region
            %v1162 = vld [vmem:[#allocation3] sm:$0xff]
            %v1163 = vld [vmem:[#allocation3 + $0x8] sm:$0xff]
            %v1164 = vld [vmem:[#allocation3 + $0x10] sm:$0xff]
            %v1165 = vld [vmem:[#allocation3 + $0x18] sm:$0xff]
            %v1166 = vld [vmem:[#allocation3 + $0x20] sm:$0xff]
            %v1167 = vld [vmem:[#allocation3 + $0x28] sm:$0xff]
            %v1168 = vld [vmem:[#allocation3 + $0x30] sm:$0xff]
            %v1169 = vld [vmem:[#allocation3 + $0x38] sm:$0xff]
            %v1170 = vld [vmem:[#allocation3 + $0x40] sm:$0xff]
            %v1171 = vld [vmem:[#allocation3 + $0x48] sm:$0xff]
            %v1172 = vld [vmem:[#allocation3 + $0x50] sm:$0xff]
            %v1173 = vld [vmem:[#allocation3 + $0x58] sm:$0xff]
            %v1174 = vld [vmem:[#allocation3 + $0x60] sm:$0xff]
            %v1175 = vld [vmem:[#allocation3 + $0x68] sm:$0xff]
            %v1176 = vld [vmem:[#allocation3 + $0x70] sm:$0xff]
            %v1177 = vld [vmem:[#allocation3 + $0x78] sm:$0xff]
            %v1178 = vld [vmem:[#allocation14] sm:$0xff]
            %v1179 = vld [vmem:[#allocation14 + $0x8] sm:$0xff]
            %v1180 = vld [vmem:[#allocation14 + $0x10] sm:$0xff]
            %v1181 = vld [vmem:[#allocation14 + $0x18] sm:$0xff]
            %v1182 = vld [vmem:[#allocation14 + $0x20] sm:$0xff]
            %v1183 = vld [vmem:[#allocation14 + $0x28] sm:$0xff]
            %v1184 = vld [vmem:[#allocation14 + $0x30] sm:$0xff]
            %v1185 = vld [vmem:[#allocation14 + $0x38] sm:$0xff]
            %v1186 = vld [vmem:[#allocation14 + $0x40] sm:$0xff]
            %v1187 = vld [vmem:[#allocation14 + $0x48] sm:$0xff]
            %v1188 = vld [vmem:[#allocation14 + $0x50] sm:$0xff]
            %v1189 = vld [vmem:[#allocation14 + $0x58] sm:$0xff]
            %v1190 = vld [vmem:[#allocation14 + $0x60] sm:$0xff]
            %v1191 = vld [vmem:[#allocation14 + $0x68] sm:$0xff]
            %v1192 = vld [vmem:[#allocation14 + $0x70] sm:$0xff]
            %v1193 = vld [vmem:[#allocation14 + $0x78] sm:$0xff]
            %1194 = vmatprep.subr.mxu0 0.0
            %1195 = vmatpush1.msra.mxu0 %v1193
            %1196 = vmatprep.subr.mxu0 0.0
            %1197 = vmatpush1.msra.mxu0 %v1192
            %1198 = vmatprep.subr.mxu0 0.0
            %1199 = vmatpush1.msra.mxu0 %v1191
            %1200 = vmatprep.subr.mxu0 0.0
            %1201 = vmatpush1.msra.mxu0 %v1190
            %1202 = vmatprep.subr.mxu0 0.0
            %1203 = vmatpush1.msra.mxu0 %v1189
            %1204 = vmatprep.subr.mxu0 0.0
            %1205 = vmatpush1.msra.mxu0 %v1188
            %1206 = vmatprep.subr.mxu0 0.0
            %1207 = vmatpush1.msra.mxu0 %v1187
            %1208 = vmatprep.subr.mxu0 0.0
            %1209 = vmatpush1.msra.mxu0 %v1186
            %1210 = vmatprep.subr.mxu0 0.0
            %1211 = vmatpush1.msra.mxu0 %v1185
            %1212 = vmatprep.subr.mxu0 0.0
            %1213 = vmatpush1.msra.mxu0 %v1184
            %1214 = vmatprep.subr.mxu0 0.0
            %1215 = vmatpush1.msra.mxu0 %v1183
            %1216 = vmatprep.subr.mxu0 0.0
            %1217 = vmatpush1.msra.mxu0 %v1182
            %1218 = vmatprep.subr.mxu0 0.0
            %1219 = vmatpush1.msra.mxu0 %v1181
            %1220 = vmatprep.subr.mxu0 0.0
            %1221 = vmatpush1.msra.mxu0 %v1180
            %1222 = vmatprep.subr.mxu0 0.0
            %1223 = vmatpush1.msra.mxu0 %v1179
            %1224 = vmatprep.subr.mxu0 0.0
            %1225 = vmatpush1.msra.mxu0 %v1178
            %1226 = vmatprep.subr.mxu0 0.0
            %1227 = vmatpush2.msra.mxu0 0.0
            %1228 = vmatprep.subr.mxu0 0.0
            %1229 = vmatpush2.msra.mxu0 0.0
            %1230 = vmatprep.subr.mxu0 0.0
            %1231 = vmatpush2.msra.mxu0 0.0
            %1232 = vmatprep.subr.mxu0 0.0
            %1233 = vmatpush2.msra.mxu0 0.0
            %1234 = vmatprep.subr.mxu0 0.0
            %1235 = vmatpush2.msra.mxu0 0.0
            %1236 = vmatprep.subr.mxu0 0.0
            %1237 = vmatpush2.msra.mxu0 0.0
            %1238 = vmatprep.subr.mxu0 0.0
            %1239 = vmatpush2.msra.mxu0 0.0
            %1240 = vmatprep.subr.mxu0 0.0
            %1241 = vmatpush2.msra.mxu0 0.0
            %1242 = vmatprep.subr.mxu0 0.0
            %1243 = vmatpush2.msra.mxu0 0.0
            %1244 = vmatprep.subr.mxu0 0.0
            %1245 = vmatpush2.msra.mxu0 0.0
            %1246 = vmatprep.subr.mxu0 0.0
            %1247 = vmatpush2.msra.mxu0 0.0
            %1248 = vmatprep.subr.mxu0 0.0
            %1249 = vmatpush2.msra.mxu0 0.0
            %1250 = vmatprep.subr.mxu0 0.0
            %1251 = vmatpush2.msra.mxu0 0.0
            %1252 = vmatprep.subr.mxu0 0.0
            %1253 = vmatpush2.msra.mxu0 0.0
            %1254 = vmatprep.subr.mxu0 0.0
            %1255 = vmatpush2.msra.mxu0 0.0
            %1256 = vmatprep.subr.mxu0 0.0
            %1257 = vmatpush2.msra.mxu0 0.0
            %1258 = vmatprep.mubr.f32.mxu0 0.0
            %1259 = vmatmul.mubr.f32.gmra.mxu0 %v1162
            %v1260 = vpop.f32.mrf.mxu0
            %v1261 = vadd.f32 0.0, %v1260
            %v1262 = vpop.f32.mrf.mxu0
            %1263 = vmatprep.mubr.f32.mxu0 0.0
            %1264 = vmatmul.mubr.f32.gmra.mxu0 %v1163
            %v1265 = vpop.f32.mrf.mxu0
            %v1266 = vadd.f32 0.0, %v1265
            %v1267 = vpop.f32.mrf.mxu0
            %1268 = vmatprep.mubr.f32.mxu0 0.0
            %1269 = vmatmul.mubr.f32.gmra.mxu0 %v1164
            %v1270 = vpop.f32.mrf.mxu0
            %v1271 = vadd.f32 0.0, %v1270
            %v1272 = vpop.f32.mrf.mxu0
            %1273 = vmatprep.mubr.f32.mxu0 0.0
            %1274 = vmatmul.mubr.f32.gmra.mxu0 %v1165
            %v1275 = vpop.f32.mrf.mxu0
            %v1276 = vadd.f32 0.0, %v1275
            %v1277 = vpop.f32.mrf.mxu0
            %1278 = vmatprep.mubr.f32.mxu0 0.0
            %1279 = vmatmul.mubr.f32.gmra.mxu0 %v1166
            %v1280 = vpop.f32.mrf.mxu0
            %v1281 = vadd.f32 0.0, %v1280
            %v1282 = vpop.f32.mrf.mxu0
            %1283 = vmatprep.mubr.f32.mxu0 0.0
            %1284 = vmatmul.mubr.f32.gmra.mxu0 %v1167
            %v1285 = vpop.f32.mrf.mxu0
            %v1286 = vadd.f32 0.0, %v1285
            %v1287 = vpop.f32.mrf.mxu0
            %1288 = vmatprep.mubr.f32.mxu0 0.0
            %1289 = vmatmul.mubr.f32.gmra.mxu0 %v1168
            %v1290 = vpop.f32.mrf.mxu0
            %v1291 = vadd.f32 0.0, %v1290
            %v1292 = vpop.f32.mrf.mxu0
            %1293 = vmatprep.mubr.f32.mxu0 0.0
            %1294 = vmatmul.mubr.f32.gmra.mxu0 %v1169
            %v1295 = vpop.f32.mrf.mxu0
            %v1296 = vadd.f32 0.0, %v1295
            %v1297 = vpop.f32.mrf.mxu0
            %1298 = vmatprep.mubr.f32.mxu0 0.0
            %1299 = vmatmul.mubr.f32.gmra.mxu0 %v1170
            %v1300 = vpop.f32.mrf.mxu0
            %v1301 = vadd.f32 0.0, %v1300
            %v1302 = vpop.f32.mrf.mxu0
            %1303 = vmatprep.mubr.f32.mxu0 0.0
            %1304 = vmatmul.mubr.f32.gmra.mxu0 %v1171
            %v1305 = vpop.f32.mrf.mxu0
            %v1306 = vadd.f32 0.0, %v1305
            %v1307 = vpop.f32.mrf.mxu0
            %1308 = vmatprep.mubr.f32.mxu0 0.0
            %1309 = vmatmul.mubr.f32.gmra.mxu0 %v1172
            %v1310 = vpop.f32.mrf.mxu0
            %v1311 = vadd.f32 0.0, %v1310
            %v1312 = vpop.f32.mrf.mxu0
            %1313 = vmatprep.mubr.f32.mxu0 0.0
            %1314 = vmatmul.mubr.f32.gmra.mxu0 %v1173
            %v1315 = vpop.f32.mrf.mxu0
            %v1316 = vadd.f32 0.0, %v1315
            %v1317 = vpop.f32.mrf.mxu0
            %1318 = vmatprep.mubr.f32.mxu0 0.0
            %1319 = vmatmul.mubr.f32.gmra.mxu0 %v1174
            %v1320 = vpop.f32.mrf.mxu0
            %v1321 = vadd.f32 0.0, %v1320
            %v1322 = vpop.f32.mrf.mxu0
            %1323 = vmatprep.mubr.f32.mxu0 0.0
            %1324 = vmatmul.mubr.f32.gmra.mxu0 %v1175
            %v1325 = vpop.f32.mrf.mxu0
            %v1326 = vadd.f32 0.0, %v1325
            %v1327 = vpop.f32.mrf.mxu0
            %1328 = vmatprep.mubr.f32.mxu0 0.0
            %1329 = vmatmul.mubr.f32.gmra.mxu0 %v1176
            %v1330 = vpop.f32.mrf.mxu0
            %v1331 = vadd.f32 0.0, %v1330
            %v1332 = vpop.f32.mrf.mxu0
            %1333 = vmatprep.mubr.f32.mxu0 0.0
            %1334 = vmatmul.mubr.f32.gmra.mxu0 %v1177
            %v1335 = vpop.f32.mrf.mxu0
            %v1336 = vadd.f32 0.0, %v1335
            %v1337 = vpop.f32.mrf.mxu0
            %1338 = vdwg.mxu0
            %v1339 = vld [vmem:[%s2] sm:$0xff]
            %v1340 = vld [vmem:[%s2 + $0x8] sm:$0xff]
            %v1341 = vld [vmem:[%s2 + $0x10] sm:$0xff]
            %v1342 = vld [vmem:[%s2 + $0x18] sm:$0xff]
            %v1343 = vld [vmem:[%s2 + $0x20] sm:$0xff]
            %v1344 = vld [vmem:[%s2 + $0x28] sm:$0xff]
            %v1345 = vld [vmem:[%s2 + $0x30] sm:$0xff]
            %v1346 = vld [vmem:[%s2 + $0x38] sm:$0xff]
            %v1347 = vld [vmem:[%s2 + $0x40] sm:$0xff]
            %v1348 = vld [vmem:[%s2 + $0x48] sm:$0xff]
            %v1349 = vld [vmem:[%s2 + $0x50] sm:$0xff]
            %v1350 = vld [vmem:[%s2 + $0x58] sm:$0xff]
            %v1351 = vld [vmem:[%s2 + $0x60] sm:$0xff]
            %v1352 = vld [vmem:[%s2 + $0x68] sm:$0xff]
            %v1353 = vld [vmem:[%s2 + $0x70] sm:$0xff]
            %v1354 = vld [vmem:[%s2 + $0x78] sm:$0xff]
            %1356 = vset.pattern.permute.xlu0 0
            %1357 = vperm.xlu0 %1356, %v1339
            %v1358 = vpop.permute.xlu0 %1357
            %1361 = vset.pattern.permute.xlu0 0
            %1362 = vperm.xlu0 %1361, %v1340
            %v1363 = vpop.permute.xlu0 %1362
            %1366 = vset.pattern.permute.xlu0 0
            %1367 = vperm.xlu0 %1366, %v1341
            %v1368 = vpop.permute.xlu0 %1367
            %1371 = vset.pattern.permute.xlu0 0
            %1372 = vperm.xlu0 %1371, %v1342
            %v1373 = vpop.permute.xlu0 %1372
            %1376 = vset.pattern.permute.xlu0 0
            %1377 = vperm.xlu0 %1376, %v1343
            %v1378 = vpop.permute.xlu0 %1377
            %1381 = vset.pattern.permute.xlu0 0
            %1382 = vperm.xlu0 %1381, %v1344
            %v1383 = vpop.permute.xlu0 %1382
            %1386 = vset.pattern.permute.xlu0 0
            %1387 = vperm.xlu0 %1386, %v1345
            %v1388 = vpop.permute.xlu0 %1387
            %1391 = vset.pattern.permute.xlu0 0
            %1392 = vperm.xlu0 %1391, %v1346
            %v1393 = vpop.permute.xlu0 %1392
            %1396 = vset.pattern.permute.xlu0 0
            %1397 = vperm.xlu0 %1396, %v1347
            %v1398 = vpop.permute.xlu0 %1397
            %1401 = vset.pattern.permute.xlu0 0
            %1402 = vperm.xlu0 %1401, %v1348
            %v1403 = vpop.permute.xlu0 %1402
            %1406 = vset.pattern.permute.xlu0 0
            %1407 = vperm.xlu0 %1406, %v1349
            %v1408 = vpop.permute.xlu0 %1407
            %1411 = vset.pattern.permute.xlu0 0
            %1412 = vperm.xlu0 %1411, %v1350
            %v1413 = vpop.permute.xlu0 %1412
            %1416 = vset.pattern.permute.xlu0 0
            %1417 = vperm.xlu0 %1416, %v1351
            %v1418 = vpop.permute.xlu0 %1417
            %1421 = vset.pattern.permute.xlu0 0
            %1422 = vperm.xlu0 %1421, %v1352
            %v1423 = vpop.permute.xlu0 %1422
            %1426 = vset.pattern.permute.xlu0 0
            %1427 = vperm.xlu0 %1426, %v1353
            %v1428 = vpop.permute.xlu0 %1427
            %1431 = vset.pattern.permute.xlu0 0
            %1432 = vperm.xlu0 %1431, %v1354
            %v1433 = vpop.permute.xlu0 %1432
            %v1435 = vmul.f32 %v1358, %v1261
            %v1436 = vmul.f32 %v1363, %v1266
            %v1437 = vmul.f32 %v1368, %v1271
            %v1438 = vmul.f32 %v1373, %v1276
            %v1439 = vmul.f32 %v1378, %v1281
            %v1440 = vmul.f32 %v1383, %v1286
            %v1441 = vmul.f32 %v1388, %v1291
            %v1442 = vmul.f32 %v1393, %v1296
            %v1443 = vmul.f32 %v1398, %v1301
            %v1444 = vmul.f32 %v1403, %v1306
            %v1445 = vmul.f32 %v1408, %v1311
            %v1446 = vmul.f32 %v1413, %v1316
            %v1447 = vmul.f32 %v1418, %v1321
            %v1448 = vmul.f32 %v1423, %v1326
            %v1449 = vmul.f32 %v1428, %v1331
            %v1450 = vmul.f32 %v1433, %v1336
            %1451 = vst [vmem:[#allocation4] sm:$0xff] %v1435
            %1452 = vst [vmem:[#allocation4 + $0x8] sm:$0xff] %v1436
            %1453 = vst [vmem:[#allocation4 + $0x10] sm:$0xff] %v1437
            %1454 = vst [vmem:[#allocation4 + $0x18] sm:$0xff] %v1438
            %1455 = vst [vmem:[#allocation4 + $0x20] sm:$0xff] %v1439
            %1456 = vst [vmem:[#allocation4 + $0x28] sm:$0xff] %v1440
            %1457 = vst [vmem:[#allocation4 + $0x30] sm:$0xff] %v1441
            %1458 = vst [vmem:[#allocation4 + $0x38] sm:$0xff] %v1442
            %1459 = vst [vmem:[#allocation4 + $0x40] sm:$0xff] %v1443
            %1460 = vst [vmem:[#allocation4 + $0x48] sm:$0xff] %v1444
            %1461 = vst [vmem:[#allocation4 + $0x50] sm:$0xff] %v1445
            %1462 = vst [vmem:[#allocation4 + $0x58] sm:$0xff] %v1446
            %1463 = vst [vmem:[#allocation4 + $0x60] sm:$0xff] %v1447
            %1464 = vst [vmem:[#allocation4 + $0x68] sm:$0xff] %v1448
            %1465 = vst [vmem:[#allocation4 + $0x70] sm:$0xff] %v1449
            %1466 = vst [vmem:[#allocation4 + $0x78] sm:$0xff] %v1450
          $region100: #{tpu_custom_call.1} parent=95 // pred_fallthru
            _
          %v1467 = vld [vmem:[#allocation9] sm:$0xf]
          %v1468 = vld [vmem:[#allocation9 + $0x4] sm:$0xf]
          %v1469 = vld [vmem:[#allocation9 + $0x8] sm:$0xf]
          %v1470 = vld [vmem:[#allocation9 + $0xc] sm:$0xf]
          %v1471 = vld [vmem:[#allocation9 + $0x10] sm:$0xf]
          %v1472 = vld [vmem:[#allocation9 + $0x14] sm:$0xf]
          %v1473 = vld [vmem:[#allocation9 + $0x18] sm:$0xf]
          %v1474 = vld [vmem:[#allocation9 + $0x1c] sm:$0xf]
          %v1475 = vld [vmem:[#allocation9 + $0x20] sm:$0xf]
          %v1476 = vld [vmem:[#allocation9 + $0x24] sm:$0xf]
          %v1477 = vld [vmem:[#allocation9 + $0x28] sm:$0xf]
          %v1478 = vld [vmem:[#allocation9 + $0x2c] sm:$0xf]
          %v1479 = vld [vmem:[#allocation9 + $0x30] sm:$0xf]
          %v1480 = vld [vmem:[#allocation9 + $0x34] sm:$0xf]
          %v1481 = vld [vmem:[#allocation9 + $0x38] sm:$0xf]
          %v1482 = vld [vmem:[#allocation9 + $0x3c] sm:$0xf]
          %v1483 = vld [vmem:[#allocation4] sm:$0xff]
          %v1484 = vld [vmem:[#allocation4 + $0x8] sm:$0xff]
          %v1485 = vld [vmem:[#allocation4 + $0x10] sm:$0xff]
          %v1486 = vld [vmem:[#allocation4 + $0x18] sm:$0xff]
          %v1487 = vld [vmem:[#allocation4 + $0x20] sm:$0xff]
          %v1488 = vld [vmem:[#allocation4 + $0x28] sm:$0xff]
          %v1489 = vld [vmem:[#allocation4 + $0x30] sm:$0xff]
          %v1490 = vld [vmem:[#allocation4 + $0x38] sm:$0xff]
          %v1491 = vld [vmem:[#allocation4 + $0x40] sm:$0xff]
          %v1492 = vld [vmem:[#allocation4 + $0x48] sm:$0xff]
          %v1493 = vld [vmem:[#allocation4 + $0x50] sm:$0xff]
          %v1494 = vld [vmem:[#allocation4 + $0x58] sm:$0xff]
          %v1495 = vld [vmem:[#allocation4 + $0x60] sm:$0xff]
          %v1496 = vld [vmem:[#allocation4 + $0x68] sm:$0xff]
          %v1497 = vld [vmem:[#allocation4 + $0x70] sm:$0xff]
          %v1498 = vld [vmem:[#allocation4 + $0x78] sm:$0xff]
          %v1499 = vpack.c.bf16 %v1484, %v1483
          %v1500 = vpack.c.bf16 %v1486, %v1485
          %v1501 = vpack.c.bf16 %v1488, %v1487
          %v1502 = vpack.c.bf16 %v1490, %v1489
          %v1503 = vpack.c.bf16 %v1492, %v1491
          %v1504 = vpack.c.bf16 %v1494, %v1493
          %v1505 = vpack.c.bf16 %v1496, %v1495
          %v1506 = vpack.c.bf16 %v1498, %v1497
          %s1507 = scalar_lea.vmem [#allocation4], %s469
          %v1508 = vld [vmem:[%s1507] sm:$0xff]
          %v1509 = vld [vmem:[%s1507 + $0x8] sm:$0xff]
          %v1510 = vld [vmem:[%s1507 + $0x10] sm:$0xff]
          %v1511 = vld [vmem:[%s1507 + $0x18] sm:$0xff]
          %v1512 = vld [vmem:[%s1507 + $0x20] sm:$0xff]
          %v1513 = vld [vmem:[%s1507 + $0x28] sm:$0xff]
          %v1514 = vld [vmem:[%s1507 + $0x30] sm:$0xff]
          %v1515 = vld [vmem:[%s1507 + $0x38] sm:$0xff]
          %v1516 = vld [vmem:[%s1507 + $0x40] sm:$0xff]
          %v1517 = vld [vmem:[%s1507 + $0x48] sm:$0xff]
          %v1518 = vld [vmem:[%s1507 + $0x50] sm:$0xff]
          %v1519 = vld [vmem:[%s1507 + $0x58] sm:$0xff]
          %v1520 = vld [vmem:[%s1507 + $0x60] sm:$0xff]
          %v1521 = vld [vmem:[%s1507 + $0x68] sm:$0xff]
          %v1522 = vld [vmem:[%s1507 + $0x70] sm:$0xff]
          %v1523 = vld [vmem:[%s1507 + $0x78] sm:$0xff]
          %v1540 = vunpack.c.l.b16 %v1467
          %v1541 = vunpack.c.l.b16 %v1468
          %v1542 = vunpack.c.l.b16 %v1469
          %v1543 = vunpack.c.l.b16 %v1470
          %v1544 = vunpack.c.l.b16 %v1471
          %v1545 = vunpack.c.l.b16 %v1472
          %v1546 = vunpack.c.l.b16 %v1473
          %v1547 = vunpack.c.l.b16 %v1474
          %v1548 = vunpack.c.l.b16 %v1475
          %v1549 = vunpack.c.l.b16 %v1476
          %v1550 = vunpack.c.l.b16 %v1477
          %v1551 = vunpack.c.l.b16 %v1478
          %v1552 = vunpack.c.l.b16 %v1479
          %v1553 = vunpack.c.l.b16 %v1480
          %v1554 = vunpack.c.l.b16 %v1481
          %v1555 = vunpack.c.l.b16 %v1482
          %v1556 = vpack.c.b16 %v1541, %v1540
          %v1557 = vpack.c.b16 %v1543, %v1542
          %v1558 = vpack.c.b16 %v1545, %v1544
          %v1559 = vpack.c.b16 %v1547, %v1546
          %v1560 = vpack.c.b16 %v1549, %v1548
          %v1561 = vpack.c.b16 %v1551, %v1550
          %v1562 = vpack.c.b16 %v1553, %v1552
          %v1563 = vpack.c.b16 %v1555, %v1554
          %1572 = vmatprep.subr.bf16.mxu0 0
          %1573 = vmatpush1.bf16.msra.mxu0 %v1506
          %1574 = vmatprep.subr.bf16.mxu0 0
          %1575 = vmatpush1.bf16.msra.mxu0 %v1505
          %1576 = vmatprep.subr.bf16.mxu0 0
          %1577 = vmatpush1.bf16.msra.mxu0 %v1504
          %1578 = vmatprep.subr.bf16.mxu0 0
          %1579 = vmatpush1.bf16.msra.mxu0 %v1503
          %1580 = vmatprep.subr.bf16.mxu0 0
          %1581 = vmatpush1.bf16.msra.mxu0 %v1502
          %1582 = vmatprep.subr.bf16.mxu0 0
          %1583 = vmatpush1.bf16.msra.mxu0 %v1501
          %1584 = vmatprep.subr.bf16.mxu0 0
          %1585 = vmatpush1.bf16.msra.mxu0 %v1500
          %1586 = vmatprep.subr.bf16.mxu0 0
          %1587 = vmatpush1.bf16.msra.mxu0 %v1499
          %1588 = vmatprep.subr.bf16.mxu0 0
          %1589 = vmatpush2.bf16.msra.mxu0 0
          %1590 = vmatprep.subr.bf16.mxu0 0
          %1591 = vmatpush2.bf16.msra.mxu0 0
          %1592 = vmatprep.subr.bf16.mxu0 0
          %1593 = vmatpush2.bf16.msra.mxu0 0
          %1594 = vmatprep.subr.bf16.mxu0 0
          %1595 = vmatpush2.bf16.msra.mxu0 0
          %1596 = vmatprep.subr.bf16.mxu0 0
          %1597 = vmatpush2.bf16.msra.mxu0 0
          %1598 = vmatprep.subr.bf16.mxu0 0
          %1599 = vmatpush2.bf16.msra.mxu0 0
          %1600 = vmatprep.subr.bf16.mxu0 0
          %1601 = vmatpush2.bf16.msra.mxu0 0
          %1602 = vmatprep.subr.bf16.mxu0 0
          %1603 = vmatpush2.bf16.msra.mxu0 0
          %1604 = vmatprep.mubr.bf16.mxu0 0
          %1605 = vmatmul.mubr.bf16.gmra.mxu0 %v1556
          %v1606 = vpop.f32.mrf.mxu0
          %v1607 = vadd.f32 %v1508, %v1606
          %v1608 = vpop.f32.mrf.mxu0
          %v1609 = vpop.f32.mrf.mxu0
          %v1610 = vadd.f32 %v1509, %v1609
          %v1611 = vpop.f32.mrf.mxu0
          %1612 = vmatprep.mubr.bf16.mxu0 0
          %1613 = vmatmul.mubr.bf16.gmra.mxu0 %v1557
          %v1614 = vpop.f32.mrf.mxu0
          %v1615 = vadd.f32 %v1510, %v1614
          %v1616 = vpop.f32.mrf.mxu0
          %v1617 = vpop.f32.mrf.mxu0
          %v1618 = vadd.f32 %v1511, %v1617
          %v1619 = vpop.f32.mrf.mxu0
          %1620 = vmatprep.mubr.bf16.mxu0 0
          %1621 = vmatmul.mubr.bf16.gmra.mxu0 %v1558
          %v1622 = vpop.f32.mrf.mxu0
          %v1623 = vadd.f32 %v1512, %v1622
          %v1624 = vpop.f32.mrf.mxu0
          %v1625 = vpop.f32.mrf.mxu0
          %v1626 = vadd.f32 %v1513, %v1625
          %v1627 = vpop.f32.mrf.mxu0
          %1628 = vmatprep.mubr.bf16.mxu0 0
          %1629 = vmatmul.mubr.bf16.gmra.mxu0 %v1559
          %v1630 = vpop.f32.mrf.mxu0
          %v1631 = vadd.f32 %v1514, %v1630
          %v1632 = vpop.f32.mrf.mxu0
          %v1633 = vpop.f32.mrf.mxu0
          %v1634 = vadd.f32 %v1515, %v1633
          %v1635 = vpop.f32.mrf.mxu0
          %1636 = vmatprep.mubr.bf16.mxu0 0
          %1637 = vmatmul.mubr.bf16.gmra.mxu0 %v1560
          %v1638 = vpop.f32.mrf.mxu0
          %v1639 = vadd.f32 %v1516, %v1638
          %v1640 = vpop.f32.mrf.mxu0
          %v1641 = vpop.f32.mrf.mxu0
          %v1642 = vadd.f32 %v1517, %v1641
          %v1643 = vpop.f32.mrf.mxu0
          %1644 = vmatprep.mubr.bf16.mxu0 0
          %1645 = vmatmul.mubr.bf16.gmra.mxu0 %v1561
          %v1646 = vpop.f32.mrf.mxu0
          %v1647 = vadd.f32 %v1518, %v1646
          %v1648 = vpop.f32.mrf.mxu0
          %v1649 = vpop.f32.mrf.mxu0
          %v1650 = vadd.f32 %v1519, %v1649
          %v1651 = vpop.f32.mrf.mxu0
          %1652 = vmatprep.mubr.bf16.mxu0 0
          %1653 = vmatmul.mubr.bf16.gmra.mxu0 %v1562
          %v1654 = vpop.f32.mrf.mxu0
          %v1655 = vadd.f32 %v1520, %v1654
          %v1656 = vpop.f32.mrf.mxu0
          %v1657 = vpop.f32.mrf.mxu0
          %v1658 = vadd.f32 %v1521, %v1657
          %v1659 = vpop.f32.mrf.mxu0
          %1660 = vmatprep.mubr.bf16.mxu0 0
          %1661 = vmatmul.mubr.bf16.gmra.mxu0 %v1563
          %v1662 = vpop.f32.mrf.mxu0
          %v1663 = vadd.f32 %v1522, %v1662
          %v1664 = vpop.f32.mrf.mxu0
          %v1665 = vpop.f32.mrf.mxu0
          %v1666 = vadd.f32 %v1523, %v1665
          %v1667 = vpop.f32.mrf.mxu0
          %1668 = vdwg.mxu0
          %s1669 = scalar_lea.vmem %s2, %s469
          %v1670 = vld [vmem:[%s1669] sm:$0xff]
          %v1671 = vld [vmem:[%s1669 + $0x8] sm:$0xff]
          %v1672 = vld [vmem:[%s1669 + $0x10] sm:$0xff]
          %v1673 = vld [vmem:[%s1669 + $0x18] sm:$0xff]
          %v1674 = vld [vmem:[%s1669 + $0x20] sm:$0xff]
          %v1675 = vld [vmem:[%s1669 + $0x28] sm:$0xff]
          %v1676 = vld [vmem:[%s1669 + $0x30] sm:$0xff]
          %v1677 = vld [vmem:[%s1669 + $0x38] sm:$0xff]
          %v1678 = vld [vmem:[%s1669 + $0x40] sm:$0xff]
          %v1679 = vld [vmem:[%s1669 + $0x48] sm:$0xff]
          %v1680 = vld [vmem:[%s1669 + $0x50] sm:$0xff]
          %v1681 = vld [vmem:[%s1669 + $0x58] sm:$0xff]
          %v1682 = vld [vmem:[%s1669 + $0x60] sm:$0xff]
          %v1683 = vld [vmem:[%s1669 + $0x68] sm:$0xff]
          %v1684 = vld [vmem:[%s1669 + $0x70] sm:$0xff]
          %v1685 = vld [vmem:[%s1669 + $0x78] sm:$0xff]
          %1687 = vset.pattern.permute.xlu0 0
          %1688 = vperm.xlu0 %1687, %v1670
          %v1689 = vpop.permute.xlu0 %1688
          %1692 = vset.pattern.permute.xlu0 0
          %1693 = vperm.xlu0 %1692, %v1671
          %v1694 = vpop.permute.xlu0 %1693
          %1697 = vset.pattern.permute.xlu0 0
          %1698 = vperm.xlu0 %1697, %v1672
          %v1699 = vpop.permute.xlu0 %1698
          %1702 = vset.pattern.permute.xlu0 0
          %1703 = vperm.xlu0 %1702, %v1673
          %v1704 = vpop.permute.xlu0 %1703
          %1707 = vset.pattern.permute.xlu0 0
          %1708 = vperm.xlu0 %1707, %v1674
          %v1709 = vpop.permute.xlu0 %1708
          %1712 = vset.pattern.permute.xlu0 0
          %1713 = vperm.xlu0 %1712, %v1675
          %v1714 = vpop.permute.xlu0 %1713
          %1717 = vset.pattern.permute.xlu0 0
          %1718 = vperm.xlu0 %1717, %v1676
          %v1719 = vpop.permute.xlu0 %1718
          %1722 = vset.pattern.permute.xlu0 0
          %1723 = vperm.xlu0 %1722, %v1677
          %v1724 = vpop.permute.xlu0 %1723
          %1727 = vset.pattern.permute.xlu0 0
          %1728 = vperm.xlu0 %1727, %v1678
          %v1729 = vpop.permute.xlu0 %1728
          %1732 = vset.pattern.permute.xlu0 0
          %1733 = vperm.xlu0 %1732, %v1679
          %v1734 = vpop.permute.xlu0 %1733
          %1737 = vset.pattern.permute.xlu0 0
          %1738 = vperm.xlu0 %1737, %v1680
          %v1739 = vpop.permute.xlu0 %1738
          %1742 = vset.pattern.permute.xlu0 0
          %1743 = vperm.xlu0 %1742, %v1681
          %v1744 = vpop.permute.xlu0 %1743
          %1747 = vset.pattern.permute.xlu0 0
          %1748 = vperm.xlu0 %1747, %v1682
          %v1749 = vpop.permute.xlu0 %1748
          %1752 = vset.pattern.permute.xlu0 0
          %1753 = vperm.xlu0 %1752, %v1683
          %v1754 = vpop.permute.xlu0 %1753
          %1757 = vset.pattern.permute.xlu0 0
          %1758 = vperm.xlu0 %1757, %v1684
          %v1759 = vpop.permute.xlu0 %1758
          %1762 = vset.pattern.permute.xlu0 0
          %1763 = vperm.xlu0 %1762, %v1685
          %v1764 = vpop.permute.xlu0 %1763
          %v1766 = vmul.f32 %v1689, %v1607
          %v1767 = vmul.f32 %v1694, %v1610
          %v1768 = vmul.f32 %v1699, %v1615
          %v1769 = vmul.f32 %v1704, %v1618
          %v1770 = vmul.f32 %v1709, %v1623
          %v1771 = vmul.f32 %v1714, %v1626
          %v1772 = vmul.f32 %v1719, %v1631
          %v1773 = vmul.f32 %v1724, %v1634
          %v1774 = vmul.f32 %v1729, %v1639
          %v1775 = vmul.f32 %v1734, %v1642
          %v1776 = vmul.f32 %v1739, %v1647
          %v1777 = vmul.f32 %v1744, %v1650
          %v1778 = vmul.f32 %v1749, %v1655
          %v1779 = vmul.f32 %v1754, %v1658
          %v1780 = vmul.f32 %v1759, %v1663
          %v1781 = vmul.f32 %v1764, %v1666
          %v1782 = vld [vmem:[%s6] sm:$0x1]
          %v1784 = vlaneseq
          %v1785 = vshrl.u32 %v1784, 7
          %v1786 = vsub.s32 0, %v1785
          %v1787 = vrot.slane %v1782, %v1786
          %v1789 = vadd.f32 %v1766, %v1787
          %v1790 = vadd.f32 %v1767, %v1787
          %v1791 = vadd.f32 %v1768, %v1787
          %v1792 = vadd.f32 %v1769, %v1787
          %v1793 = vadd.f32 %v1770, %v1787
          %v1794 = vadd.f32 %v1771, %v1787
          %v1795 = vadd.f32 %v1772, %v1787
          %v1796 = vadd.f32 %v1773, %v1787
          %v1797 = vadd.f32 %v1774, %v1787
          %v1798 = vadd.f32 %v1775, %v1787
          %v1799 = vadd.f32 %v1776, %v1787
          %v1800 = vadd.f32 %v1777, %v1787
          %v1801 = vadd.f32 %v1778, %v1787
          %v1802 = vadd.f32 %v1779, %v1787
          %v1803 = vadd.f32 %v1780, %v1787
          %v1804 = vadd.f32 %v1781, %v1787
          %v1805 = vmax.f32 %v1789, 0.0
          %v1806 = vmax.f32 %v1790, 0.0
          %v1807 = vmax.f32 %v1791, 0.0
          %v1808 = vmax.f32 %v1792, 0.0
          %v1809 = vmax.f32 %v1793, 0.0
          %v1810 = vmax.f32 %v1794, 0.0
          %v1811 = vmax.f32 %v1795, 0.0
          %v1812 = vmax.f32 %v1796, 0.0
          %v1813 = vmax.f32 %v1797, 0.0
          %v1814 = vmax.f32 %v1798, 0.0
          %v1815 = vmax.f32 %v1799, 0.0
          %v1816 = vmax.f32 %v1800, 0.0
          %v1817 = vmax.f32 %v1801, 0.0
          %v1818 = vmax.f32 %v1802, 0.0
          %v1819 = vmax.f32 %v1803, 0.0
          %v1820 = vmax.f32 %v1804, 0.0
          %s1821 = scalar_lea.vmem [#allocation5], %s469
          %1822 = vst [vmem:[%s1821] sm:$0xff] %v1805
          %1823 = vst [vmem:[%s1821 + $0x8] sm:$0xff] %v1806
          %1824 = vst [vmem:[%s1821 + $0x10] sm:$0xff] %v1807
          %1825 = vst [vmem:[%s1821 + $0x18] sm:$0xff] %v1808
          %1826 = vst [vmem:[%s1821 + $0x20] sm:$0xff] %v1809
          %1827 = vst [vmem:[%s1821 + $0x28] sm:$0xff] %v1810
          %1828 = vst [vmem:[%s1821 + $0x30] sm:$0xff] %v1811
          %1829 = vst [vmem:[%s1821 + $0x38] sm:$0xff] %v1812
          %1830 = vst [vmem:[%s1821 + $0x40] sm:$0xff] %v1813
          %1831 = vst [vmem:[%s1821 + $0x48] sm:$0xff] %v1814
          %1832 = vst [vmem:[%s1821 + $0x50] sm:$0xff] %v1815
          %1833 = vst [vmem:[%s1821 + $0x58] sm:$0xff] %v1816
          %1834 = vst [vmem:[%s1821 + $0x60] sm:$0xff] %v1817
          %1835 = vst [vmem:[%s1821 + $0x68] sm:$0xff] %v1818
          %1836 = vst [vmem:[%s1821 + $0x70] sm:$0xff] %v1819
          %1837 = vst [vmem:[%s1821 + $0x78] sm:$0xff] %v1820
        $region96: #{tpu_custom_call.1} parent=63 // pred_fallthru
          _
        %p1838 = scmp.eq.s32.totalorder %s32, 2
        // Predicated region
        $region101: #{tpu_custom_call.1} parent=63 // pred_check
          %p1839 = pneg %p1838
        $region102: #{tpu_custom_call.1} parent=63 // pred_check_branch
          %1841 = sbr.rel (%p1839) target = $region104
        $region103: #{tpu_custom_call.1} parent=63 // pred_region
          %p1842 = scmp.eq.s32.totalorder %s33, 0
          // Predicated region
          $region105: #{tpu_custom_call.1} parent=103 // pred_check
            %p1843 = pneg %p1842
          $region106: #{tpu_custom_call.1} parent=103 // pred_check_branch
            %1845 = sbr.rel (%p1843) target = $region108
          $region107: #{tpu_custom_call.1} parent=103 // pred_region
            %v1846 = vld [vmem:[#allocation5] sm:$0xff]
            %v1847 = vld [vmem:[#allocation5 + $0x8] sm:$0xff]
            %v1848 = vld [vmem:[#allocation5 + $0x10] sm:$0xff]
            %v1849 = vld [vmem:[#allocation5 + $0x18] sm:$0xff]
            %v1850 = vld [vmem:[#allocation5 + $0x20] sm:$0xff]
            %v1851 = vld [vmem:[#allocation5 + $0x28] sm:$0xff]
            %v1852 = vld [vmem:[#allocation5 + $0x30] sm:$0xff]
            %v1853 = vld [vmem:[#allocation5 + $0x38] sm:$0xff]
            %v1854 = vld [vmem:[#allocation5 + $0x40] sm:$0xff]
            %v1855 = vld [vmem:[#allocation5 + $0x48] sm:$0xff]
            %v1856 = vld [vmem:[#allocation5 + $0x50] sm:$0xff]
            %v1857 = vld [vmem:[#allocation5 + $0x58] sm:$0xff]
            %v1858 = vld [vmem:[#allocation5 + $0x60] sm:$0xff]
            %v1859 = vld [vmem:[#allocation5 + $0x68] sm:$0xff]
            %v1860 = vld [vmem:[#allocation5 + $0x70] sm:$0xff]
            %v1861 = vld [vmem:[#allocation5 + $0x78] sm:$0xff]
            %v1862 = vld [vmem:[#allocation15] sm:$0xff]
            %v1863 = vld [vmem:[#allocation15 + $0x8] sm:$0xff]
            %v1864 = vld [vmem:[#allocation15 + $0x10] sm:$0xff]
            %v1865 = vld [vmem:[#allocation15 + $0x18] sm:$0xff]
            %v1866 = vld [vmem:[#allocation15 + $0x20] sm:$0xff]
            %v1867 = vld [vmem:[#allocation15 + $0x28] sm:$0xff]
            %v1868 = vld [vmem:[#allocation15 + $0x30] sm:$0xff]
            %v1869 = vld [vmem:[#allocation15 + $0x38] sm:$0xff]
            %v1870 = vld [vmem:[#allocation15 + $0x40] sm:$0xff]
            %v1871 = vld [vmem:[#allocation15 + $0x48] sm:$0xff]
            %v1872 = vld [vmem:[#allocation15 + $0x50] sm:$0xff]
            %v1873 = vld [vmem:[#allocation15 + $0x58] sm:$0xff]
            %v1874 = vld [vmem:[#allocation15 + $0x60] sm:$0xff]
            %v1875 = vld [vmem:[#allocation15 + $0x68] sm:$0xff]
            %v1876 = vld [vmem:[#allocation15 + $0x70] sm:$0xff]
            %v1877 = vld [vmem:[#allocation15 + $0x78] sm:$0xff]
            %1878 = vmatprep.subr.mxu0 0.0
            %1879 = vmatpush1.msra.mxu0 %v1877
            %1880 = vmatprep.subr.mxu0 0.0
            %1881 = vmatpush1.msra.mxu0 %v1876
            %1882 = vmatprep.subr.mxu0 0.0
            %1883 = vmatpush1.msra.mxu0 %v1875
            %1884 = vmatprep.subr.mxu0 0.0
            %1885 = vmatpush1.msra.mxu0 %v1874
            %1886 = vmatprep.subr.mxu0 0.0
            %1887 = vmatpush1.msra.mxu0 %v1873
            %1888 = vmatprep.subr.mxu0 0.0
            %1889 = vmatpush1.msra.mxu0 %v1872
            %1890 = vmatprep.subr.mxu0 0.0
            %1891 = vmatpush1.msra.mxu0 %v1871
            %1892 = vmatprep.subr.mxu0 0.0
            %1893 = vmatpush1.msra.mxu0 %v1870
            %1894 = vmatprep.subr.mxu0 0.0
            %1895 = vmatpush1.msra.mxu0 %v1869
            %1896 = vmatprep.subr.mxu0 0.0
            %1897 = vmatpush1.msra.mxu0 %v1868
            %1898 = vmatprep.subr.mxu0 0.0
            %1899 = vmatpush1.msra.mxu0 %v1867
            %1900 = vmatprep.subr.mxu0 0.0
            %1901 = vmatpush1.msra.mxu0 %v1866
            %1902 = vmatprep.subr.mxu0 0.0
            %1903 = vmatpush1.msra.mxu0 %v1865
            %1904 = vmatprep.subr.mxu0 0.0
            %1905 = vmatpush1.msra.mxu0 %v1864
            %1906 = vmatprep.subr.mxu0 0.0
            %1907 = vmatpush1.msra.mxu0 %v1863
            %1908 = vmatprep.subr.mxu0 0.0
            %1909 = vmatpush1.msra.mxu0 %v1862
            %1910 = vmatprep.subr.mxu0 0.0
            %1911 = vmatpush2.msra.mxu0 0.0
            %1912 = vmatprep.subr.mxu0 0.0
            %1913 = vmatpush2.msra.mxu0 0.0
            %1914 = vmatprep.subr.mxu0 0.0
            %1915 = vmatpush2.msra.mxu0 0.0
            %1916 = vmatprep.subr.mxu0 0.0
            %1917 = vmatpush2.msra.mxu0 0.0
            %1918 = vmatprep.subr.mxu0 0.0
            %1919 = vmatpush2.msra.mxu0 0.0
            %1920 = vmatprep.subr.mxu0 0.0
            %1921 = vmatpush2.msra.mxu0 0.0
            %1922 = vmatprep.subr.mxu0 0.0
            %1923 = vmatpush2.msra.mxu0 0.0
            %1924 = vmatprep.subr.mxu0 0.0
            %1925 = vmatpush2.msra.mxu0 0.0
            %1926 = vmatprep.subr.mxu0 0.0
            %1927 = vmatpush2.msra.mxu0 0.0
            %1928 = vmatprep.subr.mxu0 0.0
            %1929 = vmatpush2.msra.mxu0 0.0
            %1930 = vmatprep.subr.mxu0 0.0
            %1931 = vmatpush2.msra.mxu0 0.0
            %1932 = vmatprep.subr.mxu0 0.0
            %1933 = vmatpush2.msra.mxu0 0.0
            %1934 = vmatprep.subr.mxu0 0.0
            %1935 = vmatpush2.msra.mxu0 0.0
            %1936 = vmatprep.subr.mxu0 0.0
            %1937 = vmatpush2.msra.mxu0 0.0
            %1938 = vmatprep.subr.mxu0 0.0
            %1939 = vmatpush2.msra.mxu0 0.0
            %1940 = vmatprep.subr.mxu0 0.0
            %1941 = vmatpush2.msra.mxu0 0.0
            %1942 = vmatprep.mubr.f32.mxu0 0.0
            %1943 = vmatmul.mubr.f32.gmra.mxu0 %v1846
            %v1944 = vpop.f32.mrf.mxu0
            %v1945 = vadd.f32 0.0, %v1944
            %v1946 = vpop.f32.mrf.mxu0
            %1947 = vmatprep.mubr.f32.mxu0 0.0
            %1948 = vmatmul.mubr.f32.gmra.mxu0 %v1847
            %v1949 = vpop.f32.mrf.mxu0
            %v1950 = vadd.f32 0.0, %v1949
            %v1951 = vpop.f32.mrf.mxu0
            %1952 = vmatprep.mubr.f32.mxu0 0.0
            %1953 = vmatmul.mubr.f32.gmra.mxu0 %v1848
            %v1954 = vpop.f32.mrf.mxu0
            %v1955 = vadd.f32 0.0, %v1954
            %v1956 = vpop.f32.mrf.mxu0
            %1957 = vmatprep.mubr.f32.mxu0 0.0
            %1958 = vmatmul.mubr.f32.gmra.mxu0 %v1849
            %v1959 = vpop.f32.mrf.mxu0
            %v1960 = vadd.f32 0.0, %v1959
            %v1961 = vpop.f32.mrf.mxu0
            %1962 = vmatprep.mubr.f32.mxu0 0.0
            %1963 = vmatmul.mubr.f32.gmra.mxu0 %v1850
            %v1964 = vpop.f32.mrf.mxu0
            %v1965 = vadd.f32 0.0, %v1964
            %v1966 = vpop.f32.mrf.mxu0
            %1967 = vmatprep.mubr.f32.mxu0 0.0
            %1968 = vmatmul.mubr.f32.gmra.mxu0 %v1851
            %v1969 = vpop.f32.mrf.mxu0
            %v1970 = vadd.f32 0.0, %v1969
            %v1971 = vpop.f32.mrf.mxu0
            %1972 = vmatprep.mubr.f32.mxu0 0.0
            %1973 = vmatmul.mubr.f32.gmra.mxu0 %v1852
            %v1974 = vpop.f32.mrf.mxu0
            %v1975 = vadd.f32 0.0, %v1974
            %v1976 = vpop.f32.mrf.mxu0
            %1977 = vmatprep.mubr.f32.mxu0 0.0
            %1978 = vmatmul.mubr.f32.gmra.mxu0 %v1853
            %v1979 = vpop.f32.mrf.mxu0
            %v1980 = vadd.f32 0.0, %v1979
            %v1981 = vpop.f32.mrf.mxu0
            %1982 = vmatprep.mubr.f32.mxu0 0.0
            %1983 = vmatmul.mubr.f32.gmra.mxu0 %v1854
            %v1984 = vpop.f32.mrf.mxu0
            %v1985 = vadd.f32 0.0, %v1984
            %v1986 = vpop.f32.mrf.mxu0
            %1987 = vmatprep.mubr.f32.mxu0 0.0
            %1988 = vmatmul.mubr.f32.gmra.mxu0 %v1855
            %v1989 = vpop.f32.mrf.mxu0
            %v1990 = vadd.f32 0.0, %v1989
            %v1991 = vpop.f32.mrf.mxu0
            %1992 = vmatprep.mubr.f32.mxu0 0.0
            %1993 = vmatmul.mubr.f32.gmra.mxu0 %v1856
            %v1994 = vpop.f32.mrf.mxu0
            %v1995 = vadd.f32 0.0, %v1994
            %v1996 = vpop.f32.mrf.mxu0
            %1997 = vmatprep.mubr.f32.mxu0 0.0
            %1998 = vmatmul.mubr.f32.gmra.mxu0 %v1857
            %v1999 = vpop.f32.mrf.mxu0
            %v2000 = vadd.f32 0.0, %v1999
            %v2001 = vpop.f32.mrf.mxu0
            %2002 = vmatprep.mubr.f32.mxu0 0.0
            %2003 = vmatmul.mubr.f32.gmra.mxu0 %v1858
            %v2004 = vpop.f32.mrf.mxu0
            %v2005 = vadd.f32 0.0, %v2004
            %v2006 = vpop.f32.mrf.mxu0
            %2007 = vmatprep.mubr.f32.mxu0 0.0
            %2008 = vmatmul.mubr.f32.gmra.mxu0 %v1859
            %v2009 = vpop.f32.mrf.mxu0
            %v2010 = vadd.f32 0.0, %v2009
            %v2011 = vpop.f32.mrf.mxu0
            %2012 = vmatprep.mubr.f32.mxu0 0.0
            %2013 = vmatmul.mubr.f32.gmra.mxu0 %v1860
            %v2014 = vpop.f32.mrf.mxu0
            %v2015 = vadd.f32 0.0, %v2014
            %v2016 = vpop.f32.mrf.mxu0
            %2017 = vmatprep.mubr.f32.mxu0 0.0
            %2018 = vmatmul.mubr.f32.gmra.mxu0 %v1861
            %v2019 = vpop.f32.mrf.mxu0
            %v2020 = vadd.f32 0.0, %v2019
            %v2021 = vpop.f32.mrf.mxu0
            %2022 = vdwg.mxu0
            %2039 = vrot.lane.b32.xlu0 %v1945, 112
            %v2040 = vpop.permute.xlu0 %2039
            %2041 = vrot.lane.b32.xlu0 %v1950, 112
            %v2042 = vpop.permute.xlu0 %2041
            %2043 = vrot.lane.b32.xlu0 %v1955, 112
            %v2044 = vpop.permute.xlu0 %2043
            %2045 = vrot.lane.b32.xlu0 %v1960, 112
            %v2046 = vpop.permute.xlu0 %2045
            %2047 = vrot.lane.b32.xlu0 %v1965, 112
            %v2048 = vpop.permute.xlu0 %2047
            %2049 = vrot.lane.b32.xlu0 %v1970, 112
            %v2050 = vpop.permute.xlu0 %2049
            %2051 = vrot.lane.b32.xlu0 %v1975, 112
            %v2052 = vpop.permute.xlu0 %2051
            %2053 = vrot.lane.b32.xlu0 %v1980, 112
            %v2054 = vpop.permute.xlu0 %2053
            %2055 = vrot.lane.b32.xlu0 %v1985, 112
            %v2056 = vpop.permute.xlu0 %2055
            %2057 = vrot.lane.b32.xlu0 %v1990, 112
            %v2058 = vpop.permute.xlu0 %2057
            %2059 = vrot.lane.b32.xlu0 %v1995, 112
            %v2060 = vpop.permute.xlu0 %2059
            %2061 = vrot.lane.b32.xlu0 %v2000, 112
            %v2062 = vpop.permute.xlu0 %2061
            %2063 = vrot.lane.b32.xlu0 %v2005, 112
            %v2064 = vpop.permute.xlu0 %2063
            %2065 = vrot.lane.b32.xlu0 %v2010, 112
            %v2066 = vpop.permute.xlu0 %2065
            %2067 = vrot.lane.b32.xlu0 %v2015, 112
            %v2068 = vpop.permute.xlu0 %2067
            %2069 = vrot.lane.b32.xlu0 %v2020, 112
            %v2070 = vpop.permute.xlu0 %2069
            %vm2087 = vcmask 7168
            %2088 = vst.msk [vmem:[#allocation7] sm:$0xff] %vm2087, %v2040
            %2089 = vst.msk [vmem:[#allocation7 + $0x8] sm:$0xff] %vm2087, %v2042
            %2090 = vst.msk [vmem:[#allocation7 + $0x10] sm:$0xff] %vm2087, %v2044
            %2091 = vst.msk [vmem:[#allocation7 + $0x18] sm:$0xff] %vm2087, %v2046
            %2092 = vst.msk [vmem:[#allocation7 + $0x20] sm:$0xff] %vm2087, %v2048
            %2093 = vst.msk [vmem:[#allocation7 + $0x28] sm:$0xff] %vm2087, %v2050
            %2094 = vst.msk [vmem:[#allocation7 + $0x30] sm:$0xff] %vm2087, %v2052
            %2095 = vst.msk [vmem:[#allocation7 + $0x38] sm:$0xff] %vm2087, %v2054
            %2096 = vst.msk [vmem:[#allocation7 + $0x40] sm:$0xff] %vm2087, %v2056
            %2097 = vst.msk [vmem:[#allocation7 + $0x48] sm:$0xff] %vm2087, %v2058
            %2098 = vst.msk [vmem:[#allocation7 + $0x50] sm:$0xff] %vm2087, %v2060
            %2099 = vst.msk [vmem:[#allocation7 + $0x58] sm:$0xff] %vm2087, %v2062
            %2100 = vst.msk [vmem:[#allocation7 + $0x60] sm:$0xff] %vm2087, %v2064
            %2101 = vst.msk [vmem:[#allocation7 + $0x68] sm:$0xff] %vm2087, %v2066
            %2102 = vst.msk [vmem:[#allocation7 + $0x70] sm:$0xff] %vm2087, %v2068
            %2103 = vst.msk [vmem:[#allocation7 + $0x78] sm:$0xff] %vm2087, %v2070
            %2104 = vrot.lane.b32.xlu0 %v1945, 111
            %v2105 = vpop.permute.xlu0 %2104
            %2106 = vrot.lane.b32.xlu0 %v1950, 111
            %v2107 = vpop.permute.xlu0 %2106
            %2108 = vrot.lane.b32.xlu0 %v1955, 111
            %v2109 = vpop.permute.xlu0 %2108
            %2110 = vrot.lane.b32.xlu0 %v1960, 111
            %v2111 = vpop.permute.xlu0 %2110
            %2112 = vrot.lane.b32.xlu0 %v1965, 111
            %v2113 = vpop.permute.xlu0 %2112
            %2114 = vrot.lane.b32.xlu0 %v1970, 111
            %v2115 = vpop.permute.xlu0 %2114
            %2116 = vrot.lane.b32.xlu0 %v1975, 111
            %v2117 = vpop.permute.xlu0 %2116
            %2118 = vrot.lane.b32.xlu0 %v1980, 111
            %v2119 = vpop.permute.xlu0 %2118
            %2120 = vrot.lane.b32.xlu0 %v1985, 111
            %v2121 = vpop.permute.xlu0 %2120
            %2122 = vrot.lane.b32.xlu0 %v1990, 111
            %v2123 = vpop.permute.xlu0 %2122
            %2124 = vrot.lane.b32.xlu0 %v1995, 111
            %v2125 = vpop.permute.xlu0 %2124
            %2126 = vrot.lane.b32.xlu0 %v2000, 111
            %v2127 = vpop.permute.xlu0 %2126
            %2128 = vrot.lane.b32.xlu0 %v2005, 111
            %v2129 = vpop.permute.xlu0 %2128
            %2130 = vrot.lane.b32.xlu0 %v2010, 111
            %v2131 = vpop.permute.xlu0 %2130
            %2132 = vrot.lane.b32.xlu0 %v2015, 111
            %v2133 = vpop.permute.xlu0 %2132
            %2134 = vrot.lane.b32.xlu0 %v2020, 111
            %v2135 = vpop.permute.xlu0 %2134
            %2152 = vst.msk [vmem:[#allocation8] sm:$0xff] %vm2087, %v2105
            %2153 = vst.msk [vmem:[#allocation8 + $0x8] sm:$0xff] %vm2087, %v2107
            %2154 = vst.msk [vmem:[#allocation8 + $0x10] sm:$0xff] %vm2087, %v2109
            %2155 = vst.msk [vmem:[#allocation8 + $0x18] sm:$0xff] %vm2087, %v2111
            %2156 = vst.msk [vmem:[#allocation8 + $0x20] sm:$0xff] %vm2087, %v2113
            %2157 = vst.msk [vmem:[#allocation8 + $0x28] sm:$0xff] %vm2087, %v2115
            %2158 = vst.msk [vmem:[#allocation8 + $0x30] sm:$0xff] %vm2087, %v2117
            %2159 = vst.msk [vmem:[#allocation8 + $0x38] sm:$0xff] %vm2087, %v2119
            %2160 = vst.msk [vmem:[#allocation8 + $0x40] sm:$0xff] %vm2087, %v2121
            %2161 = vst.msk [vmem:[#allocation8 + $0x48] sm:$0xff] %vm2087, %v2123
            %2162 = vst.msk [vmem:[#allocation8 + $0x50] sm:$0xff] %vm2087, %v2125
            %2163 = vst.msk [vmem:[#allocation8 + $0x58] sm:$0xff] %vm2087, %v2127
            %2164 = vst.msk [vmem:[#allocation8 + $0x60] sm:$0xff] %vm2087, %v2129
            %2165 = vst.msk [vmem:[#allocation8 + $0x68] sm:$0xff] %vm2087, %v2131
            %2166 = vst.msk [vmem:[#allocation8 + $0x70] sm:$0xff] %vm2087, %v2133
            %2167 = vst.msk [vmem:[#allocation8 + $0x78] sm:$0xff] %vm2087, %v2135
            %v2168 = vlaneseq
            %v2169 = vand.u32 %v2168, 127
            %vm2170 = vcmp.eq.s32.totalorder %v2169, 18
            %v2171 = vsel %vm2170, 1.0, %v1945
            %v2172 = vsel %vm2170, 1.0, %v1950
            %v2173 = vsel %vm2170, 1.0, %v1955
            %v2174 = vsel %vm2170, 1.0, %v1960
            %v2175 = vsel %vm2170, 1.0, %v1965
            %v2176 = vsel %vm2170, 1.0, %v1970
            %v2177 = vsel %vm2170, 1.0, %v1975
            %v2178 = vsel %vm2170, 1.0, %v1980
            %v2179 = vsel %vm2170, 1.0, %v1985
            %v2180 = vsel %vm2170, 1.0, %v1990
            %v2181 = vsel %vm2170, 1.0, %v1995
            %v2182 = vsel %vm2170, 1.0, %v2000
            %v2183 = vsel %vm2170, 1.0, %v2005
            %v2184 = vsel %vm2170, 1.0, %v2010
            %v2185 = vsel %vm2170, 1.0, %v2015
            %v2186 = vsel %vm2170, 1.0, %v2020
            %v2187 = vpack.c.bf16 %v2172, %v2171
            %v2188 = vpack.c.bf16 %v2174, %v2173
            %v2189 = vpack.c.bf16 %v2176, %v2175
            %v2190 = vpack.c.bf16 %v2178, %v2177
            %v2191 = vpack.c.bf16 %v2180, %v2179
            %v2192 = vpack.c.bf16 %v2182, %v2181
            %v2193 = vpack.c.bf16 %v2184, %v2183
            %v2194 = vpack.c.bf16 %v2186, %v2185
            %v2203 = vunpack.c.l.b16 %v2187
            %v2204 = vunpack.c.h.b16 %v2187
            %v2205 = vunpack.c.l.b16 %v2188
            %v2206 = vunpack.c.h.b16 %v2188
            %v2207 = vunpack.c.l.b16 %v2189
            %v2208 = vunpack.c.h.b16 %v2189
            %v2209 = vunpack.c.l.b16 %v2190
            %v2210 = vunpack.c.h.b16 %v2190
            %v2211 = vunpack.c.l.b16 %v2191
            %v2212 = vunpack.c.h.b16 %v2191
            %v2213 = vunpack.c.l.b16 %v2192
            %v2214 = vunpack.c.h.b16 %v2192
            %v2215 = vunpack.c.l.b16 %v2193
            %v2216 = vunpack.c.h.b16 %v2193
            %v2217 = vunpack.c.l.b16 %v2194
            %v2218 = vunpack.c.h.b16 %v2194
            %v2219 = vpack.c.b16 %v2203, %v2203
            %v2220 = vpack.c.b16 %v2204, %v2204
            %v2221 = vpack.c.b16 %v2205, %v2205
            %v2222 = vpack.c.b16 %v2206, %v2206
            %v2223 = vpack.c.b16 %v2207, %v2207
            %v2224 = vpack.c.b16 %v2208, %v2208
            %v2225 = vpack.c.b16 %v2209, %v2209
            %v2226 = vpack.c.b16 %v2210, %v2210
            %v2227 = vpack.c.b16 %v2211, %v2211
            %v2228 = vpack.c.b16 %v2212, %v2212
            %v2229 = vpack.c.b16 %v2213, %v2213
            %v2230 = vpack.c.b16 %v2214, %v2214
            %v2231 = vpack.c.b16 %v2215, %v2215
            %v2232 = vpack.c.b16 %v2216, %v2216
            %v2233 = vpack.c.b16 %v2217, %v2217
            %v2234 = vpack.c.b16 %v2218, %v2218
            %2251 = vst [vmem:[#allocation6] sm:$0xf] %v2219
            %2252 = vst [vmem:[#allocation6 + $0x4] sm:$0xf] %v2220
            %2253 = vst [vmem:[#allocation6 + $0x8] sm:$0xf] %v2221
            %2254 = vst [vmem:[#allocation6 + $0xc] sm:$0xf] %v2222
            %2255 = vst [vmem:[#allocation6 + $0x10] sm:$0xf] %v2223
            %2256 = vst [vmem:[#allocation6 + $0x14] sm:$0xf] %v2224
            %2257 = vst [vmem:[#allocation6 + $0x18] sm:$0xf] %v2225
            %2258 = vst [vmem:[#allocation6 + $0x1c] sm:$0xf] %v2226
            %2259 = vst [vmem:[#allocation6 + $0x20] sm:$0xf] %v2227
            %2260 = vst [vmem:[#allocation6 + $0x24] sm:$0xf] %v2228
            %2261 = vst [vmem:[#allocation6 + $0x28] sm:$0xf] %v2229
            %2262 = vst [vmem:[#allocation6 + $0x2c] sm:$0xf] %v2230
            %2263 = vst [vmem:[#allocation6 + $0x30] sm:$0xf] %v2231
            %2264 = vst [vmem:[#allocation6 + $0x34] sm:$0xf] %v2232
            %2265 = vst [vmem:[#allocation6 + $0x38] sm:$0xf] %v2233
            %2266 = vst [vmem:[#allocation6 + $0x3c] sm:$0xf] %v2234
          $region108: #{tpu_custom_call.1} parent=103 // pred_fallthru
            _
          %v2267 = vld [vmem:[#allocation9] sm:$0xf]
          %v2268 = vld [vmem:[#allocation9 + $0x4] sm:$0xf]
          %v2269 = vld [vmem:[#allocation9 + $0x8] sm:$0xf]
          %v2270 = vld [vmem:[#allocation9 + $0xc] sm:$0xf]
          %v2271 = vld [vmem:[#allocation9 + $0x10] sm:$0xf]
          %v2272 = vld [vmem:[#allocation9 + $0x14] sm:$0xf]
          %v2273 = vld [vmem:[#allocation9 + $0x18] sm:$0xf]
          %v2274 = vld [vmem:[#allocation9 + $0x1c] sm:$0xf]
          %v2275 = vld [vmem:[#allocation9 + $0x20] sm:$0xf]
          %v2276 = vld [vmem:[#allocation9 + $0x24] sm:$0xf]
          %v2277 = vld [vmem:[#allocation9 + $0x28] sm:$0xf]
          %v2278 = vld [vmem:[#allocation9 + $0x2c] sm:$0xf]
          %v2279 = vld [vmem:[#allocation9 + $0x30] sm:$0xf]
          %v2280 = vld [vmem:[#allocation9 + $0x34] sm:$0xf]
          %v2281 = vld [vmem:[#allocation9 + $0x38] sm:$0xf]
          %v2282 = vld [vmem:[#allocation9 + $0x3c] sm:$0xf]
          %s2283 = scalar_lea.vmem [#allocation8], %s469
          %v2284 = vld [vmem:[%s2283] sm:$0xff]
          %v2285 = vld [vmem:[%s2283 + $0x8] sm:$0xff]
          %v2286 = vld [vmem:[%s2283 + $0x10] sm:$0xff]
          %v2287 = vld [vmem:[%s2283 + $0x18] sm:$0xff]
          %v2288 = vld [vmem:[%s2283 + $0x20] sm:$0xff]
          %v2289 = vld [vmem:[%s2283 + $0x28] sm:$0xff]
          %v2290 = vld [vmem:[%s2283 + $0x30] sm:$0xff]
          %v2291 = vld [vmem:[%s2283 + $0x38] sm:$0xff]
          %v2292 = vld [vmem:[%s2283 + $0x40] sm:$0xff]
          %v2293 = vld [vmem:[%s2283 + $0x48] sm:$0xff]
          %v2294 = vld [vmem:[%s2283 + $0x50] sm:$0xff]
          %v2295 = vld [vmem:[%s2283 + $0x58] sm:$0xff]
          %v2296 = vld [vmem:[%s2283 + $0x60] sm:$0xff]
          %v2297 = vld [vmem:[%s2283 + $0x68] sm:$0xff]
          %v2298 = vld [vmem:[%s2283 + $0x70] sm:$0xff]
          %v2299 = vld [vmem:[%s2283 + $0x78] sm:$0xff]
          %v2300 = vld [vmem:[#allocation7] sm:$0xff]
          %v2301 = vld [vmem:[#allocation7 + $0x8] sm:$0xff]
          %v2302 = vld [vmem:[#allocation7 + $0x10] sm:$0xff]
          %v2303 = vld [vmem:[#allocation7 + $0x18] sm:$0xff]
          %v2304 = vld [vmem:[#allocation7 + $0x20] sm:$0xff]
          %v2305 = vld [vmem:[#allocation7 + $0x28] sm:$0xff]
          %v2306 = vld [vmem:[#allocation7 + $0x30] sm:$0xff]
          %v2307 = vld [vmem:[#allocation7 + $0x38] sm:$0xff]
          %v2308 = vld [vmem:[#allocation7 + $0x40] sm:$0xff]
          %v2309 = vld [vmem:[#allocation7 + $0x48] sm:$0xff]
          %v2310 = vld [vmem:[#allocation7 + $0x50] sm:$0xff]
          %v2311 = vld [vmem:[#allocation7 + $0x58] sm:$0xff]
          %v2312 = vld [vmem:[#allocation7 + $0x60] sm:$0xff]
          %v2313 = vld [vmem:[#allocation7 + $0x68] sm:$0xff]
          %v2314 = vld [vmem:[#allocation7 + $0x70] sm:$0xff]
          %v2315 = vld [vmem:[#allocation7 + $0x78] sm:$0xff]
          %2316 = vxpose.xlu0.b32.start [1/16] %v2300, 128
          %2317 = vxpose.xlu0.b32.cont [2/16] %v2301, 128
          %2318 = vxpose.xlu0.b32.cont [3/16] %v2302, 128
          %2319 = vxpose.xlu0.b32.cont [4/16] %v2303, 128
          %2320 = vxpose.xlu0.b32.cont [5/16] %v2304, 128
          %2321 = vxpose.xlu0.b32.cont [6/16] %v2305, 128
          %2322 = vxpose.xlu0.b32.cont [7/16] %v2306, 128
          %2323 = vxpose.xlu0.b32.cont [8/16] %v2307, 128
          %2324 = vxpose.xlu0.b32.cont [9/16] %v2308, 128
          %2325 = vxpose.xlu0.b32.cont [10/16] %v2309, 128
          %2326 = vxpose.xlu0.b32.cont [11/16] %v2310, 128
          %2327 = vxpose.xlu0.b32.cont [12/16] %v2311, 128
          %2328 = vxpose.xlu0.b32.cont [13/16] %v2312, 128
          %2329 = vxpose.xlu0.b32.cont [14/16] %v2313, 128
          %2330 = vxpose.xlu0.b32.cont [15/16] %v2314, 128
          %2331 = vxpose.xlu0.b32.end [16/16] %v2315, 128
          %v2332 = vpop.trf.xlu0
          %v2333 = vpop.trf.xlu0
          %v2334 = vpop.trf.xlu0
          %v2335 = vpop.trf.xlu0
          %v2336 = vpop.trf.xlu0
          %v2337 = vpop.trf.xlu0
          %v2338 = vpop.trf.xlu0
          %v2339 = vpop.trf.xlu0
          %v2340 = vpop.trf.xlu0
          %v2341 = vpop.trf.xlu0
          %v2342 = vpop.trf.xlu0
          %v2343 = vpop.trf.xlu0
          %v2344 = vpop.trf.xlu0
          %v2345 = vpop.trf.xlu0
          %v2346 = vpop.trf.xlu0
          %v2347 = vpop.trf.xlu0
          %2349 = vset.pattern.permute.xlu0 0
          %2350 = vperm.xlu0 %2349, %v2284
          %v2351 = vpop.permute.xlu0 %2350
          %2354 = vset.pattern.permute.xlu0 0
          %2355 = vperm.xlu0 %2354, %v2285
          %v2356 = vpop.permute.xlu0 %2355
          %2359 = vset.pattern.permute.xlu0 0
          %2360 = vperm.xlu0 %2359, %v2286
          %v2361 = vpop.permute.xlu0 %2360
          %2364 = vset.pattern.permute.xlu0 0
          %2365 = vperm.xlu0 %2364, %v2287
          %v2366 = vpop.permute.xlu0 %2365
          %2369 = vset.pattern.permute.xlu0 0
          %2370 = vperm.xlu0 %2369, %v2288
          %v2371 = vpop.permute.xlu0 %2370
          %2374 = vset.pattern.permute.xlu0 0
          %2375 = vperm.xlu0 %2374, %v2289
          %v2376 = vpop.permute.xlu0 %2375
          %2379 = vset.pattern.permute.xlu0 0
          %2380 = vperm.xlu0 %2379, %v2290
          %v2381 = vpop.permute.xlu0 %2380
          %2384 = vset.pattern.permute.xlu0 0
          %2385 = vperm.xlu0 %2384, %v2291
          %v2386 = vpop.permute.xlu0 %2385
          %2389 = vset.pattern.permute.xlu0 0
          %2390 = vperm.xlu0 %2389, %v2292
          %v2391 = vpop.permute.xlu0 %2390
          %2394 = vset.pattern.permute.xlu0 0
          %2395 = vperm.xlu0 %2394, %v2293
          %v2396 = vpop.permute.xlu0 %2395
          %2399 = vset.pattern.permute.xlu0 0
          %2400 = vperm.xlu0 %2399, %v2294
          %v2401 = vpop.permute.xlu0 %2400
          %2404 = vset.pattern.permute.xlu0 0
          %2405 = vperm.xlu0 %2404, %v2295
          %v2406 = vpop.permute.xlu0 %2405
          %2409 = vset.pattern.permute.xlu0 0
          %2410 = vperm.xlu0 %2409, %v2296
          %v2411 = vpop.permute.xlu0 %2410
          %2414 = vset.pattern.permute.xlu0 0
          %2415 = vperm.xlu0 %2414, %v2297
          %v2416 = vpop.permute.xlu0 %2415
          %2419 = vset.pattern.permute.xlu0 0
          %2420 = vperm.xlu0 %2419, %v2298
          %v2421 = vpop.permute.xlu0 %2420
          %2424 = vset.pattern.permute.xlu0 0
          %2425 = vperm.xlu0 %2424, %v2299
          %v2426 = vpop.permute.xlu0 %2425
          %v2428 = vlaneseq
          %v2429 = vshrl.u32 %v2428, 7
          %v2430 = vsub.s32 0, %v2429
          %v2431 = vrot.slane %v2332, %v2430
          %v2432 = vadd.f32 %v2351, %v2431
          %v2433 = vadd.f32 %v2356, %v2431
          %v2434 = vadd.f32 %v2361, %v2431
          %v2435 = vadd.f32 %v2366, %v2431
          %v2436 = vadd.f32 %v2371, %v2431
          %v2437 = vadd.f32 %v2376, %v2431
          %v2438 = vadd.f32 %v2381, %v2431
          %v2439 = vadd.f32 %v2386, %v2431
          %v2440 = vadd.f32 %v2391, %v2431
          %v2441 = vadd.f32 %v2396, %v2431
          %v2442 = vadd.f32 %v2401, %v2431
          %v2443 = vadd.f32 %v2406, %v2431
          %v2444 = vadd.f32 %v2411, %v2431
          %v2445 = vadd.f32 %v2416, %v2431
          %v2446 = vadd.f32 %v2421, %v2431
          %v2447 = vadd.f32 %v2426, %v2431
          %v2448 = vmul.f32 %v2432, 0.2
          %v2449 = vmul.f32 %v2433, 0.2
          %v2450 = vmul.f32 %v2434, 0.2
          %v2451 = vmul.f32 %v2435, 0.2
          %v2452 = vmul.f32 %v2436, 0.2
          %v2453 = vmul.f32 %v2437, 0.2
          %v2454 = vmul.f32 %v2438, 0.2
          %v2455 = vmul.f32 %v2439, 0.2
          %v2456 = vmul.f32 %v2440, 0.2
          %v2457 = vmul.f32 %v2441, 0.2
          %v2458 = vmul.f32 %v2442, 0.2
          %v2459 = vmul.f32 %v2443, 0.2
          %v2460 = vmul.f32 %v2444, 0.2
          %v2461 = vmul.f32 %v2445, 0.2
          %v2462 = vmul.f32 %v2446, 0.2
          %v2463 = vmul.f32 %v2447, 0.2
          %v2464 = vmax.f32 %v2432, %v2448
          %v2465 = vmax.f32 %v2433, %v2449
          %v2466 = vmax.f32 %v2434, %v2450
          %v2467 = vmax.f32 %v2435, %v2451
          %v2468 = vmax.f32 %v2436, %v2452
          %v2469 = vmax.f32 %v2437, %v2453
          %v2470 = vmax.f32 %v2438, %v2454
          %v2471 = vmax.f32 %v2439, %v2455
          %v2472 = vmax.f32 %v2440, %v2456
          %v2473 = vmax.f32 %v2441, %v2457
          %v2474 = vmax.f32 %v2442, %v2458
          %v2475 = vmax.f32 %v2443, %v2459
          %v2476 = vmax.f32 %v2444, %v2460
          %v2477 = vmax.f32 %v2445, %v2461
          %v2478 = vmax.f32 %v2446, %v2462
          %v2479 = vmax.f32 %v2447, %v2463
          %vm2480 = vcmp.gt.bf16.partialorder %v2267, 0
          %vm2481 = vcmp.gt.bf16.partialorder %v2268, 0
          %vm2482 = vcmp.gt.bf16.partialorder %v2269, 0
          %vm2483 = vcmp.gt.bf16.partialorder %v2270, 0
          %vm2484 = vcmp.gt.bf16.partialorder %v2271, 0
          %vm2485 = vcmp.gt.bf16.partialorder %v2272, 0
          %vm2486 = vcmp.gt.bf16.partialorder %v2273, 0
          %vm2487 = vcmp.gt.bf16.partialorder %v2274, 0
          %vm2488 = vcmp.gt.bf16.partialorder %v2275, 0
          %vm2489 = vcmp.gt.bf16.partialorder %v2276, 0
          %vm2490 = vcmp.gt.bf16.partialorder %v2277, 0
          %vm2491 = vcmp.gt.bf16.partialorder %v2278, 0
          %vm2492 = vcmp.gt.bf16.partialorder %v2279, 0
          %vm2493 = vcmp.gt.bf16.partialorder %v2280, 0
          %vm2494 = vcmp.gt.bf16.partialorder %v2281, 0
          %vm2495 = vcmp.gt.bf16.partialorder %v2282, 0
          %v2496 = vsel %vm2480, 65537, 0
          %v2497 = vsel %vm2481, 65537, 0
          %v2498 = vsel %vm2482, 65537, 0
          %v2499 = vsel %vm2483, 65537, 0
          %v2500 = vsel %vm2484, 65537, 0
          %v2501 = vsel %vm2485, 65537, 0
          %v2502 = vsel %vm2486, 65537, 0
          %v2503 = vsel %vm2487, 65537, 0
          %v2504 = vsel %vm2488, 65537, 0
          %v2505 = vsel %vm2489, 65537, 0
          %v2506 = vsel %vm2490, 65537, 0
          %v2507 = vsel %vm2491, 65537, 0
          %v2508 = vsel %vm2492, 65537, 0
          %v2509 = vsel %vm2493, 65537, 0
          %v2510 = vsel %vm2494, 65537, 0
          %v2511 = vsel %vm2495, 65537, 0
          %v2512 = vunpack.c.l.b16 %v2496
          %v2513 = vunpack.c.l.b16 %v2497
          %v2514 = vunpack.c.l.b16 %v2498
          %v2515 = vunpack.c.l.b16 %v2499
          %v2516 = vunpack.c.l.b16 %v2500
          %v2517 = vunpack.c.l.b16 %v2501
          %v2518 = vunpack.c.l.b16 %v2502
          %v2519 = vunpack.c.l.b16 %v2503
          %v2520 = vunpack.c.l.b16 %v2504
          %v2521 = vunpack.c.l.b16 %v2505
          %v2522 = vunpack.c.l.b16 %v2506
          %v2523 = vunpack.c.l.b16 %v2507
          %v2524 = vunpack.c.l.b16 %v2508
          %v2525 = vunpack.c.l.b16 %v2509
          %v2526 = vunpack.c.l.b16 %v2510
          %v2527 = vunpack.c.l.b16 %v2511
          %vm2528 = vcmp.ne.s32.totalorder %v2512, 0
          %vm2529 = vcmp.ne.s32.totalorder %v2513, 0
          %vm2530 = vcmp.ne.s32.totalorder %v2514, 0
          %vm2531 = vcmp.ne.s32.totalorder %v2515, 0
          %vm2532 = vcmp.ne.s32.totalorder %v2516, 0
          %vm2533 = vcmp.ne.s32.totalorder %v2517, 0
          %vm2534 = vcmp.ne.s32.totalorder %v2518, 0
          %vm2535 = vcmp.ne.s32.totalorder %v2519, 0
          %vm2536 = vcmp.ne.s32.totalorder %v2520, 0
          %vm2537 = vcmp.ne.s32.totalorder %v2521, 0
          %vm2538 = vcmp.ne.s32.totalorder %v2522, 0
          %vm2539 = vcmp.ne.s32.totalorder %v2523, 0
          %vm2540 = vcmp.ne.s32.totalorder %v2524, 0
          %vm2541 = vcmp.ne.s32.totalorder %v2525, 0
          %vm2542 = vcmp.ne.s32.totalorder %v2526, 0
          %vm2543 = vcmp.ne.s32.totalorder %v2527, 0
          %v2544 = vsel %vm2528, %v2464, -1e+30
          %v2545 = vsel %vm2529, %v2465, -1e+30
          %v2546 = vsel %vm2530, %v2466, -1e+30
          %v2547 = vsel %vm2531, %v2467, -1e+30
          %v2548 = vsel %vm2532, %v2468, -1e+30
          %v2549 = vsel %vm2533, %v2469, -1e+30
          %v2550 = vsel %vm2534, %v2470, -1e+30
          %v2551 = vsel %vm2535, %v2471, -1e+30
          %v2552 = vsel %vm2536, %v2472, -1e+30
          %v2553 = vsel %vm2537, %v2473, -1e+30
          %v2554 = vsel %vm2538, %v2474, -1e+30
          %v2555 = vsel %vm2539, %v2475, -1e+30
          %v2556 = vsel %vm2540, %v2476, -1e+30
          %v2557 = vsel %vm2541, %v2477, -1e+30
          %v2558 = vsel %vm2542, %v2478, -1e+30
          %v2559 = vsel %vm2543, %v2479, -1e+30
          %2560 = vmax.xlane.f32.xlu0 %v2544
          %v2561 = vpop.xlane.xlu0 %2560
          %2562 = vmax.xlane.f32.xlu0 %v2545
          %v2563 = vpop.xlane.xlu0 %2562
          %2564 = vmax.xlane.f32.xlu0 %v2546
          %v2565 = vpop.xlane.xlu0 %2564
          %2566 = vmax.xlane.f32.xlu0 %v2547
          %v2567 = vpop.xlane.xlu0 %2566
          %2568 = vmax.xlane.f32.xlu0 %v2548
          %v2569 = vpop.xlane.xlu0 %2568
          %2570 = vmax.xlane.f32.xlu0 %v2549
          %v2571 = vpop.xlane.xlu0 %2570
          %2572 = vmax.xlane.f32.xlu0 %v2550
          %v2573 = vpop.xlane.xlu0 %2572
          %2574 = vmax.xlane.f32.xlu0 %v2551
          %v2575 = vpop.xlane.xlu0 %2574
          %2576 = vmax.xlane.f32.xlu0 %v2552
          %v2577 = vpop.xlane.xlu0 %2576
          %2578 = vmax.xlane.f32.xlu0 %v2553
          %v2579 = vpop.xlane.xlu0 %2578
          %2580 = vmax.xlane.f32.xlu0 %v2554
          %v2581 = vpop.xlane.xlu0 %2580
          %2582 = vmax.xlane.f32.xlu0 %v2555
          %v2583 = vpop.xlane.xlu0 %2582
          %2584 = vmax.xlane.f32.xlu0 %v2556
          %v2585 = vpop.xlane.xlu0 %2584
          %2586 = vmax.xlane.f32.xlu0 %v2557
          %v2587 = vpop.xlane.xlu0 %2586
          %2588 = vmax.xlane.f32.xlu0 %v2558
          %v2589 = vpop.xlane.xlu0 %2588
          %2590 = vmax.xlane.f32.xlu0 %v2559
          %v2591 = vpop.xlane.xlu0 %2590
          %v2592 = vsub.f32 %v2544, %v2561
          %v2593 = vsub.f32 %v2545, %v2563
          %v2594 = vsub.f32 %v2546, %v2565
          %v2595 = vsub.f32 %v2547, %v2567
          %v2596 = vsub.f32 %v2548, %v2569
          %v2597 = vsub.f32 %v2549, %v2571
          %v2598 = vsub.f32 %v2550, %v2573
          %v2599 = vsub.f32 %v2551, %v2575
          %v2600 = vsub.f32 %v2552, %v2577
          %v2601 = vsub.f32 %v2553, %v2579
          %v2602 = vsub.f32 %v2554, %v2581
          %v2603 = vsub.f32 %v2555, %v2583
          %v2604 = vsub.f32 %v2556, %v2585
          %v2605 = vsub.f32 %v2557, %v2587
          %v2606 = vsub.f32 %v2558, %v2589
          %v2607 = vsub.f32 %v2559, %v2591
          %v2608 = vmul.f32 %v2592, 1.442695
          %v2609 = vpow.pop %v2608
          %v2610 = vmul.f32 %v2593, 1.442695
          %v2611 = vpow.pop %v2610
          %v2612 = vmul.f32 %v2594, 1.442695
          %v2613 = vpow.pop %v2612
          %v2614 = vmul.f32 %v2595, 1.442695
          %v2615 = vpow.pop %v2614
          %v2616 = vmul.f32 %v2596, 1.442695
          %v2617 = vpow.pop %v2616
          %v2618 = vmul.f32 %v2597, 1.442695
          %v2619 = vpow.pop %v2618
          %v2620 = vmul.f32 %v2598, 1.442695
          %v2621 = vpow.pop %v2620
          %v2622 = vmul.f32 %v2599, 1.442695
          %v2623 = vpow.pop %v2622
          %v2624 = vmul.f32 %v2600, 1.442695
          %v2625 = vpow.pop %v2624
          %v2626 = vmul.f32 %v2601, 1.442695
          %v2627 = vpow.pop %v2626
          %v2628 = vmul.f32 %v2602, 1.442695
          %v2629 = vpow.pop %v2628
          %v2630 = vmul.f32 %v2603, 1.442695
          %v2631 = vpow.pop %v2630
          %v2632 = vmul.f32 %v2604, 1.442695
          %v2633 = vpow.pop %v2632
          %v2634 = vmul.f32 %v2605, 1.442695
          %v2635 = vpow.pop %v2634
          %v2636 = vmul.f32 %v2606, 1.442695
          %v2637 = vpow.pop %v2636
          %v2638 = vmul.f32 %v2607, 1.442695
          %v2639 = vpow.pop %v2638
          %v2640 = vsel %vm2528, %v2609, 0.0
          %v2641 = vsel %vm2529, %v2611, 0.0
          %v2642 = vsel %vm2530, %v2613, 0.0
          %v2643 = vsel %vm2531, %v2615, 0.0
          %v2644 = vsel %vm2532, %v2617, 0.0
          %v2645 = vsel %vm2533, %v2619, 0.0
          %v2646 = vsel %vm2534, %v2621, 0.0
          %v2647 = vsel %vm2535, %v2623, 0.0
          %v2648 = vsel %vm2536, %v2625, 0.0
          %v2649 = vsel %vm2537, %v2627, 0.0
          %v2650 = vsel %vm2538, %v2629, 0.0
          %v2651 = vsel %vm2539, %v2631, 0.0
          %v2652 = vsel %vm2540, %v2633, 0.0
          %v2653 = vsel %vm2541, %v2635, 0.0
          %v2654 = vsel %vm2542, %v2637, 0.0
          %v2655 = vsel %vm2543, %v2639, 0.0
          %v2656 = vpack.c.bf16 %v2641, %v2640
          %v2657 = vpack.c.bf16 %v2643, %v2642
          %v2658 = vpack.c.bf16 %v2645, %v2644
          %v2659 = vpack.c.bf16 %v2647, %v2646
          %v2660 = vpack.c.bf16 %v2649, %v2648
          %v2661 = vpack.c.bf16 %v2651, %v2650
          %v2662 = vpack.c.bf16 %v2653, %v2652
          %v2663 = vpack.c.bf16 %v2655, %v2654
          %v2664 = vld [vmem:[#allocation6] sm:$0xf]
          %v2665 = vld [vmem:[#allocation6 + $0x4] sm:$0xf]
          %v2666 = vld [vmem:[#allocation6 + $0x8] sm:$0xf]
          %v2667 = vld [vmem:[#allocation6 + $0xc] sm:$0xf]
          %v2668 = vld [vmem:[#allocation6 + $0x10] sm:$0xf]
          %v2669 = vld [vmem:[#allocation6 + $0x14] sm:$0xf]
          %v2670 = vld [vmem:[#allocation6 + $0x18] sm:$0xf]
          %v2671 = vld [vmem:[#allocation6 + $0x1c] sm:$0xf]
          %v2672 = vld [vmem:[#allocation6 + $0x20] sm:$0xf]
          %v2673 = vld [vmem:[#allocation6 + $0x24] sm:$0xf]
          %v2674 = vld [vmem:[#allocation6 + $0x28] sm:$0xf]
          %v2675 = vld [vmem:[#allocation6 + $0x2c] sm:$0xf]
          %v2676 = vld [vmem:[#allocation6 + $0x30] sm:$0xf]
          %v2677 = vld [vmem:[#allocation6 + $0x34] sm:$0xf]
          %v2678 = vld [vmem:[#allocation6 + $0x38] sm:$0xf]
          %v2679 = vld [vmem:[#allocation6 + $0x3c] sm:$0xf]
          %v2696 = vunpack.c.l.b16 %v2664
          %v2697 = vunpack.c.l.b16 %v2665
          %v2698 = vunpack.c.l.b16 %v2666
          %v2699 = vunpack.c.l.b16 %v2667
          %v2700 = vunpack.c.l.b16 %v2668
          %v2701 = vunpack.c.l.b16 %v2669
          %v2702 = vunpack.c.l.b16 %v2670
          %v2703 = vunpack.c.l.b16 %v2671
          %v2704 = vunpack.c.l.b16 %v2672
          %v2705 = vunpack.c.l.b16 %v2673
          %v2706 = vunpack.c.l.b16 %v2674
          %v2707 = vunpack.c.l.b16 %v2675
          %v2708 = vunpack.c.l.b16 %v2676
          %v2709 = vunpack.c.l.b16 %v2677
          %v2710 = vunpack.c.l.b16 %v2678
          %v2711 = vunpack.c.l.b16 %v2679
          %v2712 = vpack.c.b16 %v2697, %v2696
          %v2713 = vpack.c.b16 %v2699, %v2698
          %v2714 = vpack.c.b16 %v2701, %v2700
          %v2715 = vpack.c.b16 %v2703, %v2702
          %v2716 = vpack.c.b16 %v2705, %v2704
          %v2717 = vpack.c.b16 %v2707, %v2706
          %v2718 = vpack.c.b16 %v2709, %v2708
          %v2719 = vpack.c.b16 %v2711, %v2710
          %2728 = vmatprep.subr.bf16.mxu0 0
          %2729 = vmatpush1.bf16.msra.mxu0 %v2719
          %2730 = vmatprep.subr.bf16.mxu0 0
          %2731 = vmatpush1.bf16.msra.mxu0 %v2718
          %2732 = vmatprep.subr.bf16.mxu0 0
          %2733 = vmatpush1.bf16.msra.mxu0 %v2717
          %2734 = vmatprep.subr.bf16.mxu0 0
          %2735 = vmatpush1.bf16.msra.mxu0 %v2716
          %2736 = vmatprep.subr.bf16.mxu0 0
          %2737 = vmatpush1.bf16.msra.mxu0 %v2715
          %2738 = vmatprep.subr.bf16.mxu0 0
          %2739 = vmatpush1.bf16.msra.mxu0 %v2714
          %2740 = vmatprep.subr.bf16.mxu0 0
          %2741 = vmatpush1.bf16.msra.mxu0 %v2713
          %2742 = vmatprep.subr.bf16.mxu0 0
          %2743 = vmatpush1.bf16.msra.mxu0 %v2712
          %2744 = vmatprep.subr.bf16.mxu0 0
          %2745 = vmatpush2.bf16.msra.mxu0 0
          %2746 = vmatprep.subr.bf16.mxu0 0
          %2747 = vmatpush2.bf16.msra.mxu0 0
          %2748 = vmatprep.subr.bf16.mxu0 0
          %2749 = vmatpush2.bf16.msra.mxu0 0
          %2750 = vmatprep.subr.bf16.mxu0 0
          %2751 = vmatpush2.bf16.msra.mxu0 0
          %2752 = vmatprep.subr.bf16.mxu0 0
          %2753 = vmatpush2.bf16.msra.mxu0 0
          %2754 = vmatprep.subr.bf16.mxu0 0
          %2755 = vmatpush2.bf16.msra.mxu0 0
          %2756 = vmatprep.subr.bf16.mxu0 0
          %2757 = vmatpush2.bf16.msra.mxu0 0
          %2758 = vmatprep.subr.bf16.mxu0 0
          %2759 = vmatpush2.bf16.msra.mxu0 0
          %2760 = vmatprep.mubr.bf16.mxu0 0
          %2761 = vmatmul.mubr.bf16.gmra.mxu0 %v2656
          %v2762 = vpop.f32.mrf.mxu0
          %v2763 = vadd.f32 0.0, %v2762
          %v2764 = vpop.f32.mrf.mxu0
          %v2765 = vpop.f32.mrf.mxu0
          %v2766 = vadd.f32 0.0, %v2765
          %v2767 = vpop.f32.mrf.mxu0
          %2768 = vmatprep.mubr.bf16.mxu0 0
          %2769 = vmatmul.mubr.bf16.gmra.mxu0 %v2657
          %v2770 = vpop.f32.mrf.mxu0
          %v2771 = vadd.f32 0.0, %v2770
          %v2772 = vpop.f32.mrf.mxu0
          %v2773 = vpop.f32.mrf.mxu0
          %v2774 = vadd.f32 0.0, %v2773
          %v2775 = vpop.f32.mrf.mxu0
          %2776 = vmatprep.mubr.bf16.mxu0 0
          %2777 = vmatmul.mubr.bf16.gmra.mxu0 %v2658
          %v2778 = vpop.f32.mrf.mxu0
          %v2779 = vadd.f32 0.0, %v2778
          %v2780 = vpop.f32.mrf.mxu0
          %v2781 = vpop.f32.mrf.mxu0
          %v2782 = vadd.f32 0.0, %v2781
          %v2783 = vpop.f32.mrf.mxu0
          %2784 = vmatprep.mubr.bf16.mxu0 0
          %2785 = vmatmul.mubr.bf16.gmra.mxu0 %v2659
          %v2786 = vpop.f32.mrf.mxu0
          %v2787 = vadd.f32 0.0, %v2786
          %v2788 = vpop.f32.mrf.mxu0
          %v2789 = vpop.f32.mrf.mxu0
          %v2790 = vadd.f32 0.0, %v2789
          %v2791 = vpop.f32.mrf.mxu0
          %2792 = vmatprep.mubr.bf16.mxu0 0
          %2793 = vmatmul.mubr.bf16.gmra.mxu0 %v2660
          %v2794 = vpop.f32.mrf.mxu0
          %v2795 = vadd.f32 0.0, %v2794
          %v2796 = vpop.f32.mrf.mxu0
          %v2797 = vpop.f32.mrf.mxu0
          %v2798 = vadd.f32 0.0, %v2797
          %v2799 = vpop.f32.mrf.mxu0
          %2800 = vmatprep.mubr.bf16.mxu0 0
          %2801 = vmatmul.mubr.bf16.gmra.mxu0 %v2661
          %v2802 = vpop.f32.mrf.mxu0
          %v2803 = vadd.f32 0.0, %v2802
          %v2804 = vpop.f32.mrf.mxu0
          %v2805 = vpop.f32.mrf.mxu0
          %v2806 = vadd.f32 0.0, %v2805
          %v2807 = vpop.f32.mrf.mxu0
          %2808 = vmatprep.mubr.bf16.mxu0 0
          %2809 = vmatmul.mubr.bf16.gmra.mxu0 %v2662
          %v2810 = vpop.f32.mrf.mxu0
          %v2811 = vadd.f32 0.0, %v2810
          %v2812 = vpop.f32.mrf.mxu0
          %v2813 = vpop.f32.mrf.mxu0
          %v2814 = vadd.f32 0.0, %v2813
          %v2815 = vpop.f32.mrf.mxu0
          %2816 = vmatprep.mubr.bf16.mxu0 0
          %2817 = vmatmul.mubr.bf16.gmra.mxu0 %v2663
          %v2818 = vpop.f32.mrf.mxu0
          %v2819 = vadd.f32 0.0, %v2818
          %v2820 = vpop.f32.mrf.mxu0
          %v2821 = vpop.f32.mrf.mxu0
          %v2822 = vadd.f32 0.0, %v2821
          %v2823 = vpop.f32.mrf.mxu0
          %2824 = vdwg.mxu0
          %vm2825 = vcmp.gt.f32.partialorder %v2763, 0.0
          %vm2826 = vcmp.gt.f32.partialorder %v2766, 0.0
          %vm2827 = vcmp.gt.f32.partialorder %v2771, 0.0
          %vm2828 = vcmp.gt.f32.partialorder %v2774, 0.0
          %vm2829 = vcmp.gt.f32.partialorder %v2779, 0.0
          %vm2830 = vcmp.gt.f32.partialorder %v2782, 0.0
          %vm2831 = vcmp.gt.f32.partialorder %v2787, 0.0
          %vm2832 = vcmp.gt.f32.partialorder %v2790, 0.0
          %vm2833 = vcmp.gt.f32.partialorder %v2795, 0.0
          %vm2834 = vcmp.gt.f32.partialorder %v2798, 0.0
          %vm2835 = vcmp.gt.f32.partialorder %v2803, 0.0
          %vm2836 = vcmp.gt.f32.partialorder %v2806, 0.0
          %vm2837 = vcmp.gt.f32.partialorder %v2811, 0.0
          %vm2838 = vcmp.gt.f32.partialorder %v2814, 0.0
          %vm2839 = vcmp.gt.f32.partialorder %v2819, 0.0
          %vm2840 = vcmp.gt.f32.partialorder %v2822, 0.0
          %v2841 = vsel %vm2825, %v2763, 1.0
          %v2842 = vsel %vm2826, %v2766, 1.0
          %v2843 = vsel %vm2827, %v2771, 1.0
          %v2844 = vsel %vm2828, %v2774, 1.0
          %v2845 = vsel %vm2829, %v2779, 1.0
          %v2846 = vsel %vm2830, %v2782, 1.0
          %v2847 = vsel %vm2831, %v2787, 1.0
          %v2848 = vsel %vm2832, %v2790, 1.0
          %v2849 = vsel %vm2833, %v2795, 1.0
          %v2850 = vsel %vm2834, %v2798, 1.0
          %v2851 = vsel %vm2835, %v2803, 1.0
          %v2852 = vsel %vm2836, %v2806, 1.0
          %v2853 = vsel %vm2837, %v2811, 1.0
          %v2854 = vsel %vm2838, %v2814, 1.0
          %v2855 = vsel %vm2839, %v2819, 1.0
          %v2856 = vsel %vm2840, %v2822, 1.0
          %v2857 = vrcp.pop %v2841
          %v2858 = vrcp.pop %v2842
          %v2859 = vrcp.pop %v2843
          %v2860 = vrcp.pop %v2844
          %v2861 = vrcp.pop %v2845
          %v2862 = vrcp.pop %v2846
          %v2863 = vrcp.pop %v2847
          %v2864 = vrcp.pop %v2848
          %v2865 = vrcp.pop %v2849
          %v2866 = vrcp.pop %v2850
          %v2867 = vrcp.pop %v2851
          %v2868 = vrcp.pop %v2852
          %v2869 = vrcp.pop %v2853
          %v2870 = vrcp.pop %v2854
          %v2871 = vrcp.pop %v2855
          %v2872 = vrcp.pop %v2856
          %2874 = vset.pattern.permute.xlu0 18
          %2875 = vperm.xlu0 %2874, %v2857
          %v2876 = vpop.permute.xlu0 %2875
          %2879 = vset.pattern.permute.xlu0 18
          %2880 = vperm.xlu0 %2879, %v2858
          %v2881 = vpop.permute.xlu0 %2880
          %2884 = vset.pattern.permute.xlu0 18
          %2885 = vperm.xlu0 %2884, %v2859
          %v2886 = vpop.permute.xlu0 %2885
          %2889 = vset.pattern.permute.xlu0 18
          %2890 = vperm.xlu0 %2889, %v2860
          %v2891 = vpop.permute.xlu0 %2890
          %2894 = vset.pattern.permute.xlu0 18
          %2895 = vperm.xlu0 %2894, %v2861
          %v2896 = vpop.permute.xlu0 %2895
          %2899 = vset.pattern.permute.xlu0 18
          %2900 = vperm.xlu0 %2899, %v2862
          %v2901 = vpop.permute.xlu0 %2900
          %2904 = vset.pattern.permute.xlu0 18
          %2905 = vperm.xlu0 %2904, %v2863
          %v2906 = vpop.permute.xlu0 %2905
          %2909 = vset.pattern.permute.xlu0 18
          %2910 = vperm.xlu0 %2909, %v2864
          %v2911 = vpop.permute.xlu0 %2910
          %2914 = vset.pattern.permute.xlu0 18
          %2915 = vperm.xlu0 %2914, %v2865
          %v2916 = vpop.permute.xlu0 %2915
          %2919 = vset.pattern.permute.xlu0 18
          %2920 = vperm.xlu0 %2919, %v2866
          %v2921 = vpop.permute.xlu0 %2920
          %2924 = vset.pattern.permute.xlu0 18
          %2925 = vperm.xlu0 %2924, %v2867
          %v2926 = vpop.permute.xlu0 %2925
          %2929 = vset.pattern.permute.xlu0 18
          %2930 = vperm.xlu0 %2929, %v2868
          %v2931 = vpop.permute.xlu0 %2930
          %2934 = vset.pattern.permute.xlu0 18
          %2935 = vperm.xlu0 %2934, %v2869
          %v2936 = vpop.permute.xlu0 %2935
          %2939 = vset.pattern.permute.xlu0 18
          %2940 = vperm.xlu0 %2939, %v2870
          %v2941 = vpop.permute.xlu0 %2940
          %2944 = vset.pattern.permute.xlu0 18
          %2945 = vperm.xlu0 %2944, %v2871
          %v2946 = vpop.permute.xlu0 %2945
          %2949 = vset.pattern.permute.xlu0 18
          %2950 = vperm.xlu0 %2949, %v2872
          %v2951 = vpop.permute.xlu0 %2950
          %v2953 = vmul.f32 %v2763, %v2876
          %v2954 = vmul.f32 %v2766, %v2881
          %v2955 = vmul.f32 %v2771, %v2886
          %v2956 = vmul.f32 %v2774, %v2891
          %v2957 = vmul.f32 %v2779, %v2896
          %v2958 = vmul.f32 %v2782, %v2901
          %v2959 = vmul.f32 %v2787, %v2906
          %v2960 = vmul.f32 %v2790, %v2911
          %v2961 = vmul.f32 %v2795, %v2916
          %v2962 = vmul.f32 %v2798, %v2921
          %v2963 = vmul.f32 %v2803, %v2926
          %v2964 = vmul.f32 %v2806, %v2931
          %v2965 = vmul.f32 %v2811, %v2936
          %v2966 = vmul.f32 %v2814, %v2941
          %v2967 = vmul.f32 %v2819, %v2946
          %v2968 = vmul.f32 %v2822, %v2951
          %v2969 = vld [vmem:[%s8] sm:$0x1]
          %v2971 = vlaneseq
          %v2972 = vshrl.u32 %v2971, 7
          %v2973 = vsub.s32 0, %v2972
          %v2974 = vrot.slane %v2969, %v2973
          %v2976 = vadd.f32 %v2953, %v2974
          %v2977 = vadd.f32 %v2954, %v2974
          %v2978 = vadd.f32 %v2955, %v2974
          %v2979 = vadd.f32 %v2956, %v2974
          %v2980 = vadd.f32 %v2957, %v2974
          %v2981 = vadd.f32 %v2958, %v2974
          %v2982 = vadd.f32 %v2959, %v2974
          %v2983 = vadd.f32 %v2960, %v2974
          %v2984 = vadd.f32 %v2961, %v2974
          %v2985 = vadd.f32 %v2962, %v2974
          %v2986 = vadd.f32 %v2963, %v2974
          %v2987 = vadd.f32 %v2964, %v2974
          %v2988 = vadd.f32 %v2965, %v2974
          %v2989 = vadd.f32 %v2966, %v2974
          %v2990 = vadd.f32 %v2967, %v2974
          %v2991 = vadd.f32 %v2968, %v2974
          %v2992 = vmax.f32 %v2976, 0.0
          %v2993 = vmax.f32 %v2977, 0.0
          %v2994 = vmax.f32 %v2978, 0.0
          %v2995 = vmax.f32 %v2979, 0.0
          %v2996 = vmax.f32 %v2980, 0.0
          %v2997 = vmax.f32 %v2981, 0.0
          %v2998 = vmax.f32 %v2982, 0.0
          %v2999 = vmax.f32 %v2983, 0.0
          %v3000 = vmax.f32 %v2984, 0.0
          %v3001 = vmax.f32 %v2985, 0.0
          %v3002 = vmax.f32 %v2986, 0.0
          %v3003 = vmax.f32 %v2987, 0.0
          %v3004 = vmax.f32 %v2988, 0.0
          %v3005 = vmax.f32 %v2989, 0.0
          %v3006 = vmax.f32 %v2990, 0.0
          %v3007 = vmax.f32 %v2991, 0.0
          %v3008 = vxor.u32 %v2992, 2147483648
          %v3009 = vxor.u32 %v2993, 2147483648
          %v3010 = vxor.u32 %v2994, 2147483648
          %v3011 = vxor.u32 %v2995, 2147483648
          %v3012 = vxor.u32 %v2996, 2147483648
          %v3013 = vxor.u32 %v2997, 2147483648
          %v3014 = vxor.u32 %v2998, 2147483648
          %v3015 = vxor.u32 %v2999, 2147483648
          %v3016 = vxor.u32 %v3000, 2147483648
          %v3017 = vxor.u32 %v3001, 2147483648
          %v3018 = vxor.u32 %v3002, 2147483648
          %v3019 = vxor.u32 %v3003, 2147483648
          %v3020 = vxor.u32 %v3004, 2147483648
          %v3021 = vxor.u32 %v3005, 2147483648
          %v3022 = vxor.u32 %v3006, 2147483648
          %v3023 = vxor.u32 %v3007, 2147483648
          %v3024 = vmul.f32 %v3008, 1.442695
          %v3025 = vpow.pop %v3024
          %v3026 = vmul.f32 %v3009, 1.442695
          %v3027 = vpow.pop %v3026
          %v3028 = vmul.f32 %v3010, 1.442695
          %v3029 = vpow.pop %v3028
          %v3030 = vmul.f32 %v3011, 1.442695
          %v3031 = vpow.pop %v3030
          %v3032 = vmul.f32 %v3012, 1.442695
          %v3033 = vpow.pop %v3032
          %v3034 = vmul.f32 %v3013, 1.442695
          %v3035 = vpow.pop %v3034
          %v3036 = vmul.f32 %v3014, 1.442695
          %v3037 = vpow.pop %v3036
          %v3038 = vmul.f32 %v3015, 1.442695
          %v3039 = vpow.pop %v3038
          %v3040 = vmul.f32 %v3016, 1.442695
          %v3041 = vpow.pop %v3040
          %v3042 = vmul.f32 %v3017, 1.442695
          %v3043 = vpow.pop %v3042
          %v3044 = vmul.f32 %v3018, 1.442695
          %v3045 = vpow.pop %v3044
          %v3046 = vmul.f32 %v3019, 1.442695
          %v3047 = vpow.pop %v3046
          %v3048 = vmul.f32 %v3020, 1.442695
          %v3049 = vpow.pop %v3048
          %v3050 = vmul.f32 %v3021, 1.442695
          %v3051 = vpow.pop %v3050
          %v3052 = vmul.f32 %v3022, 1.442695
          %v3053 = vpow.pop %v3052
          %v3054 = vmul.f32 %v3023, 1.442695
          %v3055 = vpow.pop %v3054
          %v3056 = vadd.f32 %v3025, 1.0
          %v3057 = vadd.f32 %v3027, 1.0
          %v3058 = vadd.f32 %v3029, 1.0
          %v3059 = vadd.f32 %v3031, 1.0
          %v3060 = vadd.f32 %v3033, 1.0
          %v3061 = vadd.f32 %v3035, 1.0
          %v3062 = vadd.f32 %v3037, 1.0
          %v3063 = vadd.f32 %v3039, 1.0
          %v3064 = vadd.f32 %v3041, 1.0
          %v3065 = vadd.f32 %v3043, 1.0
          %v3066 = vadd.f32 %v3045, 1.0
          %v3067 = vadd.f32 %v3047, 1.0
          %v3068 = vadd.f32 %v3049, 1.0
          %v3069 = vadd.f32 %v3051, 1.0
          %v3070 = vadd.f32 %v3053, 1.0
          %v3071 = vadd.f32 %v3055, 1.0
          %v3072 = vrcp.pop %v3056
          %v3073 = vmul.f32 1.0, %v3072
          %v3074 = vrcp.pop %v3057
          %v3075 = vmul.f32 1.0, %v3074
          %v3076 = vrcp.pop %v3058
          %v3077 = vmul.f32 1.0, %v3076
          %v3078 = vrcp.pop %v3059
          %v3079 = vmul.f32 1.0, %v3078
          %v3080 = vrcp.pop %v3060
          %v3081 = vmul.f32 1.0, %v3080
          %v3082 = vrcp.pop %v3061
          %v3083 = vmul.f32 1.0, %v3082
          %v3084 = vrcp.pop %v3062
          %v3085 = vmul.f32 1.0, %v3084
          %v3086 = vrcp.pop %v3063
          %v3087 = vmul.f32 1.0, %v3086
          %v3088 = vrcp.pop %v3064
          %v3089 = vmul.f32 1.0, %v3088
          %v3090 = vrcp.pop %v3065
          %v3091 = vmul.f32 1.0, %v3090
          %v3092 = vrcp.pop %v3066
          %v3093 = vmul.f32 1.0, %v3092
          %v3094 = vrcp.pop %v3067
          %v3095 = vmul.f32 1.0, %v3094
          %v3096 = vrcp.pop %v3068
          %v3097 = vmul.f32 1.0, %v3096
          %v3098 = vrcp.pop %v3069
          %v3099 = vmul.f32 1.0, %v3098
          %v3100 = vrcp.pop %v3070
          %v3101 = vmul.f32 1.0, %v3100
          %v3102 = vrcp.pop %v3071
          %v3103 = vmul.f32 1.0, %v3102
          %v3104 = vld [vmem:[#allocation17] sm:$0xff]
          %v3105 = vld [vmem:[#allocation17 + $0x8] sm:$0xff]
          %v3106 = vld [vmem:[#allocation17 + $0x10] sm:$0xff]
          %v3107 = vld [vmem:[#allocation17 + $0x18] sm:$0xff]
          %v3108 = vld [vmem:[#allocation17 + $0x20] sm:$0xff]
          %v3109 = vld [vmem:[#allocation17 + $0x28] sm:$0xff]
          %v3110 = vld [vmem:[#allocation17 + $0x30] sm:$0xff]
          %v3111 = vld [vmem:[#allocation17 + $0x38] sm:$0xff]
          %v3112 = vld [vmem:[#allocation17 + $0x40] sm:$0xff]
          %v3113 = vld [vmem:[#allocation17 + $0x48] sm:$0xff]
          %v3114 = vld [vmem:[#allocation17 + $0x50] sm:$0xff]
          %v3115 = vld [vmem:[#allocation17 + $0x58] sm:$0xff]
          %v3116 = vld [vmem:[#allocation17 + $0x60] sm:$0xff]
          %v3117 = vld [vmem:[#allocation17 + $0x68] sm:$0xff]
          %v3118 = vld [vmem:[#allocation17 + $0x70] sm:$0xff]
          %v3119 = vld [vmem:[#allocation17 + $0x78] sm:$0xff]
          %v3120 = vld [vmem:[%s10] sm:$0x1]
          %v3122 = vlaneseq
          %v3123 = vshrl.u32 %v3122, 7
          %v3124 = vsub.s32 0, %v3123
          %v3125 = vrot.slane %v3120, %v3124
          %3127 = vmatprep.subr.mxu0 0.0
          %3128 = vmatpush1.msra.mxu0 %v3119
          %3129 = vmatprep.subr.mxu0 0.0
          %3130 = vmatpush1.msra.mxu0 %v3118
          %3131 = vmatprep.subr.mxu0 0.0
          %3132 = vmatpush1.msra.mxu0 %v3117
          %3133 = vmatprep.subr.mxu0 0.0
          %3134 = vmatpush1.msra.mxu0 %v3116
          %3135 = vmatprep.subr.mxu0 0.0
          %3136 = vmatpush1.msra.mxu0 %v3115
          %3137 = vmatprep.subr.mxu0 0.0
          %3138 = vmatpush1.msra.mxu0 %v3114
          %3139 = vmatprep.subr.mxu0 0.0
          %3140 = vmatpush1.msra.mxu0 %v3113
          %3141 = vmatprep.subr.mxu0 0.0
          %3142 = vmatpush1.msra.mxu0 %v3112
          %3143 = vmatprep.subr.mxu0 0.0
          %3144 = vmatpush1.msra.mxu0 %v3111
          %3145 = vmatprep.subr.mxu0 0.0
          %3146 = vmatpush1.msra.mxu0 %v3110
          %3147 = vmatprep.subr.mxu0 0.0
          %3148 = vmatpush1.msra.mxu0 %v3109
          %3149 = vmatprep.subr.mxu0 0.0
          %3150 = vmatpush1.msra.mxu0 %v3108
          %3151 = vmatprep.subr.mxu0 0.0
          %3152 = vmatpush1.msra.mxu0 %v3107
          %3153 = vmatprep.subr.mxu0 0.0
          %3154 = vmatpush1.msra.mxu0 %v3106
          %3155 = vmatprep.subr.mxu0 0.0
          %3156 = vmatpush1.msra.mxu0 %v3105
          %3157 = vmatprep.subr.mxu0 0.0
          %3158 = vmatpush1.msra.mxu0 %v3104
          %3159 = vmatprep.subr.mxu0 0.0
          %3160 = vmatpush2.msra.mxu0 0.0
          %3161 = vmatprep.subr.mxu0 0.0
          %3162 = vmatpush2.msra.mxu0 0.0
          %3163 = vmatprep.subr.mxu0 0.0
          %3164 = vmatpush2.msra.mxu0 0.0
          %3165 = vmatprep.subr.mxu0 0.0
          %3166 = vmatpush2.msra.mxu0 0.0
          %3167 = vmatprep.subr.mxu0 0.0
          %3168 = vmatpush2.msra.mxu0 0.0
          %3169 = vmatprep.subr.mxu0 0.0
          %3170 = vmatpush2.msra.mxu0 0.0
          %3171 = vmatprep.subr.mxu0 0.0
          %3172 = vmatpush2.msra.mxu0 0.0
          %3173 = vmatprep.subr.mxu0 0.0
          %3174 = vmatpush2.msra.mxu0 0.0
          %3175 = vmatprep.subr.mxu0 0.0
          %3176 = vmatpush2.msra.mxu0 0.0
          %3177 = vmatprep.subr.mxu0 0.0
          %3178 = vmatpush2.msra.mxu0 0.0
          %3179 = vmatprep.subr.mxu0 0.0
          %3180 = vmatpush2.msra.mxu0 0.0
          %3181 = vmatprep.subr.mxu0 0.0
          %3182 = vmatpush2.msra.mxu0 0.0
          %3183 = vmatprep.subr.mxu0 0.0
          %3184 = vmatpush2.msra.mxu0 0.0
          %3185 = vmatprep.subr.mxu0 0.0
          %3186 = vmatpush2.msra.mxu0 0.0
          %3187 = vmatprep.subr.mxu0 0.0
          %3188 = vmatpush2.msra.mxu0 0.0
          %3189 = vmatprep.subr.mxu0 0.0
          %3190 = vmatpush2.msra.mxu0 0.0
          %3191 = vmatprep.mubr.f32.mxu0 0.0
          %3192 = vmatmul.mubr.f32.gmra.mxu0 %v3073
          %v3193 = vpop.f32.mrf.mxu0
          %v3194 = vadd.f32 %v3125, %v3193
          %v3195 = vpop.f32.mrf.mxu0
          %3196 = vmatprep.mubr.f32.mxu0 0.0
          %3197 = vmatmul.mubr.f32.gmra.mxu0 %v3075
          %v3198 = vpop.f32.mrf.mxu0
          %v3199 = vadd.f32 %v3125, %v3198
          %v3200 = vpop.f32.mrf.mxu0
          %3201 = vmatprep.mubr.f32.mxu0 0.0
          %3202 = vmatmul.mubr.f32.gmra.mxu0 %v3077
          %v3203 = vpop.f32.mrf.mxu0
          %v3204 = vadd.f32 %v3125, %v3203
          %v3205 = vpop.f32.mrf.mxu0
          %3206 = vmatprep.mubr.f32.mxu0 0.0
          %3207 = vmatmul.mubr.f32.gmra.mxu0 %v3079
          %v3208 = vpop.f32.mrf.mxu0
          %v3209 = vadd.f32 %v3125, %v3208
          %v3210 = vpop.f32.mrf.mxu0
          %3211 = vmatprep.mubr.f32.mxu0 0.0
          %3212 = vmatmul.mubr.f32.gmra.mxu0 %v3081
          %v3213 = vpop.f32.mrf.mxu0
          %v3214 = vadd.f32 %v3125, %v3213
          %v3215 = vpop.f32.mrf.mxu0
          %3216 = vmatprep.mubr.f32.mxu0 0.0
          %3217 = vmatmul.mubr.f32.gmra.mxu0 %v3083
          %v3218 = vpop.f32.mrf.mxu0
          %v3219 = vadd.f32 %v3125, %v3218
          %v3220 = vpop.f32.mrf.mxu0
          %3221 = vmatprep.mubr.f32.mxu0 0.0
          %3222 = vmatmul.mubr.f32.gmra.mxu0 %v3085
          %v3223 = vpop.f32.mrf.mxu0
          %v3224 = vadd.f32 %v3125, %v3223
          %v3225 = vpop.f32.mrf.mxu0
          %3226 = vmatprep.mubr.f32.mxu0 0.0
          %3227 = vmatmul.mubr.f32.gmra.mxu0 %v3087
          %v3228 = vpop.f32.mrf.mxu0
          %v3229 = vadd.f32 %v3125, %v3228
          %v3230 = vpop.f32.mrf.mxu0
          %3231 = vmatprep.mubr.f32.mxu0 0.0
          %3232 = vmatmul.mubr.f32.gmra.mxu0 %v3089
          %v3233 = vpop.f32.mrf.mxu0
          %v3234 = vadd.f32 %v3125, %v3233
          %v3235 = vpop.f32.mrf.mxu0
          %3236 = vmatprep.mubr.f32.mxu0 0.0
          %3237 = vmatmul.mubr.f32.gmra.mxu0 %v3091
          %v3238 = vpop.f32.mrf.mxu0
          %v3239 = vadd.f32 %v3125, %v3238
          %v3240 = vpop.f32.mrf.mxu0
          %3241 = vmatprep.mubr.f32.mxu0 0.0
          %3242 = vmatmul.mubr.f32.gmra.mxu0 %v3093
          %v3243 = vpop.f32.mrf.mxu0
          %v3244 = vadd.f32 %v3125, %v3243
          %v3245 = vpop.f32.mrf.mxu0
          %3246 = vmatprep.mubr.f32.mxu0 0.0
          %3247 = vmatmul.mubr.f32.gmra.mxu0 %v3095
          %v3248 = vpop.f32.mrf.mxu0
          %v3249 = vadd.f32 %v3125, %v3248
          %v3250 = vpop.f32.mrf.mxu0
          %3251 = vmatprep.mubr.f32.mxu0 0.0
          %3252 = vmatmul.mubr.f32.gmra.mxu0 %v3097
          %v3253 = vpop.f32.mrf.mxu0
          %v3254 = vadd.f32 %v3125, %v3253
          %v3255 = vpop.f32.mrf.mxu0
          %3256 = vmatprep.mubr.f32.mxu0 0.0
          %3257 = vmatmul.mubr.f32.gmra.mxu0 %v3099
          %v3258 = vpop.f32.mrf.mxu0
          %v3259 = vadd.f32 %v3125, %v3258
          %v3260 = vpop.f32.mrf.mxu0
          %3261 = vmatprep.mubr.f32.mxu0 0.0
          %3262 = vmatmul.mubr.f32.gmra.mxu0 %v3101
          %v3263 = vpop.f32.mrf.mxu0
          %v3264 = vadd.f32 %v3125, %v3263
          %v3265 = vpop.f32.mrf.mxu0
          %3266 = vmatprep.mubr.f32.mxu0 0.0
          %3267 = vmatmul.mubr.f32.gmra.mxu0 %v3103
          %v3268 = vpop.f32.mrf.mxu0
          %v3269 = vadd.f32 %v3125, %v3268
          %v3270 = vpop.f32.mrf.mxu0
          %3271 = vdwg.mxu0
          %3272 = vmax.xlane.f32.xlu0 %v3194
          %v3273 = vpop.xlane.xlu0 %3272
          %3274 = vmax.xlane.f32.xlu0 %v3199
          %v3275 = vpop.xlane.xlu0 %3274
          %3276 = vmax.xlane.f32.xlu0 %v3204
          %v3277 = vpop.xlane.xlu0 %3276
          %3278 = vmax.xlane.f32.xlu0 %v3209
          %v3279 = vpop.xlane.xlu0 %3278
          %3280 = vmax.xlane.f32.xlu0 %v3214
          %v3281 = vpop.xlane.xlu0 %3280
          %3282 = vmax.xlane.f32.xlu0 %v3219
          %v3283 = vpop.xlane.xlu0 %3282
          %3284 = vmax.xlane.f32.xlu0 %v3224
          %v3285 = vpop.xlane.xlu0 %3284
          %3286 = vmax.xlane.f32.xlu0 %v3229
          %v3287 = vpop.xlane.xlu0 %3286
          %3288 = vmax.xlane.f32.xlu0 %v3234
          %v3289 = vpop.xlane.xlu0 %3288
          %3290 = vmax.xlane.f32.xlu0 %v3239
          %v3291 = vpop.xlane.xlu0 %3290
          %3292 = vmax.xlane.f32.xlu0 %v3244
          %v3293 = vpop.xlane.xlu0 %3292
          %3294 = vmax.xlane.f32.xlu0 %v3249
          %v3295 = vpop.xlane.xlu0 %3294
          %3296 = vmax.xlane.f32.xlu0 %v3254
          %v3297 = vpop.xlane.xlu0 %3296
          %3298 = vmax.xlane.f32.xlu0 %v3259
          %v3299 = vpop.xlane.xlu0 %3298
          %3300 = vmax.xlane.f32.xlu0 %v3264
          %v3301 = vpop.xlane.xlu0 %3300
          %3302 = vmax.xlane.f32.xlu0 %v3269
          %v3303 = vpop.xlane.xlu0 %3302
          %v3304 = vsub.f32 %v3194, %v3273
          %v3305 = vsub.f32 %v3199, %v3275
          %v3306 = vsub.f32 %v3204, %v3277
          %v3307 = vsub.f32 %v3209, %v3279
          %v3308 = vsub.f32 %v3214, %v3281
          %v3309 = vsub.f32 %v3219, %v3283
          %v3310 = vsub.f32 %v3224, %v3285
          %v3311 = vsub.f32 %v3229, %v3287
          %v3312 = vsub.f32 %v3234, %v3289
          %v3313 = vsub.f32 %v3239, %v3291
          %v3314 = vsub.f32 %v3244, %v3293
          %v3315 = vsub.f32 %v3249, %v3295
          %v3316 = vsub.f32 %v3254, %v3297
          %v3317 = vsub.f32 %v3259, %v3299
          %v3318 = vsub.f32 %v3264, %v3301
          %v3319 = vsub.f32 %v3269, %v3303
          %v3320 = vmul.f32 %v3304, 1.442695
          %v3321 = vpow.pop %v3320
          %v3322 = vmul.f32 %v3305, 1.442695
          %v3323 = vpow.pop %v3322
          %v3324 = vmul.f32 %v3306, 1.442695
          %v3325 = vpow.pop %v3324
          %v3326 = vmul.f32 %v3307, 1.442695
          %v3327 = vpow.pop %v3326
          %v3328 = vmul.f32 %v3308, 1.442695
          %v3329 = vpow.pop %v3328
          %v3330 = vmul.f32 %v3309, 1.442695
          %v3331 = vpow.pop %v3330
          %v3332 = vmul.f32 %v3310, 1.442695
          %v3333 = vpow.pop %v3332
          %v3334 = vmul.f32 %v3311, 1.442695
          %v3335 = vpow.pop %v3334
          %v3336 = vmul.f32 %v3312, 1.442695
          %v3337 = vpow.pop %v3336
          %v3338 = vmul.f32 %v3313, 1.442695
          %v3339 = vpow.pop %v3338
          %v3340 = vmul.f32 %v3314, 1.442695
          %v3341 = vpow.pop %v3340
          %v3342 = vmul.f32 %v3315, 1.442695
          %v3343 = vpow.pop %v3342
          %v3344 = vmul.f32 %v3316, 1.442695
          %v3345 = vpow.pop %v3344
          %v3346 = vmul.f32 %v3317, 1.442695
          %v3347 = vpow.pop %v3346
          %v3348 = vmul.f32 %v3318, 1.442695
          %v3349 = vpow.pop %v3348
          %v3350 = vmul.f32 %v3319, 1.442695
          %v3351 = vpow.pop %v3350
          %3352 = vadd.xlane.f32.xlu0 %v3321
          %v3353 = vpop.xlane.xlu0 %3352
          %3354 = vadd.xlane.f32.xlu0 %v3323
          %v3355 = vpop.xlane.xlu0 %3354
          %3356 = vadd.xlane.f32.xlu0 %v3325
          %v3357 = vpop.xlane.xlu0 %3356
          %3358 = vadd.xlane.f32.xlu0 %v3327
          %v3359 = vpop.xlane.xlu0 %3358
          %3360 = vadd.xlane.f32.xlu0 %v3329
          %v3361 = vpop.xlane.xlu0 %3360
          %3362 = vadd.xlane.f32.xlu0 %v3331
          %v3363 = vpop.xlane.xlu0 %3362
          %3364 = vadd.xlane.f32.xlu0 %v3333
          %v3365 = vpop.xlane.xlu0 %3364
          %3366 = vadd.xlane.f32.xlu0 %v3335
          %v3367 = vpop.xlane.xlu0 %3366
          %3368 = vadd.xlane.f32.xlu0 %v3337
          %v3369 = vpop.xlane.xlu0 %3368
          %3370 = vadd.xlane.f32.xlu0 %v3339
          %v3371 = vpop.xlane.xlu0 %3370
          %3372 = vadd.xlane.f32.xlu0 %v3341
          %v3373 = vpop.xlane.xlu0 %3372
          %3374 = vadd.xlane.f32.xlu0 %v3343
          %v3375 = vpop.xlane.xlu0 %3374
          %3376 = vadd.xlane.f32.xlu0 %v3345
          %v3377 = vpop.xlane.xlu0 %3376
          %3378 = vadd.xlane.f32.xlu0 %v3347
          %v3379 = vpop.xlane.xlu0 %3378
          %3380 = vadd.xlane.f32.xlu0 %v3349
          %v3381 = vpop.xlane.xlu0 %3380
          %3382 = vadd.xlane.f32.xlu0 %v3351
          %v3383 = vpop.xlane.xlu0 %3382
          %v3384 = vlog2.pop %v3353
          %v3385 = vmul.f32 %v3384, 0.6931472
          %v3386 = vlog2.pop %v3355
          %v3387 = vmul.f32 %v3386, 0.6931472
          %v3388 = vlog2.pop %v3357
          %v3389 = vmul.f32 %v3388, 0.6931472
          %v3390 = vlog2.pop %v3359
          %v3391 = vmul.f32 %v3390, 0.6931472
          %v3392 = vlog2.pop %v3361
          %v3393 = vmul.f32 %v3392, 0.6931472
          %v3394 = vlog2.pop %v3363
          %v3395 = vmul.f32 %v3394, 0.6931472
          %v3396 = vlog2.pop %v3365
          %v3397 = vmul.f32 %v3396, 0.6931472
          %v3398 = vlog2.pop %v3367
          %v3399 = vmul.f32 %v3398, 0.6931472
          %v3400 = vlog2.pop %v3369
          %v3401 = vmul.f32 %v3400, 0.6931472
          %v3402 = vlog2.pop %v3371
          %v3403 = vmul.f32 %v3402, 0.6931472
          %v3404 = vlog2.pop %v3373
          %v3405 = vmul.f32 %v3404, 0.6931472
          %v3406 = vlog2.pop %v3375
          %v3407 = vmul.f32 %v3406, 0.6931472
          %v3408 = vlog2.pop %v3377
          %v3409 = vmul.f32 %v3408, 0.6931472
          %v3410 = vlog2.pop %v3379
          %v3411 = vmul.f32 %v3410, 0.6931472
          %v3412 = vlog2.pop %v3381
          %v3413 = vmul.f32 %v3412, 0.6931472
          %v3414 = vlog2.pop %v3383
          %v3415 = vmul.f32 %v3414, 0.6931472
          %v3416 = vsub.f32 %v3304, %v3385
          %v3417 = vsub.f32 %v3305, %v3387
          %v3418 = vsub.f32 %v3306, %v3389
          %v3419 = vsub.f32 %v3307, %v3391
          %v3420 = vsub.f32 %v3308, %v3393
          %v3421 = vsub.f32 %v3309, %v3395
          %v3422 = vsub.f32 %v3310, %v3397
          %v3423 = vsub.f32 %v3311, %v3399
          %v3424 = vsub.f32 %v3312, %v3401
          %v3425 = vsub.f32 %v3313, %v3403
          %v3426 = vsub.f32 %v3314, %v3405
          %v3427 = vsub.f32 %v3315, %v3407
          %v3428 = vsub.f32 %v3316, %v3409
          %v3429 = vsub.f32 %v3317, %v3411
          %v3430 = vsub.f32 %v3318, %v3413
          %v3431 = vsub.f32 %v3319, %v3415
          %3432 = vst [vmem:[%s461] sm:$0xff] %v3416
          %3433 = vst [vmem:[%s461 + $0x8] sm:$0xff] %v3417
          %3434 = vst [vmem:[%s461 + $0x10] sm:$0xff] %v3418
          %3435 = vst [vmem:[%s461 + $0x18] sm:$0xff] %v3419
          %3436 = vst [vmem:[%s461 + $0x20] sm:$0xff] %v3420
          %3437 = vst [vmem:[%s461 + $0x28] sm:$0xff] %v3421
          %3438 = vst [vmem:[%s461 + $0x30] sm:$0xff] %v3422
          %3439 = vst [vmem:[%s461 + $0x38] sm:$0xff] %v3423
          %3440 = vst [vmem:[%s461 + $0x40] sm:$0xff] %v3424
          %3441 = vst [vmem:[%s461 + $0x48] sm:$0xff] %v3425
          %3442 = vst [vmem:[%s461 + $0x50] sm:$0xff] %v3426
          %3443 = vst [vmem:[%s461 + $0x58] sm:$0xff] %v3427
          %3444 = vst [vmem:[%s461 + $0x60] sm:$0xff] %v3428
          %3445 = vst [vmem:[%s461 + $0x68] sm:$0xff] %v3429
          %3446 = vst [vmem:[%s461 + $0x70] sm:$0xff] %v3430
          %3447 = vst [vmem:[%s461 + $0x78] sm:$0xff] %v3431
        $region104: #{tpu_custom_call.1} parent=63 // pred_fallthru
          _
        %s3448 = sand.u32 %s288, 1
        %s3449 = scalar_lea.sflag [#allocation11], %s3448
        %s3450 = sand.u32 %s288, 1
        %s3451 = smul.addr %s3450, 128
        %s3452 = scalar_lea.vmem [#allocation18], %s3451
        // Predicated region
        $region109: #{tpu_custom_call.1} parent=63 // pred_check
          %p3453 = pneg %p298
        $region110: #{tpu_custom_call.1} parent=63 // pred_check_branch
          %3455 = sbr.rel (%p3453) target = $region112
        $region111: #{tpu_custom_call.1} parent=63 // pred_region
          %p3456 = scmp.eq.s32.totalorder %s32, 2
          %s3457 = scalar_select %p3456, %s33, 0
          %s3458 = smul.u32 16, %s3457
          %s3460 = ssub.s32 2048, 2048
          %3461 = vsyncadd %s3449, %s3460
          %s3462 = smul.addr %s3458, 128
          %s3463 = scalar_lea.hbm %s11, %s3462
          %s3464 = sshll.u32 %s3452, 4
          %s3465 = int_to_ptr.vmem [resolvable:$true] %s3464
          %3470 = dma.vmem_to_hbm [thread:$0]  %s3465, 2048, %s3463, %s3449, 128, 128, 8
        $region112: #{tpu_custom_call.1} parent=63 // pred_fallthru
          _
      $region64: #{tpu_custom_call.1} parent=5 // pred_fallthru
        _
      %p3471 = scmp.le.s32.totalorder 2, %s23
      // Predicated region
      $region113: #{tpu_custom_call.1} parent=5 // pred_check
        %p3472 = pneg %p3471
      $region114: #{tpu_custom_call.1} parent=5 // pred_check_branch
        %3474 = sbr.rel (%p3472) target = $region116
      $region115: #{tpu_custom_call.1} parent=5 // pred_region
        %s3475 = ssub.s32 %s23, 2
        // Predicated region
        $region117: #{tpu_custom_call.1} parent=115 // pred_check
          %p3476 = pneg %p304
        $region118: #{tpu_custom_call.1} parent=115 // pred_check_branch
          %3478 = sbr.rel (%p3476) target = $region120
        $region119: #{tpu_custom_call.1} parent=115 // pred_region
          %s3479 = sand.u32 %s289, 1
          %s3480 = scalar_lea.sflag [#allocation11], %s3479
          %s3481 = sand.u32 %s289, 1
          %s3482 = smul.addr %s3481, 128
          %s3483 = scalar_lea.vmem [#allocation18], %s3482
          %3484 = dma.done %s3480, 2048
        $region120: #{tpu_custom_call.1} parent=115 // pred_fallthru
          _
      $region116: #{tpu_custom_call.1} parent=5 // pred_fallthru
        _
    $region6: #{tpu_custom_call.1} parent=1 // loop_footer
      %s27 = sadd.s32 1, %s23
    $region7: #{tpu_custom_call.1} parent=1 // loop_footer_branch
      %22 = sbr.rel target = $region3
    $region8: #{tpu_custom_call.1} parent=1 // loop_exit
      _
    %3485 = vsyncpa [#allocation10], 1
    %s3486 = scalar_lea.sflag [#allocation10], 1
    %3487 = vsyncpa %s3486, 1
    %3488 = vsyncpa [#allocation13], 1
    %3489 = vsyncpa [#allocation16], 1
    %3490 = vsyncpa [#allocation11], 1
    %s3491 = scalar_lea.sflag [#allocation11], 1
    %3492 = vsyncpa %s3491, 1

</llo_original>
